<compile_context>
chip_gen: v7x
topology: tpu7x:2x2x1
jax: 0.10.0
libtpu: 0.0.40
codegen_flags: <defaults>
</compile_context>

<pallas_src>
import functools
import math

import jax
import jax.numpy as jnp
import numpy as np
from jax.experimental import pallas as pl
from jax.experimental.pallas import tpu as pltpu

FEATURES = 128          # module default
LAYERS = 4
LENGTH = 12
KSIZE = LENGTH // LAYERS + 1   # int(length/layer + 1) = 4

ROW_ALIGN = 16          # covers f32 (8-row) and bf16 (16-row) sublane packing


def tconv_kernel(x_ref, w_ref, b_ref, o_ref, pad_buf, buf_a, buf_b, *, m):
    # x_ref  : (W, m, C)   un-padded input tile, time-major, channels-last
    # w_ref  : (L, K, C_in, C_out)
    # b_ref  : (L, 1, C)   f32
    # o_ref  : (T_out, m, C) f32
    # pad_buf: (T0*m, C)   compute dtype -- layer-0 source with in-kernel pad
    # buf_a/buf_b: ping-pong VMEM scratch for intermediate layers
    W, _, C = x_ref.shape
    L, K, _, _ = w_ref.shape
    t0 = W + 1

    # --- in-kernel left pad of one time step (no HBM pad pass) -------------
    pad_buf[pl.ds(0, m), :] = jnp.zeros((m, C), pad_buf.dtype)
    for w in range(W):                                    # static unroll, W=12
        pad_buf[pl.ds((w + 1) * m, m), :] = x_ref[w]

    # --- L conv layers, each as K accumulating slab matmuls ----------------
    src = pad_buf
    t = t0
    bufs = (buf_a, buf_b)
    for l in range(L):                                    # static unroll, L=4
        t_new = t - K + 1
        rows = t_new * m
        # One bias broadcast per layer (hoisted out of per-time-step work).
        acc = jnp.broadcast_to(b_ref[l], (rows, C)).astype(jnp.float32)
        for k in range(K):                                # static unroll, K=4
            lhs = src[pl.ds(k * m, rows), :]              # aligned (m % 16 == 0)
            # Keep the plain acc = acc + dot chain so v7x can map it onto the
            # MRB in-place accumulate.
            acc = acc + jnp.dot(lhs, w_ref[l, k],
                                preferred_element_type=jnp.float32)
        y = jnp.maximum(acc, 0.0)                         # bias + ReLU
        if l == L - 1:
            # Fused epilogue: residual = last padded time step, broadcast-add
            # over the T_out output rows (no jnp.tile / XLU traffic).
            res = pad_buf[pl.ds((t0 - 1) * m, m), :].astype(jnp.float32)
            for tt in range(t_new):                       # T_out is tiny (1 here)
                o_ref[tt] = (y[tt * m:(tt + 1) * m, :] + res).astype(o_ref.dtype)
        else:
            dst = bufs[l % 2]
            dst[pl.ds(0, rows), :] = y.astype(dst.dtype)
            src = dst
        t = t_new


def tconv_forward(x, weights, biases, *, compute_dtype=jnp.bfloat16, m_tile=None):
    """x: (N, C, H, W) NCHW.  weights: (L, Co, Ci, K).  biases: (L, C).

    compute_dtype=jnp.bfloat16 (default) uses the bf16 MXU fast path with f32
    accumulation (v6e/v7x); pass jnp.float32 for the exact path (v5e / tests).
    """
    N, C, H, W = x.shape
    L, Co, Ci, K = weights.shape
    assert Co == C and Ci == C
    T0 = W + 1
    T_out = T0 - L * (K - 1)
    assert T_out >= 1
    M = N * H

    # --- M tile: aligned to 16 rows, and small enough that the layer-0 f32
    # accumulator (t1 * m_tile rows) stays around <=256 rows (no vreg spills).
    t1 = T0 - (K - 1)
    if m_tile is None:
        m_tile = max(ROW_ALIGN, (256 // max(t1, 1)) // ROW_ALIGN * ROW_ALIGN)
    m_tile = max(ROW_ALIGN, (m_tile // ROW_ALIGN) * ROW_ALIGN)
    M_pad = ((M + m_tile - 1) // m_tile) * m_tile
    num_tiles = M_pad // m_tile

    # NCHW -> time-major channels-last slab (W, M_pad, C).  The left time-pad
    # is applied inside the kernel; the small M-alignment pad fuses with this
    # transpose copy.
    # TODO(synk): if the surrounding model can supply/consume time-major
    # channels-last directly, drop this transpose and the output one.
    x_t = jnp.transpose(x, (3, 0, 2, 1)).reshape(W, M, C)
    if M_pad != M:
        x_t = jnp.pad(x_t, ((0, 0), (0, M_pad - M), (0, 0)))
    x_t = x_t.astype(compute_dtype)

    # torch weight[co, ci, 0, k] -> kernel weight[l, k, ci, co]
    w_k = jnp.transpose(weights, (0, 3, 2, 1)).astype(compute_dtype)
    b_k = biases.reshape(L, 1, C).astype(jnp.float32)

    # Per-layer output time lengths; ping-pong scratch sized per buffer.
    t_sizes = [T0 - (l + 1) * (K - 1) for l in range(L)]
    buf_a_rows = max([t_sizes[l] for l in range(L - 1) if l % 2 == 0], default=1) * m_tile
    buf_b_rows = max([t_sizes[l] for l in range(L - 1) if l % 2 == 1], default=1) * m_tile

    cbytes = jnp.dtype(compute_dtype).itemsize
    flops = 2 * C * C * K * M_pad * sum(t_sizes)
    bytes_accessed = (W * M_pad * C * cbytes + L * K * C * C * cbytes
                      + L * C * 4 + T_out * M_pad * C * 4)
    # Per-grid-step VMEM: double-buffered input/output tiles + resident
    # weights/bias + pad/ping-pong scratch.  Derived explicitly so the tile
    # choice stays inside v7x's tighter 64 MiB VMEM.
    vmem_need = (2 * W * m_tile * C * cbytes
                 + 2 * T_out * m_tile * C * 4
                 + 2 * (L * K * C * C * cbytes + L * 128 * 4)
                 + (T0 + t_sizes[0] + (t_sizes[1] if L > 1 else 1)) * m_tile * C * cbytes)
    vmem_limit = int(min(48 << 20, max(16 << 20, 2 * vmem_need)))

    kernel = functools.partial(tconv_kernel, m=m_tile)

    out = pl.pallas_call(
        kernel,
        out_shape=jax.ShapeDtypeStruct((T_out, M_pad, C), jnp.float32),
        grid=(num_tiles,),
        in_specs=[
            pl.BlockSpec((W, m_tile, C), lambda i: (0, i, 0)),
            pl.BlockSpec((L, K, Ci, Co), lambda i: (0, 0, 0, 0)),   # resident
            pl.BlockSpec((L, 1, C), lambda i: (0, 0, 0)),           # resident
        ],
        out_specs=pl.BlockSpec((T_out, m_tile, C), lambda i: (0, i, 0)),
        scratch_shapes=[
            pltpu.VMEM((T0 * m_tile, C), compute_dtype),   # padded layer-0 input
            pltpu.VMEM((buf_a_rows, C), compute_dtype),
            pltpu.VMEM((buf_b_rows, C), compute_dtype),
        ],
        compiler_params=pltpu.CompilerParams(
            dimension_semantics=("parallel",),
            vmem_limit_bytes=vmem_limit),
        cost_estimate=pl.CostEstimate(
            flops=flops, transcendentals=0, bytes_accessed=bytes_accessed),
    )(x_t, w_k, b_k)

    # (T_out, M_pad, C) -> strip M padding -> NCHW (N, C, H, T_out)
    out = out[:, :M, :].reshape(T_out, N, H, C)
    return out.transpose(1, 3, 2, 0)


def ref_forward(x, weights, biases):
    """Pure-JAX reference matching the PyTorch forward (eval mode)."""
    L, Co, Ci, K = weights.shape
    xp = jnp.pad(x, ((0, 0), (0, 0), (0, 0), (1, 0)))
    y = xp
    for l in range(L):
        T = y.shape[-1] - K + 1
        outs = []
        for t in range(T):
            patch = y[..., t:t + K]                           # (N, Ci, H, K)
            o = jnp.einsum('nihk,oik->noh', patch, weights[l]) \
                + biases[l][None, :, None]
            outs.append(o)
        y = jnp.maximum(jnp.stack(outs, axis=-1), 0.0)
    return y + xp[..., -1:]


if __name__ == "__main__":
    key = jax.random.PRNGKey(0)
    kx, kw, kb = jax.random.split(key, 3)

    N, H = 2, 4
    x = jax.random.normal(kx, (N, FEATURES, H, LENGTH), jnp.float32)

    # Deterministic synthetic parameters (kaiming-uniform-like scale).
    bound = 1.0 / math.sqrt(FEATURES * KSIZE)
    weights = jax.random.uniform(
        kw, (LAYERS, FEATURES, FEATURES, KSIZE), jnp.float32, -bound, bound)
    biases = jax.random.uniform(
        kb, (LAYERS, FEATURES), jnp.float32, -bound, bound)

    ref = ref_forward(x, weights, biases)

    # f32 path: exact check of in-kernel pad / slab matmuls / fused epilogue.
    out_f32 = jax.block_until_ready(
        tconv_forward(x, weights, biases, compute_dtype=jnp.float32))
    np.testing.assert_allclose(np.asarray(out_f32), np.asarray(ref),
                               rtol=1e-5, atol=1e-5)

    # Default bf16 fast path (f32 accumulation): bf16-appropriate tolerance.
    out_bf16 = jax.block_until_ready(tconv_forward(x, weights, biases))
    np.testing.assert_allclose(np.asarray(out_bf16), np.asarray(ref),
                               rtol=2e-2, atol=5e-2)

    print("KERNEL_OK")
</pallas_src>

<mosaic_0001>
module attributes {stable_mosaic.version = 11 : i64} {
  func.func @tconv_kernel(%arg0: i32, %arg1: memref<12x16x128xf32, #tpu.memory_space<vmem>>, %arg2: memref<4x4x128x128xf32, #tpu.memory_space<vmem>>, %arg3: memref<4x1x128xf32, #tpu.memory_space<vmem>>, %arg4: memref<1x16x128xf32, #tpu.memory_space<vmem>>, %arg5: memref<208x128xf32, #tpu.memory_space<vmem>>, %arg6: memref<160x128xf32, #tpu.memory_space<vmem>>, %arg7: memref<112x128xf32, #tpu.memory_space<vmem>>) attributes {dimension_semantics = [#tpu.dimension_semantics<parallel>], iteration_bounds = array<i64: 1>, scalar_prefetch = 0 : i64, scratch_operands = 3 : i64, tpu.core_type = #tpu.core_type<tc>, window_params = [{transform_indices = @transform_0, window_bounds = array<i64: 12, 16, 128>}, {pipeline_mode = #tpu.pipeline_mode<synchronous>, transform_indices = @transform_1, window_bounds = array<i64: 4, 4, 128, 128>}, {pipeline_mode = #tpu.pipeline_mode<synchronous>, transform_indices = @transform_2, window_bounds = array<i64: 4, 1, 128>}, {transform_indices = @transform_3, window_bounds = array<i64: 1, 16, 128>}]} {
    %cst = arith.constant 0.000000e+00 : f32
    %0 = vector.broadcast %cst : f32 to vector<16x128xf32>
    %c0 = arith.constant 0 : index
    %c0_0 = arith.constant 0 : index
    %1 = vector.load %arg5[%c0, %c0_0] : memref<208x128xf32, #tpu.memory_space<vmem>>, vector<16x128xf32>
    tpu.vector_store %arg5[%c0, %c0_0], %0 {strides = array<i32>} : memref<208x128xf32, #tpu.memory_space<vmem>>, vector<16x128xf32>,
    %c0_1 = arith.constant 0 : index
    %c0_2 = arith.constant 0 : index
    %c0_3 = arith.constant 0 : index
    %2 = vector.load %arg1[%c0_1, %c0_2, %c0_3] : memref<12x16x128xf32, #tpu.memory_space<vmem>>, vector<1x16x128xf32>
    %3 = vector.shape_cast %2 : vector<1x16x128xf32> to vector<16x128xf32>
    %c16 = arith.constant 16 : index
    %c0_4 = arith.constant 0 : index
    %4 = vector.load %arg5[%c16, %c0_4] : memref<208x128xf32, #tpu.memory_space<vmem>>, vector<16x128xf32>
    tpu.vector_store %arg5[%c16, %c0_4], %3 {strides = array<i32>} : memref<208x128xf32, #tpu.memory_space<vmem>>, vector<16x128xf32>,
    %c1 = arith.constant 1 : index
    %c0_5 = arith.constant 0 : index
    %c0_6 = arith.constant 0 : index
    %5 = vector.load %arg1[%c1, %c0_5, %c0_6] : memref<12x16x128xf32, #tpu.memory_space<vmem>>, vector<1x16x128xf32>
    %6 = vector.shape_cast %5 : vector<1x16x128xf32> to vector<16x128xf32>
    %c32 = arith.constant 32 : index
    %c0_7 = arith.constant 0 : index
    %7 = vector.load %arg5[%c32, %c0_7] : memref<208x128xf32, #tpu.memory_space<vmem>>, vector<16x128xf32>
    tpu.vector_store %arg5[%c32, %c0_7], %6 {strides = array<i32>} : memref<208x128xf32, #tpu.memory_space<vmem>>, vector<16x128xf32>,
    %c2 = arith.constant 2 : index
    %c0_8 = arith.constant 0 : index
    %c0_9 = arith.constant 0 : index
    %8 = vector.load %arg1[%c2, %c0_8, %c0_9] : memref<12x16x128xf32, #tpu.memory_space<vmem>>, vector<1x16x128xf32>
    %9 = vector.shape_cast %8 : vector<1x16x128xf32> to vector<16x128xf32>
    %c48 = arith.constant 48 : index
    %c0_10 = arith.constant 0 : index
    %10 = vector.load %arg5[%c48, %c0_10] : memref<208x128xf32, #tpu.memory_space<vmem>>, vector<16x128xf32>
    tpu.vector_store %arg5[%c48, %c0_10], %9 {strides = array<i32>} : memref<208x128xf32, #tpu.memory_space<vmem>>, vector<16x128xf32>,
    %c3 = arith.constant 3 : index
    %c0_11 = arith.constant 0 : index
    %c0_12 = arith.constant 0 : index
    %11 = vector.load %arg1[%c3, %c0_11, %c0_12] : memref<12x16x128xf32, #tpu.memory_space<vmem>>, vector<1x16x128xf32>
    %12 = vector.shape_cast %11 : vector<1x16x128xf32> to vector<16x128xf32>
    %c64 = arith.constant 64 : index
    %c0_13 = arith.constant 0 : index
    %13 = vector.load %arg5[%c64, %c0_13] : memref<208x128xf32, #tpu.memory_space<vmem>>, vector<16x128xf32>
    tpu.vector_store %arg5[%c64, %c0_13], %12 {strides = array<i32>} : memref<208x128xf32, #tpu.memory_space<vmem>>, vector<16x128xf32>,
    %c4 = arith.constant 4 : index
    %c0_14 = arith.constant 0 : index
    %c0_15 = arith.constant 0 : index
    %14 = vector.load %arg1[%c4, %c0_14, %c0_15] : memref<12x16x128xf32, #tpu.memory_space<vmem>>, vector<1x16x128xf32>
    %15 = vector.shape_cast %14 : vector<1x16x128xf32> to vector<16x128xf32>
    %c80 = arith.constant 80 : index
    %c0_16 = arith.constant 0 : index
    %16 = vector.load %arg5[%c80, %c0_16] : memref<208x128xf32, #tpu.memory_space<vmem>>, vector<16x128xf32>
    tpu.vector_store %arg5[%c80, %c0_16], %15 {strides = array<i32>} : memref<208x128xf32, #tpu.memory_space<vmem>>, vector<16x128xf32>,
    %c5 = arith.constant 5 : index
    %c0_17 = arith.constant 0 : index
    %c0_18 = arith.constant 0 : index
    %17 = vector.load %arg1[%c5, %c0_17, %c0_18] : memref<12x16x128xf32, #tpu.memory_space<vmem>>, vector<1x16x128xf32>
    %18 = vector.shape_cast %17 : vector<1x16x128xf32> to vector<16x128xf32>
    %c96 = arith.constant 96 : index
    %c0_19 = arith.constant 0 : index
    %19 = vector.load %arg5[%c96, %c0_19] : memref<208x128xf32, #tpu.memory_space<vmem>>, vector<16x128xf32>
    tpu.vector_store %arg5[%c96, %c0_19], %18 {strides = array<i32>} : memref<208x128xf32, #tpu.memory_space<vmem>>, vector<16x128xf32>,
    %c6 = arith.constant 6 : index
    %c0_20 = arith.constant 0 : index
    %c0_21 = arith.constant 0 : index
    %20 = vector.load %arg1[%c6, %c0_20, %c0_21] : memref<12x16x128xf32, #tpu.memory_space<vmem>>, vector<1x16x128xf32>
    %21 = vector.shape_cast %20 : vector<1x16x128xf32> to vector<16x128xf32>
    %c112 = arith.constant 112 : index
    %c0_22 = arith.constant 0 : index
    %22 = vector.load %arg5[%c112, %c0_22] : memref<208x128xf32, #tpu.memory_space<vmem>>, vector<16x128xf32>
    tpu.vector_store %arg5[%c112, %c0_22], %21 {strides = array<i32>} : memref<208x128xf32, #tpu.memory_space<vmem>>, vector<16x128xf32>,
    %c7 = arith.constant 7 : index
    %c0_23 = arith.constant 0 : index
    %c0_24 = arith.constant 0 : index
    %23 = vector.load %arg1[%c7, %c0_23, %c0_24] : memref<12x16x128xf32, #tpu.memory_space<vmem>>, vector<1x16x128xf32>
    %24 = vector.shape_cast %23 : vector<1x16x128xf32> to vector<16x128xf32>
    %c128 = arith.constant 128 : index
    %c0_25 = arith.constant 0 : index
    %25 = vector.load %arg5[%c128, %c0_25] : memref<208x128xf32, #tpu.memory_space<vmem>>, vector<16x128xf32>
    tpu.vector_store %arg5[%c128, %c0_25], %24 {strides = array<i32>} : memref<208x128xf32, #tpu.memory_space<vmem>>, vector<16x128xf32>,
    %c8 = arith.constant 8 : index
    %c0_26 = arith.constant 0 : index
    %c0_27 = arith.constant 0 : index
    %26 = vector.load %arg1[%c8, %c0_26, %c0_27] : memref<12x16x128xf32, #tpu.memory_space<vmem>>, vector<1x16x128xf32>
    %27 = vector.shape_cast %26 : vector<1x16x128xf32> to vector<16x128xf32>
    %c144 = arith.constant 144 : index
    %c0_28 = arith.constant 0 : index
    %28 = vector.load %arg5[%c144, %c0_28] : memref<208x128xf32, #tpu.memory_space<vmem>>, vector<16x128xf32>
    tpu.vector_store %arg5[%c144, %c0_28], %27 {strides = array<i32>} : memref<208x128xf32, #tpu.memory_space<vmem>>, vector<16x128xf32>,
    %c9 = arith.constant 9 : index
    %c0_29 = arith.constant 0 : index
    %c0_30 = arith.constant 0 : index
    %29 = vector.load %arg1[%c9, %c0_29, %c0_30] : memref<12x16x128xf32, #tpu.memory_space<vmem>>, vector<1x16x128xf32>
    %30 = vector.shape_cast %29 : vector<1x16x128xf32> to vector<16x128xf32>
    %c160 = arith.constant 160 : index
    %c0_31 = arith.constant 0 : index
    %31 = vector.load %arg5[%c160, %c0_31] : memref<208x128xf32, #tpu.memory_space<vmem>>, vector<16x128xf32>
    tpu.vector_store %arg5[%c160, %c0_31], %30 {strides = array<i32>} : memref<208x128xf32, #tpu.memory_space<vmem>>, vector<16x128xf32>,
    %c10 = arith.constant 10 : index
    %c0_32 = arith.constant 0 : index
    %c0_33 = arith.constant 0 : index
    %32 = vector.load %arg1[%c10, %c0_32, %c0_33] : memref<12x16x128xf32, #tpu.memory_space<vmem>>, vector<1x16x128xf32>
    %33 = vector.shape_cast %32 : vector<1x16x128xf32> to vector<16x128xf32>
    %c176 = arith.constant 176 : index
    %c0_34 = arith.constant 0 : index
    %34 = vector.load %arg5[%c176, %c0_34] : memref<208x128xf32, #tpu.memory_space<vmem>>, vector<16x128xf32>
    tpu.vector_store %arg5[%c176, %c0_34], %33 {strides = array<i32>} : memref<208x128xf32, #tpu.memory_space<vmem>>, vector<16x128xf32>,
    %c11 = arith.constant 11 : index
    %c0_35 = arith.constant 0 : index
    %c0_36 = arith.constant 0 : index
    %35 = vector.load %arg1[%c11, %c0_35, %c0_36] : memref<12x16x128xf32, #tpu.memory_space<vmem>>, vector<1x16x128xf32>
    %36 = vector.shape_cast %35 : vector<1x16x128xf32> to vector<16x128xf32>
    %c192 = arith.constant 192 : index
    %c0_37 = arith.constant 0 : index
    %37 = vector.load %arg5[%c192, %c0_37] : memref<208x128xf32, #tpu.memory_space<vmem>>, vector<16x128xf32>
    tpu.vector_store %arg5[%c192, %c0_37], %36 {strides = array<i32>} : memref<208x128xf32, #tpu.memory_space<vmem>>, vector<16x128xf32>,
    %c0_38 = arith.constant 0 : index
    %c0_39 = arith.constant 0 : index
    %c0_40 = arith.constant 0 : index
    %38 = vector.load %arg3[%c0_38, %c0_39, %c0_40] : memref<4x1x128xf32, #tpu.memory_space<vmem>>, vector<1x1x128xf32>
    %39 = vector.shape_cast %38 : vector<1x1x128xf32> to vector<1x128xf32>
    %40 = vector.shape_cast %39 : vector<1x128xf32> to vector<1x128xf32>
    %41 = vector.broadcast %40 : vector<1x128xf32> to vector<160x128xf32>
    %c0_41 = arith.constant 0 : index
    %c0_42 = arith.constant 0 : index
    %42 = vector.load %arg5[%c0_41, %c0_42] : memref<208x128xf32, #tpu.memory_space<vmem>>, vector<160x128xf32>
    %c0_43 = arith.constant 0 : index
    %c0_44 = arith.constant 0 : index
    %c0_45 = arith.constant 0 : index
    %c0_46 = arith.constant 0 : index
    %43 = vector.load %arg2[%c0_43, %c0_44, %c0_45, %c0_46] : memref<4x4x128x128xf32, #tpu.memory_space<vmem>>, vector<1x1x128x128xf32>
    %44 = vector.shape_cast %43 : vector<1x1x128x128xf32> to vector<128x128xf32>
    %cst_47 = arith.constant dense<0.000000e+00> : vector<160x128xf32>
    %45 = tpu.matmul %42, %44, %cst_47 {dimension_numbers = #tpu.dot_dimension_numbers<[1], [0], [0], [1], [0, 0, 1, 1], [], []>} : vector<160x128xf32>, vector<128x128xf32>, vector<160x128xf32> -> vector<160x128xf32>
    %46 = arith.addf %41, %45 : vector<160x128xf32>
    %c16_48 = arith.constant 16 : index
    %c0_49 = arith.constant 0 : index
    %47 = vector.load %arg5[%c16_48, %c0_49] : memref<208x128xf32, #tpu.memory_space<vmem>>, vector<160x128xf32>
    %c0_50 = arith.constant 0 : index
    %c1_51 = arith.constant 1 : index
    %c0_52 = arith.constant 0 : index
    %c0_53 = arith.constant 0 : index
    %48 = vector.load %arg2[%c0_50, %c1_51, %c0_52, %c0_53] : memref<4x4x128x128xf32, #tpu.memory_space<vmem>>, vector<1x1x128x128xf32>
    %49 = vector.shape_cast %48 : vector<1x1x128x128xf32> to vector<128x128xf32>
    %cst_54 = arith.constant dense<0.000000e+00> : vector<160x128xf32>
    %50 = tpu.matmul %47, %49, %cst_54 {dimension_numbers = #tpu.dot_dimension_numbers<[1], [0], [0], [1], [0, 0, 1, 1], [], []>} : vector<160x128xf32>, vector<128x128xf32>, vector<160x128xf32> -> vector<160x128xf32>
    %51 = arith.addf %46, %50 : vector<160x128xf32>
    %c32_55 = arith.constant 32 : index
    %c0_56 = arith.constant 0 : index
    %52 = vector.load %arg5[%c32_55, %c0_56] : memref<208x128xf32, #tpu.memory_space<vmem>>, vector<160x128xf32>
    %c0_57 = arith.constant 0 : index
    %c2_58 = arith.constant 2 : index
    %c0_59 = arith.constant 0 : index
    %c0_60 = arith.constant 0 : index
    %53 = vector.load %arg2[%c0_57, %c2_58, %c0_59, %c0_60] : memref<4x4x128x128xf32, #tpu.memory_space<vmem>>, vector<1x1x128x128xf32>
    %54 = vector.shape_cast %53 : vector<1x1x128x128xf32> to vector<128x128xf32>
    %cst_61 = arith.constant dense<0.000000e+00> : vector<160x128xf32>
    %55 = tpu.matmul %52, %54, %cst_61 {dimension_numbers = #tpu.dot_dimension_numbers<[1], [0], [0], [1], [0, 0, 1, 1], [], []>} : vector<160x128xf32>, vector<128x128xf32>, vector<160x128xf32> -> vector<160x128xf32>
    %56 = arith.addf %51, %55 : vector<160x128xf32>
    %c48_62 = arith.constant 48 : index
    %c0_63 = arith.constant 0 : index
    %57 = vector.load %arg5[%c48_62, %c0_63] : memref<208x128xf32, #tpu.memory_space<vmem>>, vector<160x128xf32>
    %c0_64 = arith.constant 0 : index
    %c3_65 = arith.constant 3 : index
    %c0_66 = arith.constant 0 : index
    %c0_67 = arith.constant 0 : index
    %58 = vector.load %arg2[%c0_64, %c3_65, %c0_66, %c0_67] : memref<4x4x128x128xf32, #tpu.memory_space<vmem>>, vector<1x1x128x128xf32>
    %59 = vector.shape_cast %58 : vector<1x1x128x128xf32> to vector<128x128xf32>
    %cst_68 = arith.constant dense<0.000000e+00> : vector<160x128xf32>
    %60 = tpu.matmul %57, %59, %cst_68 {dimension_numbers = #tpu.dot_dimension_numbers<[1], [0], [0], [1], [0, 0, 1, 1], [], []>} : vector<160x128xf32>, vector<128x128xf32>, vector<160x128xf32> -> vector<160x128xf32>
    %61 = arith.addf %56, %60 : vector<160x128xf32>
    %cst_69 = arith.constant 0.000000e+00 : f32
    %62 = vector.broadcast %cst_69 : f32 to vector<160x128xf32>
    %63 = arith.maximumf %61, %62 : vector<160x128xf32>
    %c0_70 = arith.constant 0 : index
    %c0_71 = arith.constant 0 : index
    %64 = vector.load %arg6[%c0_70, %c0_71] : memref<160x128xf32, #tpu.memory_space<vmem>>, vector<160x128xf32>
    tpu.vector_store %arg6[%c0_70, %c0_71], %63 {strides = array<i32>} : memref<160x128xf32, #tpu.memory_space<vmem>>, vector<160x128xf32>,
    %c1_72 = arith.constant 1 : index
    %c0_73 = arith.constant 0 : index
    %c0_74 = arith.constant 0 : index
    %65 = vector.load %arg3[%c1_72, %c0_73, %c0_74] : memref<4x1x128xf32, #tpu.memory_space<vmem>>, vector<1x1x128xf32>
    %66 = vector.shape_cast %65 : vector<1x1x128xf32> to vector<1x128xf32>
    %67 = vector.shape_cast %66 : vector<1x128xf32> to vector<1x128xf32>
    %68 = vector.broadcast %67 : vector<1x128xf32> to vector<112x128xf32>
    %c0_75 = arith.constant 0 : index
    %c0_76 = arith.constant 0 : index
    %69 = vector.load %arg6[%c0_75, %c0_76] : memref<160x128xf32, #tpu.memory_space<vmem>>, vector<112x128xf32>
    %c1_77 = arith.constant 1 : index
    %c0_78 = arith.constant 0 : index
    %c0_79 = arith.constant 0 : index
    %c0_80 = arith.constant 0 : index
    %70 = vector.load %arg2[%c1_77, %c0_78, %c0_79, %c0_80] : memref<4x4x128x128xf32, #tpu.memory_space<vmem>>, vector<1x1x128x128xf32>
    %71 = vector.shape_cast %70 : vector<1x1x128x128xf32> to vector<128x128xf32>
    %cst_81 = arith.constant dense<0.000000e+00> : vector<112x128xf32>
    %72 = tpu.matmul %69, %71, %cst_81 {dimension_numbers = #tpu.dot_dimension_numbers<[1], [0], [0], [1], [0, 0, 1, 1], [], []>} : vector<112x128xf32>, vector<128x128xf32>, vector<112x128xf32> -> vector<112x128xf32>
    %73 = arith.addf %68, %72 : vector<112x128xf32>
    %c16_82 = arith.constant 16 : index
    %c0_83 = arith.constant 0 : index
    %74 = vector.load %arg6[%c16_82, %c0_83] : memref<160x128xf32, #tpu.memory_space<vmem>>, vector<112x128xf32>
    %c1_84 = arith.constant 1 : index
    %c1_85 = arith.constant 1 : index
    %c0_86 = arith.constant 0 : index
    %c0_87 = arith.constant 0 : index
    %75 = vector.load %arg2[%c1_84, %c1_85, %c0_86, %c0_87] : memref<4x4x128x128xf32, #tpu.memory_space<vmem>>, vector<1x1x128x128xf32>
    %76 = vector.shape_cast %75 : vector<1x1x128x128xf32> to vector<128x128xf32>
    %cst_88 = arith.constant dense<0.000000e+00> : vector<112x128xf32>
    %77 = tpu.matmul %74, %76, %cst_88 {dimension_numbers = #tpu.dot_dimension_numbers<[1], [0], [0], [1], [0, 0, 1, 1], [], []>} : vector<112x128xf32>, vector<128x128xf32>, vector<112x128xf32> -> vector<112x128xf32>
    %78 = arith.addf %73, %77 : vector<112x128xf32>
    %c32_89 = arith.constant 32 : index
    %c0_90 = arith.constant 0 : index
    %79 = vector.load %arg6[%c32_89, %c0_90] : memref<160x128xf32, #tpu.memory_space<vmem>>, vector<112x128xf32>
    %c1_91 = arith.constant 1 : index
    %c2_92 = arith.constant 2 : index
    %c0_93 = arith.constant 0 : index
    %c0_94 = arith.constant 0 : index
    %80 = vector.load %arg2[%c1_91, %c2_92, %c0_93, %c0_94] : memref<4x4x128x128xf32, #tpu.memory_space<vmem>>, vector<1x1x128x128xf32>
    %81 = vector.shape_cast %80 : vector<1x1x128x128xf32> to vector<128x128xf32>
    %cst_95 = arith.constant dense<0.000000e+00> : vector<112x128xf32>
    %82 = tpu.matmul %79, %81, %cst_95 {dimension_numbers = #tpu.dot_dimension_numbers<[1], [0], [0], [1], [0, 0, 1, 1], [], []>} : vector<112x128xf32>, vector<128x128xf32>, vector<112x128xf32> -> vector<112x128xf32>
    %83 = arith.addf %78, %82 : vector<112x128xf32>
    %c48_96 = arith.constant 48 : index
    %c0_97 = arith.constant 0 : index
    %84 = vector.load %arg6[%c48_96, %c0_97] : memref<160x128xf32, #tpu.memory_space<vmem>>, vector<112x128xf32>
    %c1_98 = arith.constant 1 : index
    %c3_99 = arith.constant 3 : index
    %c0_100 = arith.constant 0 : index
    %c0_101 = arith.constant 0 : index
    %85 = vector.load %arg2[%c1_98, %c3_99, %c0_100, %c0_101] : memref<4x4x128x128xf32, #tpu.memory_space<vmem>>, vector<1x1x128x128xf32>
    %86 = vector.shape_cast %85 : vector<1x1x128x128xf32> to vector<128x128xf32>
    %cst_102 = arith.constant dense<0.000000e+00> : vector<112x128xf32>
    %87 = tpu.matmul %84, %86, %cst_102 {dimension_numbers = #tpu.dot_dimension_numbers<[1], [0], [0], [1], [0, 0, 1, 1], [], []>} : vector<112x128xf32>, vector<128x128xf32>, vector<112x128xf32> -> vector<112x128xf32>
    %88 = arith.addf %83, %87 : vector<112x128xf32>
    %cst_103 = arith.constant 0.000000e+00 : f32
    %89 = vector.broadcast %cst_103 : f32 to vector<112x128xf32>
    %90 = arith.maximumf %88, %89 : vector<112x128xf32>
    %c0_104 = arith.constant 0 : index
    %c0_105 = arith.constant 0 : index
    %91 = vector.load %arg7[%c0_104, %c0_105] : memref<112x128xf32, #tpu.memory_space<vmem>>, vector<112x128xf32>
    tpu.vector_store %arg7[%c0_104, %c0_105], %90 {strides = array<i32>} : memref<112x128xf32, #tpu.memory_space<vmem>>, vector<112x128xf32>,
    %c2_106 = arith.constant 2 : index
    %c0_107 = arith.constant 0 : index
    %c0_108 = arith.constant 0 : index
    %92 = vector.load %arg3[%c2_106, %c0_107, %c0_108] : memref<4x1x128xf32, #tpu.memory_space<vmem>>, vector<1x1x128xf32>
    %93 = vector.shape_cast %92 : vector<1x1x128xf32> to vector<1x128xf32>
    %94 = vector.shape_cast %93 : vector<1x128xf32> to vector<1x128xf32>
    %95 = vector.broadcast %94 : vector<1x128xf32> to vector<64x128xf32>
    %c0_109 = arith.constant 0 : index
    %c0_110 = arith.constant 0 : index
    %96 = vector.load %arg7[%c0_109, %c0_110] : memref<112x128xf32, #tpu.memory_space<vmem>>, vector<64x128xf32>
    %c2_111 = arith.constant 2 : index
    %c0_112 = arith.constant 0 : index
    %c0_113 = arith.constant 0 : index
    %c0_114 = arith.constant 0 : index
    %97 = vector.load %arg2[%c2_111, %c0_112, %c0_113, %c0_114] : memref<4x4x128x128xf32, #tpu.memory_space<vmem>>, vector<1x1x128x128xf32>
    %98 = vector.shape_cast %97 : vector<1x1x128x128xf32> to vector<128x128xf32>
    %cst_115 = arith.constant dense<0.000000e+00> : vector<64x128xf32>
    %99 = tpu.matmul %96, %98, %cst_115 {dimension_numbers = #tpu.dot_dimension_numbers<[1], [0], [0], [1], [0, 0, 1, 1], [], []>} : vector<64x128xf32>, vector<128x128xf32>, vector<64x128xf32> -> vector<64x128xf32>
    %100 = arith.addf %95, %99 : vector<64x128xf32>
    %c16_116 = arith.constant 16 : index
    %c0_117 = arith.constant 0 : index
    %101 = vector.load %arg7[%c16_116, %c0_117] : memref<112x128xf32, #tpu.memory_space<vmem>>, vector<64x128xf32>
    %c2_118 = arith.constant 2 : index
    %c1_119 = arith.constant 1 : index
    %c0_120 = arith.constant 0 : index
    %c0_121 = arith.constant 0 : index
    %102 = vector.load %arg2[%c2_118, %c1_119, %c0_120, %c0_121] : memref<4x4x128x128xf32, #tpu.memory_space<vmem>>, vector<1x1x128x128xf32>
    %103 = vector.shape_cast %102 : vector<1x1x128x128xf32> to vector<128x128xf32>
    %cst_122 = arith.constant dense<0.000000e+00> : vector<64x128xf32>
    %104 = tpu.matmul %101, %103, %cst_122 {dimension_numbers = #tpu.dot_dimension_numbers<[1], [0], [0], [1], [0, 0, 1, 1], [], []>} : vector<64x128xf32>, vector<128x128xf32>, vector<64x128xf32> -> vector<64x128xf32>
    %105 = arith.addf %100, %104 : vector<64x128xf32>
    %c32_123 = arith.constant 32 : index
    %c0_124 = arith.constant 0 : index
    %106 = vector.load %arg7[%c32_123, %c0_124] : memref<112x128xf32, #tpu.memory_space<vmem>>, vector<64x128xf32>
    %c2_125 = arith.constant 2 : index
    %c2_126 = arith.constant 2 : index
    %c0_127 = arith.constant 0 : index
    %c0_128 = arith.constant 0 : index
    %107 = vector.load %arg2[%c2_125, %c2_126, %c0_127, %c0_128] : memref<4x4x128x128xf32, #tpu.memory_space<vmem>>, vector<1x1x128x128xf32>
    %108 = vector.shape_cast %107 : vector<1x1x128x128xf32> to vector<128x128xf32>
    %cst_129 = arith.constant dense<0.000000e+00> : vector<64x128xf32>
    %109 = tpu.matmul %106, %108, %cst_129 {dimension_numbers = #tpu.dot_dimension_numbers<[1], [0], [0], [1], [0, 0, 1, 1], [], []>} : vector<64x128xf32>, vector<128x128xf32>, vector<64x128xf32> -> vector<64x128xf32>
    %110 = arith.addf %105, %109 : vector<64x128xf32>
    %c48_130 = arith.constant 48 : index
    %c0_131 = arith.constant 0 : index
    %111 = vector.load %arg7[%c48_130, %c0_131] : memref<112x128xf32, #tpu.memory_space<vmem>>, vector<64x128xf32>
    %c2_132 = arith.constant 2 : index
    %c3_133 = arith.constant 3 : index
    %c0_134 = arith.constant 0 : index
    %c0_135 = arith.constant 0 : index
    %112 = vector.load %arg2[%c2_132, %c3_133, %c0_134, %c0_135] : memref<4x4x128x128xf32, #tpu.memory_space<vmem>>, vector<1x1x128x128xf32>
    %113 = vector.shape_cast %112 : vector<1x1x128x128xf32> to vector<128x128xf32>
    %cst_136 = arith.constant dense<0.000000e+00> : vector<64x128xf32>
    %114 = tpu.matmul %111, %113, %cst_136 {dimension_numbers = #tpu.dot_dimension_numbers<[1], [0], [0], [1], [0, 0, 1, 1], [], []>} : vector<64x128xf32>, vector<128x128xf32>, vector<64x128xf32> -> vector<64x128xf32>
    %115 = arith.addf %110, %114 : vector<64x128xf32>
    %cst_137 = arith.constant 0.000000e+00 : f32
    %116 = vector.broadcast %cst_137 : f32 to vector<64x128xf32>
    %117 = arith.maximumf %115, %116 : vector<64x128xf32>
    %c0_138 = arith.constant 0 : index
    %c0_139 = arith.constant 0 : index
    %118 = vector.load %arg6[%c0_138, %c0_139] : memref<160x128xf32, #tpu.memory_space<vmem>>, vector<64x128xf32>
    tpu.vector_store %arg6[%c0_138, %c0_139], %117 {strides = array<i32>} : memref<160x128xf32, #tpu.memory_space<vmem>>, vector<64x128xf32>,
    %c3_140 = arith.constant 3 : index
    %c0_141 = arith.constant 0 : index
    %c0_142 = arith.constant 0 : index
    %119 = vector.load %arg3[%c3_140, %c0_141, %c0_142] : memref<4x1x128xf32, #tpu.memory_space<vmem>>, vector<1x1x128xf32>
    %120 = vector.shape_cast %119 : vector<1x1x128xf32> to vector<1x128xf32>
    %121 = vector.shape_cast %120 : vector<1x128xf32> to vector<1x128xf32>
    %122 = vector.broadcast %121 : vector<1x128xf32> to vector<16x128xf32>
    %c0_143 = arith.constant 0 : index
    %c0_144 = arith.constant 0 : index
    %123 = vector.load %arg6[%c0_143, %c0_144] : memref<160x128xf32, #tpu.memory_space<vmem>>, vector<16x128xf32>
    %c3_145 = arith.constant 3 : index
    %c0_146 = arith.constant 0 : index
    %c0_147 = arith.constant 0 : index
    %c0_148 = arith.constant 0 : index
    %124 = vector.load %arg2[%c3_145, %c0_146, %c0_147, %c0_148] : memref<4x4x128x128xf32, #tpu.memory_space<vmem>>, vector<1x1x128x128xf32>
    %125 = vector.shape_cast %124 : vector<1x1x128x128xf32> to vector<128x128xf32>
    %cst_149 = arith.constant dense<0.000000e+00> : vector<16x128xf32>
    %126 = tpu.matmul %123, %125, %cst_149 {dimension_numbers = #tpu.dot_dimension_numbers<[1], [0], [0], [1], [0, 0, 1, 1], [], []>} : vector<16x128xf32>, vector<128x128xf32>, vector<16x128xf32> -> vector<16x128xf32>
    %127 = arith.addf %122, %126 : vector<16x128xf32>
    %c16_150 = arith.constant 16 : index
    %c0_151 = arith.constant 0 : index
    %128 = vector.load %arg6[%c16_150, %c0_151] : memref<160x128xf32, #tpu.memory_space<vmem>>, vector<16x128xf32>
    %c3_152 = arith.constant 3 : index
    %c1_153 = arith.constant 1 : index
    %c0_154 = arith.constant 0 : index
    %c0_155 = arith.constant 0 : index
    %129 = vector.load %arg2[%c3_152, %c1_153, %c0_154, %c0_155] : memref<4x4x128x128xf32, #tpu.memory_space<vmem>>, vector<1x1x128x128xf32>
    %130 = vector.shape_cast %129 : vector<1x1x128x128xf32> to vector<128x128xf32>
    %cst_156 = arith.constant dense<0.000000e+00> : vector<16x128xf32>
    %131 = tpu.matmul %128, %130, %cst_156 {dimension_numbers = #tpu.dot_dimension_numbers<[1], [0], [0], [1], [0, 0, 1, 1], [], []>} : vector<16x128xf32>, vector<128x128xf32>, vector<16x128xf32> -> vector<16x128xf32>
    %132 = arith.addf %127, %131 : vector<16x128xf32>
    %c32_157 = arith.constant 32 : index
    %c0_158 = arith.constant 0 : index
    %133 = vector.load %arg6[%c32_157, %c0_158] : memref<160x128xf32, #tpu.memory_space<vmem>>, vector<16x128xf32>
    %c3_159 = arith.constant 3 : index
    %c2_160 = arith.constant 2 : index
    %c0_161 = arith.constant 0 : index
    %c0_162 = arith.constant 0 : index
    %134 = vector.load %arg2[%c3_159, %c2_160, %c0_161, %c0_162] : memref<4x4x128x128xf32, #tpu.memory_space<vmem>>, vector<1x1x128x128xf32>
    %135 = vector.shape_cast %134 : vector<1x1x128x128xf32> to vector<128x128xf32>
    %cst_163 = arith.constant dense<0.000000e+00> : vector<16x128xf32>
    %136 = tpu.matmul %133, %135, %cst_163 {dimension_numbers = #tpu.dot_dimension_numbers<[1], [0], [0], [1], [0, 0, 1, 1], [], []>} : vector<16x128xf32>, vector<128x128xf32>, vector<16x128xf32> -> vector<16x128xf32>
    %137 = arith.addf %132, %136 : vector<16x128xf32>
    %c48_164 = arith.constant 48 : index
    %c0_165 = arith.constant 0 : index
    %138 = vector.load %arg6[%c48_164, %c0_165] : memref<160x128xf32, #tpu.memory_space<vmem>>, vector<16x128xf32>
    %c3_166 = arith.constant 3 : index
    %c3_167 = arith.constant 3 : index
    %c0_168 = arith.constant 0 : index
    %c0_169 = arith.constant 0 : index
    %139 = vector.load %arg2[%c3_166, %c3_167, %c0_168, %c0_169] : memref<4x4x128x128xf32, #tpu.memory_space<vmem>>, vector<1x1x128x128xf32>
    %140 = vector.shape_cast %139 : vector<1x1x128x128xf32> to vector<128x128xf32>
    %cst_170 = arith.constant dense<0.000000e+00> : vector<16x128xf32>
    %141 = tpu.matmul %138, %140, %cst_170 {dimension_numbers = #tpu.dot_dimension_numbers<[1], [0], [0], [1], [0, 0, 1, 1], [], []>} : vector<16x128xf32>, vector<128x128xf32>, vector<16x128xf32> -> vector<16x128xf32>
    %142 = arith.addf %137, %141 : vector<16x128xf32>
    %cst_171 = arith.constant 0.000000e+00 : f32
    %143 = vector.broadcast %cst_171 : f32 to vector<16x128xf32>
    %144 = arith.maximumf %142, %143 : vector<16x128xf32>
    %c192_172 = arith.constant 192 : index
    %c0_173 = arith.constant 0 : index
    %145 = vector.load %arg5[%c192_172, %c0_173] : memref<208x128xf32, #tpu.memory_space<vmem>>, vector<16x128xf32>
    %146 = arith.addf %144, %145 : vector<16x128xf32>
    %c0_174 = arith.constant 0 : index
    %c0_175 = arith.constant 0 : index
    %c0_176 = arith.constant 0 : index
    %147 = vector.load %arg4[%c0_174, %c0_175, %c0_176] : memref<1x16x128xf32, #tpu.memory_space<vmem>>, vector<1x16x128xf32>
    %148 = vector.shape_cast %147 : vector<1x16x128xf32> to vector<16x128xf32>
    %149 = vector.shape_cast %146 : vector<16x128xf32> to vector<1x16x128xf32>
    tpu.vector_store %arg4[%c0_174, %c0_175, %c0_176], %149 {strides = array<i32>} : memref<1x16x128xf32, #tpu.memory_space<vmem>>, vector<1x16x128xf32>,
    return
  }
  func.func @transform_0(%arg0: i32) -> (i32, i32, i32) {
    %c0_i32 = arith.constant 0 : i32
    %c0_i32_0 = arith.constant 0 : i32
    %c0_i32_1 = arith.constant 0 : i32
    return %c0_i32, %arg0, %c0_i32_0 : i32, i32, i32
  }
  func.func @transform_1(%arg0: i32) -> (i32, i32, i32, i32) {
    %c0_i32 = arith.constant 0 : i32
    %c0_i32_0 = arith.constant 0 : i32
    %c0_i32_1 = arith.constant 0 : i32
    %c0_i32_2 = arith.constant 0 : i32
    %c0_i32_3 = arith.constant 0 : i32
    return %c0_i32, %c0_i32_0, %c0_i32_1, %c0_i32_2 : i32, i32, i32, i32
  }
  func.func @transform_2(%arg0: i32) -> (i32, i32, i32) {
    %c0_i32 = arith.constant 0 : i32
    %c0_i32_0 = arith.constant 0 : i32
    %c0_i32_1 = arith.constant 0 : i32
    %c0_i32_2 = arith.constant 0 : i32
    return %c0_i32, %c0_i32_0, %c0_i32_1 : i32, i32, i32
  }
  func.func @transform_3(%arg0: i32) -> (i32, i32, i32) {
    %c0_i32 = arith.constant 0 : i32
    %c0_i32_0 = arith.constant 0 : i32
    %c0_i32_1 = arith.constant 0 : i32
    return %c0_i32, %arg0, %c0_i32_0 : i32, i32, i32
  }
}

</mosaic_0001>

<llo_original>
// kernel: tpu_custom_call.1
$region0: #{tpu_custom_call.1}
  #allocation0 [shape = 'u32[]', space=smem, size = 0x4, offset = 0x4, fixed_abs, tag = 'smem constant byte address 0x4 - core index']
  #allocation1 [shape = 'u32[144,128]{1,0:T(1,128)}', space=vmem, size = 0x12000, scoped, tag = 'internal scratch']
  #allocation2 [shape = 'f32[208,128]{1,0:T(8,128)}', space=vmem, size = 0x1a000, scoped, tag = 'scratch operand']
  #allocation3 [shape = 'f32[160,128]{1,0:T(8,128)}', space=vmem, size = 0x14000, scoped, tag = 'scratch operand']
  #allocation4 [shape = 'f32[112,128]{1,0:T(8,128)}', space=vmem, size = 0xe000, scoped, tag = 'scratch operand']
  %s0 = inlined_call_operand.hbm [shape: f32[12,16,128], index: 0, kind: input, shape index: {}]
  %s1 = inlined_call_operand.hbm [shape: f32[4,4,128,128], index: 1, kind: input, shape index: {}]
  %s2 = inlined_call_operand.vmem [shape: f32[4,1,128], index: 2, kind: input, shape index: {}]
  %s3 = inlined_call_operand.hbm [shape: f32[1,16,128], index: 3, kind: output, shape index: {}]
  %s4 = sld [smem:[#allocation0]]
  $region30: #{tpu_custom_call.1} parent=0
    _
  %s6 = ssub.s32 1, %s4
  %s7 = scalar_select 0, %s6, %s4
  $region1: #{tpu_custom_call.1} parent=0
    #allocation5 [shape = 'u8[98304]{0}', space=vmem, size = 0x18000, scoped, tag = 'input window, operand 0, single buffered']
    #allocation6 [shape = 's32[1]{0}', space=sflag, size = 0x4, scoped, tag = 'scoped memory for tpu_custom_call.1']
    #allocation7 [shape = 's32[1]{0}', space=sflag, size = 0x4, scoped, tag = 'scoped memory for tpu_custom_call.1']
    #allocation8 [shape = 'u8[1048576]{0}', space=vmem, size = 0x100000, scoped, tag = 'input window, operand 1, single buffered']
    #allocation9 [shape = 's32[1]{0}', space=sflag, size = 0x4, scoped, tag = 'scoped memory for tpu_custom_call.1']
    #allocation10 [shape = 'u8[8192]{0}', space=vmem, size = 0x2000, scoped, tag = 'output window, operand 0, single buffered']
    %8 = vsyncpa [#allocation6], 0
    %9 = vsyncpa [#allocation9], 0
    %10 = vsyncpa [#allocation7], 0
    // Predicated region
    $region2: #{tpu_custom_call.1} parent=1 // pred_check
      _
    $region3: #{tpu_custom_call.1} parent=1 // pred_check_branch
      %12 = sbr.rel (0) target = $region5
    $region4: #{tpu_custom_call.1} parent=1 // pred_region
      %s14 = ssub.s32 3072, 3072
      %15 = vsyncadd [#allocation6], %s14
      %s16 = sshll.u32 [#allocation5], 4
      %s17 = int_to_ptr.vmem [resolvable:$true] %s16
      %22 = dma.hbm_to_vmem [thread:$0]  %s0, 3072, %s17, [#allocation6], 128, 128, 8
    $region5: #{tpu_custom_call.1} parent=1 // pred_fallthru
      _
    // Predicated region
    $region6: #{tpu_custom_call.1} parent=1 // pred_check
      _
    $region7: #{tpu_custom_call.1} parent=1 // pred_check_branch
      %24 = sbr.rel (0) target = $region9
    $region8: #{tpu_custom_call.1} parent=1 // pred_region
      %s26 = ssub.s32 32768, 32768
      %27 = vsyncadd [#allocation9], %s26
      %s28 = sshll.u32 [#allocation8], 4
      %s29 = int_to_ptr.vmem [resolvable:$true] %s28
      %34 = dma.hbm_to_vmem [thread:$0]  %s1, 32768, %s29, [#allocation9], 128, 128, 8
    $region9: #{tpu_custom_call.1} parent=1 // pred_fallthru
      _
    // Predicated region
    $region10: #{tpu_custom_call.1} parent=1 // pred_check
      _
    $region11: #{tpu_custom_call.1} parent=1 // pred_check_branch
      %36 = sbr.rel (0) target = $region13
    $region12: #{tpu_custom_call.1} parent=1 // pred_region
      _
    $region13: #{tpu_custom_call.1} parent=1 // pred_fallthru
      _
    // Predicated region
    $region14: #{tpu_custom_call.1} parent=1 // pred_check
      _
    $region15: #{tpu_custom_call.1} parent=1 // pred_check_branch
      %38 = sbr.rel (0) target = $region17
    $region16: #{tpu_custom_call.1} parent=1 // pred_region
      %39 = dma.done [#allocation6], 3072
    $region17: #{tpu_custom_call.1} parent=1 // pred_fallthru
      _
    // Predicated region
    $region18: #{tpu_custom_call.1} parent=1 // pred_check
      _
    $region19: #{tpu_custom_call.1} parent=1 // pred_check_branch
      %41 = sbr.rel (0) target = $region21
    $region20: #{tpu_custom_call.1} parent=1 // pred_region
      %42 = dma.done [#allocation9], 32768
    $region21: #{tpu_custom_call.1} parent=1 // pred_fallthru
      _
    %43 = vst [vmem:[#allocation2] sm:$0xff] 0.0
    %44 = vst [vmem:[#allocation2 + $0x8] sm:$0xff] 0.0
    %v45 = vld [vmem:[#allocation5] sm:$0xff]
    %v46 = vld [vmem:[#allocation5 + $0x8] sm:$0xff]
    %47 = vst [vmem:[#allocation2 + $0x10] sm:$0xff] %v45
    %48 = vst [vmem:[#allocation2 + $0x18] sm:$0xff] %v46
    %s49 = scalar_lea.vmem [#allocation5], 16
    %v50 = vld [vmem:[%s49] sm:$0xff]
    %v51 = vld [vmem:[%s49 + $0x8] sm:$0xff]
    %52 = vst [vmem:[#allocation2 + $0x20] sm:$0xff] %v50
    %53 = vst [vmem:[#allocation2 + $0x28] sm:$0xff] %v51
    %s54 = scalar_lea.vmem [#allocation5], 32
    %v55 = vld [vmem:[%s54] sm:$0xff]
    %v56 = vld [vmem:[%s54 + $0x8] sm:$0xff]
    %57 = vst [vmem:[#allocation2 + $0x30] sm:$0xff] %v55
    %58 = vst [vmem:[#allocation2 + $0x38] sm:$0xff] %v56
    %s59 = scalar_lea.vmem [#allocation5], 48
    %v60 = vld [vmem:[%s59] sm:$0xff]
    %v61 = vld [vmem:[%s59 + $0x8] sm:$0xff]
    %62 = vst [vmem:[#allocation2 + $0x40] sm:$0xff] %v60
    %63 = vst [vmem:[#allocation2 + $0x48] sm:$0xff] %v61
    %s64 = scalar_lea.vmem [#allocation5], 64
    %v65 = vld [vmem:[%s64] sm:$0xff]
    %v66 = vld [vmem:[%s64 + $0x8] sm:$0xff]
    %67 = vst [vmem:[#allocation2 + $0x50] sm:$0xff] %v65
    %68 = vst [vmem:[#allocation2 + $0x58] sm:$0xff] %v66
    %s69 = scalar_lea.vmem [#allocation5], 80
    %v70 = vld [vmem:[%s69] sm:$0xff]
    %v71 = vld [vmem:[%s69 + $0x8] sm:$0xff]
    %72 = vst [vmem:[#allocation2 + $0x60] sm:$0xff] %v70
    %73 = vst [vmem:[#allocation2 + $0x68] sm:$0xff] %v71
    %s74 = scalar_lea.vmem [#allocation5], 96
    %v75 = vld [vmem:[%s74] sm:$0xff]
    %v76 = vld [vmem:[%s74 + $0x8] sm:$0xff]
    %77 = vst [vmem:[#allocation2 + $0x70] sm:$0xff] %v75
    %78 = vst [vmem:[#allocation2 + $0x78] sm:$0xff] %v76
    %s79 = scalar_lea.vmem [#allocation5], 112
    %v80 = vld [vmem:[%s79] sm:$0xff]
    %v81 = vld [vmem:[%s79 + $0x8] sm:$0xff]
    %82 = vst [vmem:[#allocation2 + $0x80] sm:$0xff] %v80
    %83 = vst [vmem:[#allocation2 + $0x88] sm:$0xff] %v81
    %s84 = scalar_lea.vmem [#allocation5], 128
    %v85 = vld [vmem:[%s84] sm:$0xff]
    %v86 = vld [vmem:[%s84 + $0x8] sm:$0xff]
    %87 = vst [vmem:[#allocation2 + $0x90] sm:$0xff] %v85
    %88 = vst [vmem:[#allocation2 + $0x98] sm:$0xff] %v86
    %s89 = scalar_lea.vmem [#allocation5], 144
    %v90 = vld [vmem:[%s89] sm:$0xff]
    %v91 = vld [vmem:[%s89 + $0x8] sm:$0xff]
    %92 = vst [vmem:[#allocation2 + $0xa0] sm:$0xff] %v90
    %93 = vst [vmem:[#allocation2 + $0xa8] sm:$0xff] %v91
    %s94 = scalar_lea.vmem [#allocation5], 160
    %v95 = vld [vmem:[%s94] sm:$0xff]
    %v96 = vld [vmem:[%s94 + $0x8] sm:$0xff]
    %97 = vst [vmem:[#allocation2 + $0xb0] sm:$0xff] %v95
    %98 = vst [vmem:[#allocation2 + $0xb8] sm:$0xff] %v96
    %s99 = scalar_lea.vmem [#allocation5], 176
    %v100 = vld [vmem:[%s99] sm:$0xff]
    %v101 = vld [vmem:[%s99 + $0x8] sm:$0xff]
    %102 = vst [vmem:[#allocation2 + $0xc0] sm:$0xff] %v100
    %103 = vst [vmem:[#allocation2 + $0xc8] sm:$0xff] %v101
    %v104 = vld [vmem:[%s2] sm:$0x1]
    %v106 = vlaneseq
    %v107 = vshrl.u32 %v106, 7
    %v108 = vsub.s32 0, %v107
    %v109 = vrot.slane %v104, %v108
    %v111 = vld [vmem:[#allocation2] sm:$0xff]
    %v112 = vld [vmem:[#allocation2 + $0x8] sm:$0xff]
    %v113 = vld [vmem:[#allocation2 + $0x10] sm:$0xff]
    %v114 = vld [vmem:[#allocation2 + $0x18] sm:$0xff]
    %v115 = vld [vmem:[#allocation2 + $0x20] sm:$0xff]
    %v116 = vld [vmem:[#allocation2 + $0x28] sm:$0xff]
    %v117 = vld [vmem:[#allocation2 + $0x30] sm:$0xff]
    %v118 = vld [vmem:[#allocation2 + $0x38] sm:$0xff]
    %v119 = vld [vmem:[#allocation2 + $0x40] sm:$0xff]
    %v120 = vld [vmem:[#allocation2 + $0x48] sm:$0xff]
    %v121 = vld [vmem:[#allocation2 + $0x50] sm:$0xff]
    %v122 = vld [vmem:[#allocation2 + $0x58] sm:$0xff]
    %v123 = vld [vmem:[#allocation2 + $0x60] sm:$0xff]
    %v124 = vld [vmem:[#allocation2 + $0x68] sm:$0xff]
    %v125 = vld [vmem:[#allocation2 + $0x70] sm:$0xff]
    %v126 = vld [vmem:[#allocation2 + $0x78] sm:$0xff]
    %v127 = vld [vmem:[#allocation2 + $0x80] sm:$0xff]
    %v128 = vld [vmem:[#allocation2 + $0x88] sm:$0xff]
    %v129 = vld [vmem:[#allocation2 + $0x90] sm:$0xff]
    %v130 = vld [vmem:[#allocation2 + $0x98] sm:$0xff]
    %v131 = vld [vmem:[#allocation8] sm:$0xff]
    %v132 = vld [vmem:[#allocation8 + $0x8] sm:$0xff]
    %v133 = vld [vmem:[#allocation8 + $0x10] sm:$0xff]
    %v134 = vld [vmem:[#allocation8 + $0x18] sm:$0xff]
    %v135 = vld [vmem:[#allocation8 + $0x20] sm:$0xff]
    %v136 = vld [vmem:[#allocation8 + $0x28] sm:$0xff]
    %v137 = vld [vmem:[#allocation8 + $0x30] sm:$0xff]
    %v138 = vld [vmem:[#allocation8 + $0x38] sm:$0xff]
    %v139 = vld [vmem:[#allocation8 + $0x40] sm:$0xff]
    %v140 = vld [vmem:[#allocation8 + $0x48] sm:$0xff]
    %v141 = vld [vmem:[#allocation8 + $0x50] sm:$0xff]
    %v142 = vld [vmem:[#allocation8 + $0x58] sm:$0xff]
    %v143 = vld [vmem:[#allocation8 + $0x60] sm:$0xff]
    %v144 = vld [vmem:[#allocation8 + $0x68] sm:$0xff]
    %v145 = vld [vmem:[#allocation8 + $0x70] sm:$0xff]
    %v146 = vld [vmem:[#allocation8 + $0x78] sm:$0xff]
    %147 = vmatprep.subr.mxu0 0.0
    %148 = vmatpush1.msra.mxu0 %v131
    %149 = vmatprep.subr.mxu0 0.0
    %150 = vmatpush1.msra.mxu0 %v132
    %151 = vmatprep.subr.mxu0 0.0
    %152 = vmatpush1.msra.mxu0 %v133
    %153 = vmatprep.subr.mxu0 0.0
    %154 = vmatpush1.msra.mxu0 %v134
    %155 = vmatprep.subr.mxu0 0.0
    %156 = vmatpush1.msra.mxu0 %v135
    %157 = vmatprep.subr.mxu0 0.0
    %158 = vmatpush1.msra.mxu0 %v136
    %159 = vmatprep.subr.mxu0 0.0
    %160 = vmatpush1.msra.mxu0 %v137
    %161 = vmatprep.subr.mxu0 0.0
    %162 = vmatpush1.msra.mxu0 %v138
    %163 = vmatprep.subr.mxu0 0.0
    %164 = vmatpush1.msra.mxu0 %v139
    %165 = vmatprep.subr.mxu0 0.0
    %166 = vmatpush1.msra.mxu0 %v140
    %167 = vmatprep.subr.mxu0 0.0
    %168 = vmatpush1.msra.mxu0 %v141
    %169 = vmatprep.subr.mxu0 0.0
    %170 = vmatpush1.msra.mxu0 %v142
    %171 = vmatprep.subr.mxu0 0.0
    %172 = vmatpush1.msra.mxu0 %v143
    %173 = vmatprep.subr.mxu0 0.0
    %174 = vmatpush1.msra.mxu0 %v144
    %175 = vmatprep.subr.mxu0 0.0
    %176 = vmatpush1.msra.mxu0 %v145
    %177 = vmatprep.subr.mxu0 0.0
    %178 = vmatpush1.msra.mxu0 %v146
    %179 = vmatprep.subr.mxu0 0.0
    %180 = vmatpush1.msra.mxu0 0.0
    %181 = vmatprep.subr.mxu0 0.0
    %182 = vmatpush1.msra.mxu0 0.0
    %183 = vmatprep.subr.mxu0 0.0
    %184 = vmatpush1.msra.mxu0 0.0
    %185 = vmatprep.subr.mxu0 0.0
    %186 = vmatpush1.msra.mxu0 0.0
    %187 = vmatprep.subr.mxu0 0.0
    %188 = vmatpush1.msra.mxu0 0.0
    %189 = vmatprep.subr.mxu0 0.0
    %190 = vmatpush1.msra.mxu0 0.0
    %191 = vmatprep.subr.mxu0 0.0
    %192 = vmatpush1.msra.mxu0 0.0
    %193 = vmatprep.subr.mxu0 0.0
    %194 = vmatpush1.msra.mxu0 0.0
    %195 = vmatprep.subr.mxu0 0.0
    %196 = vmatpush1.msra.mxu0 0.0
    %197 = vmatprep.subr.mxu0 0.0
    %198 = vmatpush1.msra.mxu0 0.0
    %199 = vmatprep.subr.mxu0 0.0
    %200 = vmatpush1.msra.mxu0 0.0
    %201 = vmatprep.subr.mxu0 0.0
    %202 = vmatpush1.msra.mxu0 0.0
    %203 = vmatprep.subr.mxu0 0.0
    %204 = vmatpush1.msra.mxu0 0.0
    %205 = vmatprep.subr.mxu0 0.0
    %206 = vmatpush1.msra.mxu0 0.0
    %207 = vmatprep.subr.mxu0 0.0
    %208 = vmatpush1.msra.mxu0 0.0
    %209 = vmatprep.subr.mxu0 0.0
    %210 = vmatpush1.msra.mxu0 0.0
    %211 = vmatprep.mubr.f32.mxu0 0.0
    %212 = vmatmul.mubr.f32.gmra.mrb[0].mxu0 %v111
    %v213 = vpop.f32.mrb[0].mxu0
    %v214 = vadd.f32 0.0, %v213
    %v215 = vpop.f32.mrb[0].mxu0
    %216 = vmatprep.mubr.f32.mxu0 0.0
    %217 = vmatmul.mubr.f32.gmra.mrb[0].mxu0 %v112
    %v218 = vpop.f32.mrb[0].mxu0
    %v219 = vadd.f32 0.0, %v218
    %v220 = vpop.f32.mrb[0].mxu0
    %221 = vmatprep.mubr.f32.mxu0 0.0
    %222 = vmatmul.mubr.f32.gmra.mrb[0].mxu0 %v113
    %v223 = vpop.f32.mrb[0].mxu0
    %v224 = vadd.f32 0.0, %v223
    %v225 = vpop.f32.mrb[0].mxu0
    %226 = vmatprep.mubr.f32.mxu0 0.0
    %227 = vmatmul.mubr.f32.gmra.mrb[0].mxu0 %v114
    %v228 = vpop.f32.mrb[0].mxu0
    %v229 = vadd.f32 0.0, %v228
    %v230 = vpop.f32.mrb[0].mxu0
    %231 = vmatprep.mubr.f32.mxu0 0.0
    %232 = vmatmul.mubr.f32.gmra.mrb[0].mxu0 %v115
    %v233 = vpop.f32.mrb[0].mxu0
    %v234 = vadd.f32 0.0, %v233
    %v235 = vpop.f32.mrb[0].mxu0
    %236 = vmatprep.mubr.f32.mxu0 0.0
    %237 = vmatmul.mubr.f32.gmra.mrb[0].mxu0 %v116
    %v238 = vpop.f32.mrb[0].mxu0
    %v239 = vadd.f32 0.0, %v238
    %v240 = vpop.f32.mrb[0].mxu0
    %241 = vmatprep.mubr.f32.mxu0 0.0
    %242 = vmatmul.mubr.f32.gmra.mrb[0].mxu0 %v117
    %v243 = vpop.f32.mrb[0].mxu0
    %v244 = vadd.f32 0.0, %v243
    %v245 = vpop.f32.mrb[0].mxu0
    %246 = vmatprep.mubr.f32.mxu0 0.0
    %247 = vmatmul.mubr.f32.gmra.mrb[0].mxu0 %v118
    %v248 = vpop.f32.mrb[0].mxu0
    %v249 = vadd.f32 0.0, %v248
    %v250 = vpop.f32.mrb[0].mxu0
    %251 = vmatprep.mubr.f32.mxu0 0.0
    %252 = vmatmul.mubr.f32.gmra.mrb[0].mxu0 %v119
    %v253 = vpop.f32.mrb[0].mxu0
    %v254 = vadd.f32 0.0, %v253
    %v255 = vpop.f32.mrb[0].mxu0
    %256 = vmatprep.mubr.f32.mxu0 0.0
    %257 = vmatmul.mubr.f32.gmra.mrb[0].mxu0 %v120
    %v258 = vpop.f32.mrb[0].mxu0
    %v259 = vadd.f32 0.0, %v258
    %v260 = vpop.f32.mrb[0].mxu0
    %261 = vmatprep.mubr.f32.mxu0 0.0
    %262 = vmatmul.mubr.f32.gmra.mrb[0].mxu0 %v121
    %v263 = vpop.f32.mrb[0].mxu0
    %v264 = vadd.f32 0.0, %v263
    %v265 = vpop.f32.mrb[0].mxu0
    %266 = vmatprep.mubr.f32.mxu0 0.0
    %267 = vmatmul.mubr.f32.gmra.mrb[0].mxu0 %v122
    %v268 = vpop.f32.mrb[0].mxu0
    %v269 = vadd.f32 0.0, %v268
    %v270 = vpop.f32.mrb[0].mxu0
    %271 = vmatprep.mubr.f32.mxu0 0.0
    %272 = vmatmul.mubr.f32.gmra.mrb[0].mxu0 %v123
    %v273 = vpop.f32.mrb[0].mxu0
    %v274 = vadd.f32 0.0, %v273
    %v275 = vpop.f32.mrb[0].mxu0
    %276 = vmatprep.mubr.f32.mxu0 0.0
    %277 = vmatmul.mubr.f32.gmra.mrb[0].mxu0 %v124
    %v278 = vpop.f32.mrb[0].mxu0
    %v279 = vadd.f32 0.0, %v278
    %v280 = vpop.f32.mrb[0].mxu0
    %281 = vmatprep.mubr.f32.mxu0 0.0
    %282 = vmatmul.mubr.f32.gmra.mrb[0].mxu0 %v125
    %v283 = vpop.f32.mrb[0].mxu0
    %v284 = vadd.f32 0.0, %v283
    %v285 = vpop.f32.mrb[0].mxu0
    %286 = vmatprep.mubr.f32.mxu0 0.0
    %287 = vmatmul.mubr.f32.gmra.mrb[0].mxu0 %v126
    %v288 = vpop.f32.mrb[0].mxu0
    %v289 = vadd.f32 0.0, %v288
    %v290 = vpop.f32.mrb[0].mxu0
    %291 = vmatprep.mubr.f32.mxu0 0.0
    %292 = vmatmul.mubr.f32.gmra.mrb[0].mxu0 %v127
    %v293 = vpop.f32.mrb[0].mxu0
    %v294 = vadd.f32 0.0, %v293
    %v295 = vpop.f32.mrb[0].mxu0
    %296 = vmatprep.mubr.f32.mxu0 0.0
    %297 = vmatmul.mubr.f32.gmra.mrb[0].mxu0 %v128
    %v298 = vpop.f32.mrb[0].mxu0
    %v299 = vadd.f32 0.0, %v298
    %v300 = vpop.f32.mrb[0].mxu0
    %301 = vmatprep.mubr.f32.mxu0 0.0
    %302 = vmatmul.mubr.f32.gmra.mrb[0].mxu0 %v129
    %v303 = vpop.f32.mrb[0].mxu0
    %v304 = vadd.f32 0.0, %v303
    %v305 = vpop.f32.mrb[0].mxu0
    %306 = vmatprep.mubr.f32.mxu0 0.0
    %307 = vmatmul.mubr.f32.gmra.mrb[0].mxu0 %v130
    %v308 = vpop.f32.mrb[0].mxu0
    %v309 = vadd.f32 0.0, %v308
    %v310 = vpop.f32.mrb[0].mxu0
    %311 = vdwg.mxu0
    %v312 = vadd.f32 %v109, %v214
    %v313 = vadd.f32 %v109, %v219
    %v314 = vadd.f32 %v109, %v224
    %v315 = vadd.f32 %v109, %v229
    %v316 = vadd.f32 %v109, %v234
    %v317 = vadd.f32 %v109, %v239
    %v318 = vadd.f32 %v109, %v244
    %v319 = vadd.f32 %v109, %v249
    %v320 = vadd.f32 %v109, %v254
    %v321 = vadd.f32 %v109, %v259
    %v322 = vadd.f32 %v109, %v264
    %v323 = vadd.f32 %v109, %v269
    %v324 = vadd.f32 %v109, %v274
    %v325 = vadd.f32 %v109, %v279
    %v326 = vadd.f32 %v109, %v284
    %v327 = vadd.f32 %v109, %v289
    %v328 = vadd.f32 %v109, %v294
    %v329 = vadd.f32 %v109, %v299
    %v330 = vadd.f32 %v109, %v304
    %v331 = vadd.f32 %v109, %v309
    %v332 = vld [vmem:[#allocation2 + $0x10] sm:$0xff]
    %v333 = vld [vmem:[#allocation2 + $0x18] sm:$0xff]
    %v334 = vld [vmem:[#allocation2 + $0x20] sm:$0xff]
    %v335 = vld [vmem:[#allocation2 + $0x28] sm:$0xff]
    %v336 = vld [vmem:[#allocation2 + $0x30] sm:$0xff]
    %v337 = vld [vmem:[#allocation2 + $0x38] sm:$0xff]
    %v338 = vld [vmem:[#allocation2 + $0x40] sm:$0xff]
    %v339 = vld [vmem:[#allocation2 + $0x48] sm:$0xff]
    %v340 = vld [vmem:[#allocation2 + $0x50] sm:$0xff]
    %v341 = vld [vmem:[#allocation2 + $0x58] sm:$0xff]
    %v342 = vld [vmem:[#allocation2 + $0x60] sm:$0xff]
    %v343 = vld [vmem:[#allocation2 + $0x68] sm:$0xff]
    %v344 = vld [vmem:[#allocation2 + $0x70] sm:$0xff]
    %v345 = vld [vmem:[#allocation2 + $0x78] sm:$0xff]
    %v346 = vld [vmem:[#allocation2 + $0x80] sm:$0xff]
    %v347 = vld [vmem:[#allocation2 + $0x88] sm:$0xff]
    %v348 = vld [vmem:[#allocation2 + $0x90] sm:$0xff]
    %v349 = vld [vmem:[#allocation2 + $0x98] sm:$0xff]
    %v350 = vld [vmem:[#allocation2 + $0xa0] sm:$0xff]
    %v351 = vld [vmem:[#allocation2 + $0xa8] sm:$0xff]
    %s352 = scalar_lea.vmem [#allocation8], 128
    %v353 = vld [vmem:[%s352] sm:$0xff]
    %v354 = vld [vmem:[%s352 + $0x8] sm:$0xff]
    %v355 = vld [vmem:[%s352 + $0x10] sm:$0xff]
    %v356 = vld [vmem:[%s352 + $0x18] sm:$0xff]
    %v357 = vld [vmem:[%s352 + $0x20] sm:$0xff]
    %v358 = vld [vmem:[%s352 + $0x28] sm:$0xff]
    %v359 = vld [vmem:[%s352 + $0x30] sm:$0xff]
    %v360 = vld [vmem:[%s352 + $0x38] sm:$0xff]
    %v361 = vld [vmem:[%s352 + $0x40] sm:$0xff]
    %v362 = vld [vmem:[%s352 + $0x48] sm:$0xff]
    %v363 = vld [vmem:[%s352 + $0x50] sm:$0xff]
    %v364 = vld [vmem:[%s352 + $0x58] sm:$0xff]
    %v365 = vld [vmem:[%s352 + $0x60] sm:$0xff]
    %v366 = vld [vmem:[%s352 + $0x68] sm:$0xff]
    %v367 = vld [vmem:[%s352 + $0x70] sm:$0xff]
    %v368 = vld [vmem:[%s352 + $0x78] sm:$0xff]
    %369 = vmatprep.subr.mxu0 0.0
    %370 = vmatpush1.msra.mxu0 %v353
    %371 = vmatprep.subr.mxu0 0.0
    %372 = vmatpush1.msra.mxu0 %v354
    %373 = vmatprep.subr.mxu0 0.0
    %374 = vmatpush1.msra.mxu0 %v355
    %375 = vmatprep.subr.mxu0 0.0
    %376 = vmatpush1.msra.mxu0 %v356
    %377 = vmatprep.subr.mxu0 0.0
    %378 = vmatpush1.msra.mxu0 %v357
    %379 = vmatprep.subr.mxu0 0.0
    %380 = vmatpush1.msra.mxu0 %v358
    %381 = vmatprep.subr.mxu0 0.0
    %382 = vmatpush1.msra.mxu0 %v359
    %383 = vmatprep.subr.mxu0 0.0
    %384 = vmatpush1.msra.mxu0 %v360
    %385 = vmatprep.subr.mxu0 0.0
    %386 = vmatpush1.msra.mxu0 %v361
    %387 = vmatprep.subr.mxu0 0.0
    %388 = vmatpush1.msra.mxu0 %v362
    %389 = vmatprep.subr.mxu0 0.0
    %390 = vmatpush1.msra.mxu0 %v363
    %391 = vmatprep.subr.mxu0 0.0
    %392 = vmatpush1.msra.mxu0 %v364
    %393 = vmatprep.subr.mxu0 0.0
    %394 = vmatpush1.msra.mxu0 %v365
    %395 = vmatprep.subr.mxu0 0.0
    %396 = vmatpush1.msra.mxu0 %v366
    %397 = vmatprep.subr.mxu0 0.0
    %398 = vmatpush1.msra.mxu0 %v367
    %399 = vmatprep.subr.mxu0 0.0
    %400 = vmatpush1.msra.mxu0 %v368
    %401 = vmatprep.subr.mxu0 0.0
    %402 = vmatpush1.msra.mxu0 0.0
    %403 = vmatprep.subr.mxu0 0.0
    %404 = vmatpush1.msra.mxu0 0.0
    %405 = vmatprep.subr.mxu0 0.0
    %406 = vmatpush1.msra.mxu0 0.0
    %407 = vmatprep.subr.mxu0 0.0
    %408 = vmatpush1.msra.mxu0 0.0
    %409 = vmatprep.subr.mxu0 0.0
    %410 = vmatpush1.msra.mxu0 0.0
    %411 = vmatprep.subr.mxu0 0.0
    %412 = vmatpush1.msra.mxu0 0.0
    %413 = vmatprep.subr.mxu0 0.0
    %414 = vmatpush1.msra.mxu0 0.0
    %415 = vmatprep.subr.mxu0 0.0
    %416 = vmatpush1.msra.mxu0 0.0
    %417 = vmatprep.subr.mxu0 0.0
    %418 = vmatpush1.msra.mxu0 0.0
    %419 = vmatprep.subr.mxu0 0.0
    %420 = vmatpush1.msra.mxu0 0.0
    %421 = vmatprep.subr.mxu0 0.0
    %422 = vmatpush1.msra.mxu0 0.0
    %423 = vmatprep.subr.mxu0 0.0
    %424 = vmatpush1.msra.mxu0 0.0
    %425 = vmatprep.subr.mxu0 0.0
    %426 = vmatpush1.msra.mxu0 0.0
    %427 = vmatprep.subr.mxu0 0.0
    %428 = vmatpush1.msra.mxu0 0.0
    %429 = vmatprep.subr.mxu0 0.0
    %430 = vmatpush1.msra.mxu0 0.0
    %431 = vmatprep.subr.mxu0 0.0
    %432 = vmatpush1.msra.mxu0 0.0
    %433 = vmatprep.mubr.f32.mxu0 0.0
    %434 = vmatmul.mubr.f32.gmra.mrb[0].mxu0 %v332
    %v435 = vpop.f32.mrb[0].mxu0
    %v436 = vadd.f32 0.0, %v435
    %v437 = vpop.f32.mrb[0].mxu0
    %438 = vmatprep.mubr.f32.mxu0 0.0
    %439 = vmatmul.mubr.f32.gmra.mrb[0].mxu0 %v333
    %v440 = vpop.f32.mrb[0].mxu0
    %v441 = vadd.f32 0.0, %v440
    %v442 = vpop.f32.mrb[0].mxu0
    %443 = vmatprep.mubr.f32.mxu0 0.0
    %444 = vmatmul.mubr.f32.gmra.mrb[0].mxu0 %v334
    %v445 = vpop.f32.mrb[0].mxu0
    %v446 = vadd.f32 0.0, %v445
    %v447 = vpop.f32.mrb[0].mxu0
    %448 = vmatprep.mubr.f32.mxu0 0.0
    %449 = vmatmul.mubr.f32.gmra.mrb[0].mxu0 %v335
    %v450 = vpop.f32.mrb[0].mxu0
    %v451 = vadd.f32 0.0, %v450
    %v452 = vpop.f32.mrb[0].mxu0
    %453 = vmatprep.mubr.f32.mxu0 0.0
    %454 = vmatmul.mubr.f32.gmra.mrb[0].mxu0 %v336
    %v455 = vpop.f32.mrb[0].mxu0
    %v456 = vadd.f32 0.0, %v455
    %v457 = vpop.f32.mrb[0].mxu0
    %458 = vmatprep.mubr.f32.mxu0 0.0
    %459 = vmatmul.mubr.f32.gmra.mrb[0].mxu0 %v337
    %v460 = vpop.f32.mrb[0].mxu0
    %v461 = vadd.f32 0.0, %v460
    %v462 = vpop.f32.mrb[0].mxu0
    %463 = vmatprep.mubr.f32.mxu0 0.0
    %464 = vmatmul.mubr.f32.gmra.mrb[0].mxu0 %v338
    %v465 = vpop.f32.mrb[0].mxu0
    %v466 = vadd.f32 0.0, %v465
    %v467 = vpop.f32.mrb[0].mxu0
    %468 = vmatprep.mubr.f32.mxu0 0.0
    %469 = vmatmul.mubr.f32.gmra.mrb[0].mxu0 %v339
    %v470 = vpop.f32.mrb[0].mxu0
    %v471 = vadd.f32 0.0, %v470
    %v472 = vpop.f32.mrb[0].mxu0
    %473 = vmatprep.mubr.f32.mxu0 0.0
    %474 = vmatmul.mubr.f32.gmra.mrb[0].mxu0 %v340
    %v475 = vpop.f32.mrb[0].mxu0
    %v476 = vadd.f32 0.0, %v475
    %v477 = vpop.f32.mrb[0].mxu0
    %478 = vmatprep.mubr.f32.mxu0 0.0
    %479 = vmatmul.mubr.f32.gmra.mrb[0].mxu0 %v341
    %v480 = vpop.f32.mrb[0].mxu0
    %v481 = vadd.f32 0.0, %v480
    %v482 = vpop.f32.mrb[0].mxu0
    %483 = vmatprep.mubr.f32.mxu0 0.0
    %484 = vmatmul.mubr.f32.gmra.mrb[0].mxu0 %v342
    %v485 = vpop.f32.mrb[0].mxu0
    %v486 = vadd.f32 0.0, %v485
    %v487 = vpop.f32.mrb[0].mxu0
    %488 = vmatprep.mubr.f32.mxu0 0.0
    %489 = vmatmul.mubr.f32.gmra.mrb[0].mxu0 %v343
    %v490 = vpop.f32.mrb[0].mxu0
    %v491 = vadd.f32 0.0, %v490
    %v492 = vpop.f32.mrb[0].mxu0
    %493 = vmatprep.mubr.f32.mxu0 0.0
    %494 = vmatmul.mubr.f32.gmra.mrb[0].mxu0 %v344
    %v495 = vpop.f32.mrb[0].mxu0
    %v496 = vadd.f32 0.0, %v495
    %v497 = vpop.f32.mrb[0].mxu0
    %498 = vmatprep.mubr.f32.mxu0 0.0
    %499 = vmatmul.mubr.f32.gmra.mrb[0].mxu0 %v345
    %v500 = vpop.f32.mrb[0].mxu0
    %v501 = vadd.f32 0.0, %v500
    %v502 = vpop.f32.mrb[0].mxu0
    %503 = vmatprep.mubr.f32.mxu0 0.0
    %504 = vmatmul.mubr.f32.gmra.mrb[0].mxu0 %v346
    %v505 = vpop.f32.mrb[0].mxu0
    %v506 = vadd.f32 0.0, %v505
    %v507 = vpop.f32.mrb[0].mxu0
    %508 = vmatprep.mubr.f32.mxu0 0.0
    %509 = vmatmul.mubr.f32.gmra.mrb[0].mxu0 %v347
    %v510 = vpop.f32.mrb[0].mxu0
    %v511 = vadd.f32 0.0, %v510
    %v512 = vpop.f32.mrb[0].mxu0
    %513 = vmatprep.mubr.f32.mxu0 0.0
    %514 = vmatmul.mubr.f32.gmra.mrb[0].mxu0 %v348
    %v515 = vpop.f32.mrb[0].mxu0
    %v516 = vadd.f32 0.0, %v515
    %v517 = vpop.f32.mrb[0].mxu0
    %518 = vmatprep.mubr.f32.mxu0 0.0
    %519 = vmatmul.mubr.f32.gmra.mrb[0].mxu0 %v349
    %v520 = vpop.f32.mrb[0].mxu0
    %v521 = vadd.f32 0.0, %v520
    %v522 = vpop.f32.mrb[0].mxu0
    %523 = vmatprep.mubr.f32.mxu0 0.0
    %524 = vmatmul.mubr.f32.gmra.mrb[0].mxu0 %v350
    %v525 = vpop.f32.mrb[0].mxu0
    %v526 = vadd.f32 0.0, %v525
    %v527 = vpop.f32.mrb[0].mxu0
    %528 = vmatprep.mubr.f32.mxu0 0.0
    %529 = vmatmul.mubr.f32.gmra.mrb[0].mxu0 %v351
    %v530 = vpop.f32.mrb[0].mxu0
    %v531 = vadd.f32 0.0, %v530
    %v532 = vpop.f32.mrb[0].mxu0
    %533 = vdwg.mxu0
    %v534 = vadd.f32 %v312, %v436
    %v535 = vadd.f32 %v313, %v441
    %v536 = vadd.f32 %v314, %v446
    %v537 = vadd.f32 %v315, %v451
    %v538 = vadd.f32 %v316, %v456
    %v539 = vadd.f32 %v317, %v461
    %v540 = vadd.f32 %v318, %v466
    %v541 = vadd.f32 %v319, %v471
    %v542 = vadd.f32 %v320, %v476
    %v543 = vadd.f32 %v321, %v481
    %v544 = vadd.f32 %v322, %v486
    %v545 = vadd.f32 %v323, %v491
    %v546 = vadd.f32 %v324, %v496
    %v547 = vadd.f32 %v325, %v501
    %v548 = vadd.f32 %v326, %v506
    %v549 = vadd.f32 %v327, %v511
    %v550 = vadd.f32 %v328, %v516
    %v551 = vadd.f32 %v329, %v521
    %v552 = vadd.f32 %v330, %v526
    %v553 = vadd.f32 %v331, %v531
    %v554 = vld [vmem:[#allocation2 + $0x20] sm:$0xff]
    %v555 = vld [vmem:[#allocation2 + $0x28] sm:$0xff]
    %v556 = vld [vmem:[#allocation2 + $0x30] sm:$0xff]
    %v557 = vld [vmem:[#allocation2 + $0x38] sm:$0xff]
    %v558 = vld [vmem:[#allocation2 + $0x40] sm:$0xff]
    %v559 = vld [vmem:[#allocation2 + $0x48] sm:$0xff]
    %v560 = vld [vmem:[#allocation2 + $0x50] sm:$0xff]
    %v561 = vld [vmem:[#allocation2 + $0x58] sm:$0xff]
    %v562 = vld [vmem:[#allocation2 + $0x60] sm:$0xff]
    %v563 = vld [vmem:[#allocation2 + $0x68] sm:$0xff]
    %v564 = vld [vmem:[#allocation2 + $0x70] sm:$0xff]
    %v565 = vld [vmem:[#allocation2 + $0x78] sm:$0xff]
    %v566 = vld [vmem:[#allocation2 + $0x80] sm:$0xff]
    %v567 = vld [vmem:[#allocation2 + $0x88] sm:$0xff]
    %v568 = vld [vmem:[#allocation2 + $0x90] sm:$0xff]
    %v569 = vld [vmem:[#allocation2 + $0x98] sm:$0xff]
    %v570 = vld [vmem:[#allocation2 + $0xa0] sm:$0xff]
    %v571 = vld [vmem:[#allocation2 + $0xa8] sm:$0xff]
    %v572 = vld [vmem:[#allocation2 + $0xb0] sm:$0xff]
    %v573 = vld [vmem:[#allocation2 + $0xb8] sm:$0xff]
    %s574 = scalar_lea.vmem [#allocation8], 256
    %v575 = vld [vmem:[%s574] sm:$0xff]
    %v576 = vld [vmem:[%s574 + $0x8] sm:$0xff]
    %v577 = vld [vmem:[%s574 + $0x10] sm:$0xff]
    %v578 = vld [vmem:[%s574 + $0x18] sm:$0xff]
    %v579 = vld [vmem:[%s574 + $0x20] sm:$0xff]
    %v580 = vld [vmem:[%s574 + $0x28] sm:$0xff]
    %v581 = vld [vmem:[%s574 + $0x30] sm:$0xff]
    %v582 = vld [vmem:[%s574 + $0x38] sm:$0xff]
    %v583 = vld [vmem:[%s574 + $0x40] sm:$0xff]
    %v584 = vld [vmem:[%s574 + $0x48] sm:$0xff]
    %v585 = vld [vmem:[%s574 + $0x50] sm:$0xff]
    %v586 = vld [vmem:[%s574 + $0x58] sm:$0xff]
    %v587 = vld [vmem:[%s574 + $0x60] sm:$0xff]
    %v588 = vld [vmem:[%s574 + $0x68] sm:$0xff]
    %v589 = vld [vmem:[%s574 + $0x70] sm:$0xff]
    %v590 = vld [vmem:[%s574 + $0x78] sm:$0xff]
    %591 = vmatprep.subr.mxu0 0.0
    %592 = vmatpush1.msra.mxu0 %v575
    %593 = vmatprep.subr.mxu0 0.0
    %594 = vmatpush1.msra.mxu0 %v576
    %595 = vmatprep.subr.mxu0 0.0
    %596 = vmatpush1.msra.mxu0 %v577
    %597 = vmatprep.subr.mxu0 0.0
    %598 = vmatpush1.msra.mxu0 %v578
    %599 = vmatprep.subr.mxu0 0.0
    %600 = vmatpush1.msra.mxu0 %v579
    %601 = vmatprep.subr.mxu0 0.0
    %602 = vmatpush1.msra.mxu0 %v580
    %603 = vmatprep.subr.mxu0 0.0
    %604 = vmatpush1.msra.mxu0 %v581
    %605 = vmatprep.subr.mxu0 0.0
    %606 = vmatpush1.msra.mxu0 %v582
    %607 = vmatprep.subr.mxu0 0.0
    %608 = vmatpush1.msra.mxu0 %v583
    %609 = vmatprep.subr.mxu0 0.0
    %610 = vmatpush1.msra.mxu0 %v584
    %611 = vmatprep.subr.mxu0 0.0
    %612 = vmatpush1.msra.mxu0 %v585
    %613 = vmatprep.subr.mxu0 0.0
    %614 = vmatpush1.msra.mxu0 %v586
    %615 = vmatprep.subr.mxu0 0.0
    %616 = vmatpush1.msra.mxu0 %v587
    %617 = vmatprep.subr.mxu0 0.0
    %618 = vmatpush1.msra.mxu0 %v588
    %619 = vmatprep.subr.mxu0 0.0
    %620 = vmatpush1.msra.mxu0 %v589
    %621 = vmatprep.subr.mxu0 0.0
    %622 = vmatpush1.msra.mxu0 %v590
    %623 = vmatprep.subr.mxu0 0.0
    %624 = vmatpush1.msra.mxu0 0.0
    %625 = vmatprep.subr.mxu0 0.0
    %626 = vmatpush1.msra.mxu0 0.0
    %627 = vmatprep.subr.mxu0 0.0
    %628 = vmatpush1.msra.mxu0 0.0
    %629 = vmatprep.subr.mxu0 0.0
    %630 = vmatpush1.msra.mxu0 0.0
    %631 = vmatprep.subr.mxu0 0.0
    %632 = vmatpush1.msra.mxu0 0.0
    %633 = vmatprep.subr.mxu0 0.0
    %634 = vmatpush1.msra.mxu0 0.0
    %635 = vmatprep.subr.mxu0 0.0
    %636 = vmatpush1.msra.mxu0 0.0
    %637 = vmatprep.subr.mxu0 0.0
    %638 = vmatpush1.msra.mxu0 0.0
    %639 = vmatprep.subr.mxu0 0.0
    %640 = vmatpush1.msra.mxu0 0.0
    %641 = vmatprep.subr.mxu0 0.0
    %642 = vmatpush1.msra.mxu0 0.0
    %643 = vmatprep.subr.mxu0 0.0
    %644 = vmatpush1.msra.mxu0 0.0
    %645 = vmatprep.subr.mxu0 0.0
    %646 = vmatpush1.msra.mxu0 0.0
    %647 = vmatprep.subr.mxu0 0.0
    %648 = vmatpush1.msra.mxu0 0.0
    %649 = vmatprep.subr.mxu0 0.0
    %650 = vmatpush1.msra.mxu0 0.0
    %651 = vmatprep.subr.mxu0 0.0
    %652 = vmatpush1.msra.mxu0 0.0
    %653 = vmatprep.subr.mxu0 0.0
    %654 = vmatpush1.msra.mxu0 0.0
    %655 = vmatprep.mubr.f32.mxu0 0.0
    %656 = vmatmul.mubr.f32.gmra.mrb[0].mxu0 %v554
    %v657 = vpop.f32.mrb[0].mxu0
    %v658 = vadd.f32 0.0, %v657
    %v659 = vpop.f32.mrb[0].mxu0
    %660 = vmatprep.mubr.f32.mxu0 0.0
    %661 = vmatmul.mubr.f32.gmra.mrb[0].mxu0 %v555
    %v662 = vpop.f32.mrb[0].mxu0
    %v663 = vadd.f32 0.0, %v662
    %v664 = vpop.f32.mrb[0].mxu0
    %665 = vmatprep.mubr.f32.mxu0 0.0
    %666 = vmatmul.mubr.f32.gmra.mrb[0].mxu0 %v556
    %v667 = vpop.f32.mrb[0].mxu0
    %v668 = vadd.f32 0.0, %v667
    %v669 = vpop.f32.mrb[0].mxu0
    %670 = vmatprep.mubr.f32.mxu0 0.0
    %671 = vmatmul.mubr.f32.gmra.mrb[0].mxu0 %v557
    %v672 = vpop.f32.mrb[0].mxu0
    %v673 = vadd.f32 0.0, %v672
    %v674 = vpop.f32.mrb[0].mxu0
    %675 = vmatprep.mubr.f32.mxu0 0.0
    %676 = vmatmul.mubr.f32.gmra.mrb[0].mxu0 %v558
    %v677 = vpop.f32.mrb[0].mxu0
    %v678 = vadd.f32 0.0, %v677
    %v679 = vpop.f32.mrb[0].mxu0
    %680 = vmatprep.mubr.f32.mxu0 0.0
    %681 = vmatmul.mubr.f32.gmra.mrb[0].mxu0 %v559
    %v682 = vpop.f32.mrb[0].mxu0
    %v683 = vadd.f32 0.0, %v682
    %v684 = vpop.f32.mrb[0].mxu0
    %685 = vmatprep.mubr.f32.mxu0 0.0
    %686 = vmatmul.mubr.f32.gmra.mrb[0].mxu0 %v560
    %v687 = vpop.f32.mrb[0].mxu0
    %v688 = vadd.f32 0.0, %v687
    %v689 = vpop.f32.mrb[0].mxu0
    %690 = vmatprep.mubr.f32.mxu0 0.0
    %691 = vmatmul.mubr.f32.gmra.mrb[0].mxu0 %v561
    %v692 = vpop.f32.mrb[0].mxu0
    %v693 = vadd.f32 0.0, %v692
    %v694 = vpop.f32.mrb[0].mxu0
    %695 = vmatprep.mubr.f32.mxu0 0.0
    %696 = vmatmul.mubr.f32.gmra.mrb[0].mxu0 %v562
    %v697 = vpop.f32.mrb[0].mxu0
    %v698 = vadd.f32 0.0, %v697
    %v699 = vpop.f32.mrb[0].mxu0
    %700 = vmatprep.mubr.f32.mxu0 0.0
    %701 = vmatmul.mubr.f32.gmra.mrb[0].mxu0 %v563
    %v702 = vpop.f32.mrb[0].mxu0
    %v703 = vadd.f32 0.0, %v702
    %v704 = vpop.f32.mrb[0].mxu0
    %705 = vmatprep.mubr.f32.mxu0 0.0
    %706 = vmatmul.mubr.f32.gmra.mrb[0].mxu0 %v564
    %v707 = vpop.f32.mrb[0].mxu0
    %v708 = vadd.f32 0.0, %v707
    %v709 = vpop.f32.mrb[0].mxu0
    %710 = vmatprep.mubr.f32.mxu0 0.0
    %711 = vmatmul.mubr.f32.gmra.mrb[0].mxu0 %v565
    %v712 = vpop.f32.mrb[0].mxu0
    %v713 = vadd.f32 0.0, %v712
    %v714 = vpop.f32.mrb[0].mxu0
    %715 = vmatprep.mubr.f32.mxu0 0.0
    %716 = vmatmul.mubr.f32.gmra.mrb[0].mxu0 %v566
    %v717 = vpop.f32.mrb[0].mxu0
    %v718 = vadd.f32 0.0, %v717
    %v719 = vpop.f32.mrb[0].mxu0
    %720 = vmatprep.mubr.f32.mxu0 0.0
    %721 = vmatmul.mubr.f32.gmra.mrb[0].mxu0 %v567
    %v722 = vpop.f32.mrb[0].mxu0
    %v723 = vadd.f32 0.0, %v722
    %v724 = vpop.f32.mrb[0].mxu0
    %725 = vmatprep.mubr.f32.mxu0 0.0
    %726 = vmatmul.mubr.f32.gmra.mrb[0].mxu0 %v568
    %v727 = vpop.f32.mrb[0].mxu0
    %v728 = vadd.f32 0.0, %v727
    %v729 = vpop.f32.mrb[0].mxu0
    %730 = vmatprep.mubr.f32.mxu0 0.0
    %731 = vmatmul.mubr.f32.gmra.mrb[0].mxu0 %v569
    %v732 = vpop.f32.mrb[0].mxu0
    %v733 = vadd.f32 0.0, %v732
    %v734 = vpop.f32.mrb[0].mxu0
    %735 = vmatprep.mubr.f32.mxu0 0.0
    %736 = vmatmul.mubr.f32.gmra.mrb[0].mxu0 %v570
    %v737 = vpop.f32.mrb[0].mxu0
    %v738 = vadd.f32 0.0, %v737
    %v739 = vpop.f32.mrb[0].mxu0
    %740 = vmatprep.mubr.f32.mxu0 0.0
    %741 = vmatmul.mubr.f32.gmra.mrb[0].mxu0 %v571
    %v742 = vpop.f32.mrb[0].mxu0
    %v743 = vadd.f32 0.0, %v742
    %v744 = vpop.f32.mrb[0].mxu0
    %745 = vmatprep.mubr.f32.mxu0 0.0
    %746 = vmatmul.mubr.f32.gmra.mrb[0].mxu0 %v572
    %v747 = vpop.f32.mrb[0].mxu0
    %v748 = vadd.f32 0.0, %v747
    %v749 = vpop.f32.mrb[0].mxu0
    %750 = vmatprep.mubr.f32.mxu0 0.0
    %751 = vmatmul.mubr.f32.gmra.mrb[0].mxu0 %v573
    %v752 = vpop.f32.mrb[0].mxu0
    %v753 = vadd.f32 0.0, %v752
    %v754 = vpop.f32.mrb[0].mxu0
    %755 = vdwg.mxu0
    %v756 = vadd.f32 %v534, %v658
    %v757 = vadd.f32 %v535, %v663
    %v758 = vadd.f32 %v536, %v668
    %v759 = vadd.f32 %v537, %v673
    %v760 = vadd.f32 %v538, %v678
    %v761 = vadd.f32 %v539, %v683
    %v762 = vadd.f32 %v540, %v688
    %v763 = vadd.f32 %v541, %v693
    %v764 = vadd.f32 %v542, %v698
    %v765 = vadd.f32 %v543, %v703
    %v766 = vadd.f32 %v544, %v708
    %v767 = vadd.f32 %v545, %v713
    %v768 = vadd.f32 %v546, %v718
    %v769 = vadd.f32 %v547, %v723
    %v770 = vadd.f32 %v548, %v728
    %v771 = vadd.f32 %v549, %v733
    %v772 = vadd.f32 %v550, %v738
    %v773 = vadd.f32 %v551, %v743
    %v774 = vadd.f32 %v552, %v748
    %v775 = vadd.f32 %v553, %v753
    %v776 = vld [vmem:[#allocation2 + $0x30] sm:$0xff]
    %v777 = vld [vmem:[#allocation2 + $0x38] sm:$0xff]
    %v778 = vld [vmem:[#allocation2 + $0x40] sm:$0xff]
    %v779 = vld [vmem:[#allocation2 + $0x48] sm:$0xff]
    %v780 = vld [vmem:[#allocation2 + $0x50] sm:$0xff]
    %v781 = vld [vmem:[#allocation2 + $0x58] sm:$0xff]
    %v782 = vld [vmem:[#allocation2 + $0x60] sm:$0xff]
    %v783 = vld [vmem:[#allocation2 + $0x68] sm:$0xff]
    %v784 = vld [vmem:[#allocation2 + $0x70] sm:$0xff]
    %v785 = vld [vmem:[#allocation2 + $0x78] sm:$0xff]
    %v786 = vld [vmem:[#allocation2 + $0x80] sm:$0xff]
    %v787 = vld [vmem:[#allocation2 + $0x88] sm:$0xff]
    %v788 = vld [vmem:[#allocation2 + $0x90] sm:$0xff]
    %v789 = vld [vmem:[#allocation2 + $0x98] sm:$0xff]
    %v790 = vld [vmem:[#allocation2 + $0xa0] sm:$0xff]
    %v791 = vld [vmem:[#allocation2 + $0xa8] sm:$0xff]
    %v792 = vld [vmem:[#allocation2 + $0xb0] sm:$0xff]
    %v793 = vld [vmem:[#allocation2 + $0xb8] sm:$0xff]
    %v794 = vld [vmem:[#allocation2 + $0xc0] sm:$0xff]
    %v795 = vld [vmem:[#allocation2 + $0xc8] sm:$0xff]
    %s796 = scalar_lea.vmem [#allocation8], 384
    %v797 = vld [vmem:[%s796] sm:$0xff]
    %v798 = vld [vmem:[%s796 + $0x8] sm:$0xff]
    %v799 = vld [vmem:[%s796 + $0x10] sm:$0xff]
    %v800 = vld [vmem:[%s796 + $0x18] sm:$0xff]
    %v801 = vld [vmem:[%s796 + $0x20] sm:$0xff]
    %v802 = vld [vmem:[%s796 + $0x28] sm:$0xff]
    %v803 = vld [vmem:[%s796 + $0x30] sm:$0xff]
    %v804 = vld [vmem:[%s796 + $0x38] sm:$0xff]
    %v805 = vld [vmem:[%s796 + $0x40] sm:$0xff]
    %v806 = vld [vmem:[%s796 + $0x48] sm:$0xff]
    %v807 = vld [vmem:[%s796 + $0x50] sm:$0xff]
    %v808 = vld [vmem:[%s796 + $0x58] sm:$0xff]
    %v809 = vld [vmem:[%s796 + $0x60] sm:$0xff]
    %v810 = vld [vmem:[%s796 + $0x68] sm:$0xff]
    %v811 = vld [vmem:[%s796 + $0x70] sm:$0xff]
    %v812 = vld [vmem:[%s796 + $0x78] sm:$0xff]
    %813 = vmatprep.subr.mxu0 0.0
    %814 = vmatpush1.msra.mxu0 %v797
    %815 = vmatprep.subr.mxu0 0.0
    %816 = vmatpush1.msra.mxu0 %v798
    %817 = vmatprep.subr.mxu0 0.0
    %818 = vmatpush1.msra.mxu0 %v799
    %819 = vmatprep.subr.mxu0 0.0
    %820 = vmatpush1.msra.mxu0 %v800
    %821 = vmatprep.subr.mxu0 0.0
    %822 = vmatpush1.msra.mxu0 %v801
    %823 = vmatprep.subr.mxu0 0.0
    %824 = vmatpush1.msra.mxu0 %v802
    %825 = vmatprep.subr.mxu0 0.0
    %826 = vmatpush1.msra.mxu0 %v803
    %827 = vmatprep.subr.mxu0 0.0
    %828 = vmatpush1.msra.mxu0 %v804
    %829 = vmatprep.subr.mxu0 0.0
    %830 = vmatpush1.msra.mxu0 %v805
    %831 = vmatprep.subr.mxu0 0.0
    %832 = vmatpush1.msra.mxu0 %v806
    %833 = vmatprep.subr.mxu0 0.0
    %834 = vmatpush1.msra.mxu0 %v807
    %835 = vmatprep.subr.mxu0 0.0
    %836 = vmatpush1.msra.mxu0 %v808
    %837 = vmatprep.subr.mxu0 0.0
    %838 = vmatpush1.msra.mxu0 %v809
    %839 = vmatprep.subr.mxu0 0.0
    %840 = vmatpush1.msra.mxu0 %v810
    %841 = vmatprep.subr.mxu0 0.0
    %842 = vmatpush1.msra.mxu0 %v811
    %843 = vmatprep.subr.mxu0 0.0
    %844 = vmatpush1.msra.mxu0 %v812
    %845 = vmatprep.subr.mxu0 0.0
    %846 = vmatpush1.msra.mxu0 0.0
    %847 = vmatprep.subr.mxu0 0.0
    %848 = vmatpush1.msra.mxu0 0.0
    %849 = vmatprep.subr.mxu0 0.0
    %850 = vmatpush1.msra.mxu0 0.0
    %851 = vmatprep.subr.mxu0 0.0
    %852 = vmatpush1.msra.mxu0 0.0
    %853 = vmatprep.subr.mxu0 0.0
    %854 = vmatpush1.msra.mxu0 0.0
    %855 = vmatprep.subr.mxu0 0.0
    %856 = vmatpush1.msra.mxu0 0.0
    %857 = vmatprep.subr.mxu0 0.0
    %858 = vmatpush1.msra.mxu0 0.0
    %859 = vmatprep.subr.mxu0 0.0
    %860 = vmatpush1.msra.mxu0 0.0
    %861 = vmatprep.subr.mxu0 0.0
    %862 = vmatpush1.msra.mxu0 0.0
    %863 = vmatprep.subr.mxu0 0.0
    %864 = vmatpush1.msra.mxu0 0.0
    %865 = vmatprep.subr.mxu0 0.0
    %866 = vmatpush1.msra.mxu0 0.0
    %867 = vmatprep.subr.mxu0 0.0
    %868 = vmatpush1.msra.mxu0 0.0
    %869 = vmatprep.subr.mxu0 0.0
    %870 = vmatpush1.msra.mxu0 0.0
    %871 = vmatprep.subr.mxu0 0.0
    %872 = vmatpush1.msra.mxu0 0.0
    %873 = vmatprep.subr.mxu0 0.0
    %874 = vmatpush1.msra.mxu0 0.0
    %875 = vmatprep.subr.mxu0 0.0
    %876 = vmatpush1.msra.mxu0 0.0
    %877 = vmatprep.mubr.f32.mxu0 0.0
    %878 = vmatmul.mubr.f32.gmra.mrb[0].mxu0 %v776
    %v879 = vpop.f32.mrb[0].mxu0
    %v880 = vadd.f32 0.0, %v879
    %v881 = vpop.f32.mrb[0].mxu0
    %882 = vmatprep.mubr.f32.mxu0 0.0
    %883 = vmatmul.mubr.f32.gmra.mrb[0].mxu0 %v777
    %v884 = vpop.f32.mrb[0].mxu0
    %v885 = vadd.f32 0.0, %v884
    %v886 = vpop.f32.mrb[0].mxu0
    %887 = vmatprep.mubr.f32.mxu0 0.0
    %888 = vmatmul.mubr.f32.gmra.mrb[0].mxu0 %v778
    %v889 = vpop.f32.mrb[0].mxu0
    %v890 = vadd.f32 0.0, %v889
    %v891 = vpop.f32.mrb[0].mxu0
    %892 = vmatprep.mubr.f32.mxu0 0.0
    %893 = vmatmul.mubr.f32.gmra.mrb[0].mxu0 %v779
    %v894 = vpop.f32.mrb[0].mxu0
    %v895 = vadd.f32 0.0, %v894
    %v896 = vpop.f32.mrb[0].mxu0
    %897 = vmatprep.mubr.f32.mxu0 0.0
    %898 = vmatmul.mubr.f32.gmra.mrb[0].mxu0 %v780
    %v899 = vpop.f32.mrb[0].mxu0
    %v900 = vadd.f32 0.0, %v899
    %v901 = vpop.f32.mrb[0].mxu0
    %902 = vmatprep.mubr.f32.mxu0 0.0
    %903 = vmatmul.mubr.f32.gmra.mrb[0].mxu0 %v781
    %v904 = vpop.f32.mrb[0].mxu0
    %v905 = vadd.f32 0.0, %v904
    %v906 = vpop.f32.mrb[0].mxu0
    %907 = vmatprep.mubr.f32.mxu0 0.0
    %908 = vmatmul.mubr.f32.gmra.mrb[0].mxu0 %v782
    %v909 = vpop.f32.mrb[0].mxu0
    %v910 = vadd.f32 0.0, %v909
    %v911 = vpop.f32.mrb[0].mxu0
    %912 = vmatprep.mubr.f32.mxu0 0.0
    %913 = vmatmul.mubr.f32.gmra.mrb[0].mxu0 %v783
    %v914 = vpop.f32.mrb[0].mxu0
    %v915 = vadd.f32 0.0, %v914
    %v916 = vpop.f32.mrb[0].mxu0
    %917 = vmatprep.mubr.f32.mxu0 0.0
    %918 = vmatmul.mubr.f32.gmra.mrb[0].mxu0 %v784
    %v919 = vpop.f32.mrb[0].mxu0
    %v920 = vadd.f32 0.0, %v919
    %v921 = vpop.f32.mrb[0].mxu0
    %922 = vmatprep.mubr.f32.mxu0 0.0
    %923 = vmatmul.mubr.f32.gmra.mrb[0].mxu0 %v785
    %v924 = vpop.f32.mrb[0].mxu0
    %v925 = vadd.f32 0.0, %v924
    %v926 = vpop.f32.mrb[0].mxu0
    %927 = vmatprep.mubr.f32.mxu0 0.0
    %928 = vmatmul.mubr.f32.gmra.mrb[0].mxu0 %v786
    %v929 = vpop.f32.mrb[0].mxu0
    %v930 = vadd.f32 0.0, %v929
    %v931 = vpop.f32.mrb[0].mxu0
    %932 = vmatprep.mubr.f32.mxu0 0.0
    %933 = vmatmul.mubr.f32.gmra.mrb[0].mxu0 %v787
    %v934 = vpop.f32.mrb[0].mxu0
    %v935 = vadd.f32 0.0, %v934
    %v936 = vpop.f32.mrb[0].mxu0
    %937 = vmatprep.mubr.f32.mxu0 0.0
    %938 = vmatmul.mubr.f32.gmra.mrb[0].mxu0 %v788
    %v939 = vpop.f32.mrb[0].mxu0
    %v940 = vadd.f32 0.0, %v939
    %v941 = vpop.f32.mrb[0].mxu0
    %942 = vmatprep.mubr.f32.mxu0 0.0
    %943 = vmatmul.mubr.f32.gmra.mrb[0].mxu0 %v789
    %v944 = vpop.f32.mrb[0].mxu0
    %v945 = vadd.f32 0.0, %v944
    %v946 = vpop.f32.mrb[0].mxu0
    %947 = vmatprep.mubr.f32.mxu0 0.0
    %948 = vmatmul.mubr.f32.gmra.mrb[0].mxu0 %v790
    %v949 = vpop.f32.mrb[0].mxu0
    %v950 = vadd.f32 0.0, %v949
    %v951 = vpop.f32.mrb[0].mxu0
    %952 = vmatprep.mubr.f32.mxu0 0.0
    %953 = vmatmul.mubr.f32.gmra.mrb[0].mxu0 %v791
    %v954 = vpop.f32.mrb[0].mxu0
    %v955 = vadd.f32 0.0, %v954
    %v956 = vpop.f32.mrb[0].mxu0
    %957 = vmatprep.mubr.f32.mxu0 0.0
    %958 = vmatmul.mubr.f32.gmra.mrb[0].mxu0 %v792
    %v959 = vpop.f32.mrb[0].mxu0
    %v960 = vadd.f32 0.0, %v959
    %v961 = vpop.f32.mrb[0].mxu0
    %962 = vmatprep.mubr.f32.mxu0 0.0
    %963 = vmatmul.mubr.f32.gmra.mrb[0].mxu0 %v793
    %v964 = vpop.f32.mrb[0].mxu0
    %v965 = vadd.f32 0.0, %v964
    %v966 = vpop.f32.mrb[0].mxu0
    %967 = vmatprep.mubr.f32.mxu0 0.0
    %968 = vmatmul.mubr.f32.gmra.mrb[0].mxu0 %v794
    %v969 = vpop.f32.mrb[0].mxu0
    %v970 = vadd.f32 0.0, %v969
    %v971 = vpop.f32.mrb[0].mxu0
    %972 = vmatprep.mubr.f32.mxu0 0.0
    %973 = vmatmul.mubr.f32.gmra.mrb[0].mxu0 %v795
    %v974 = vpop.f32.mrb[0].mxu0
    %v975 = vadd.f32 0.0, %v974
    %v976 = vpop.f32.mrb[0].mxu0
    %977 = vdwg.mxu0
    %v978 = vadd.f32 %v756, %v880
    %v979 = vadd.f32 %v757, %v885
    %v980 = vadd.f32 %v758, %v890
    %v981 = vadd.f32 %v759, %v895
    %v982 = vadd.f32 %v760, %v900
    %v983 = vadd.f32 %v761, %v905
    %v984 = vadd.f32 %v762, %v910
    %v985 = vadd.f32 %v763, %v915
    %v986 = vadd.f32 %v764, %v920
    %v987 = vadd.f32 %v765, %v925
    %v988 = vadd.f32 %v766, %v930
    %v989 = vadd.f32 %v767, %v935
    %v990 = vadd.f32 %v768, %v940
    %v991 = vadd.f32 %v769, %v945
    %v992 = vadd.f32 %v770, %v950
    %v993 = vadd.f32 %v771, %v955
    %v994 = vadd.f32 %v772, %v960
    %v995 = vadd.f32 %v773, %v965
    %v996 = vadd.f32 %v774, %v970
    %v997 = vadd.f32 %v775, %v975
    %v998 = vmax.f32 %v978, 0.0
    %v999 = vmax.f32 %v979, 0.0
    %v1000 = vmax.f32 %v980, 0.0
    %v1001 = vmax.f32 %v981, 0.0
    %v1002 = vmax.f32 %v982, 0.0
    %v1003 = vmax.f32 %v983, 0.0
    %v1004 = vmax.f32 %v984, 0.0
    %v1005 = vmax.f32 %v985, 0.0
    %v1006 = vmax.f32 %v986, 0.0
    %v1007 = vmax.f32 %v987, 0.0
    %v1008 = vmax.f32 %v988, 0.0
    %v1009 = vmax.f32 %v989, 0.0
    %v1010 = vmax.f32 %v990, 0.0
    %v1011 = vmax.f32 %v991, 0.0
    %v1012 = vmax.f32 %v992, 0.0
    %v1013 = vmax.f32 %v993, 0.0
    %v1014 = vmax.f32 %v994, 0.0
    %v1015 = vmax.f32 %v995, 0.0
    %v1016 = vmax.f32 %v996, 0.0
    %v1017 = vmax.f32 %v997, 0.0
    %1018 = vst [vmem:[#allocation3] sm:$0xff] %v998
    %1019 = vst [vmem:[#allocation3 + $0x8] sm:$0xff] %v999
    %1020 = vst [vmem:[#allocation3 + $0x10] sm:$0xff] %v1000
    %1021 = vst [vmem:[#allocation3 + $0x18] sm:$0xff] %v1001
    %1022 = vst [vmem:[#allocation3 + $0x20] sm:$0xff] %v1002
    %1023 = vst [vmem:[#allocation3 + $0x28] sm:$0xff] %v1003
    %1024 = vst [vmem:[#allocation3 + $0x30] sm:$0xff] %v1004
    %1025 = vst [vmem:[#allocation3 + $0x38] sm:$0xff] %v1005
    %1026 = vst [vmem:[#allocation3 + $0x40] sm:$0xff] %v1006
    %1027 = vst [vmem:[#allocation3 + $0x48] sm:$0xff] %v1007
    %1028 = vst [vmem:[#allocation3 + $0x50] sm:$0xff] %v1008
    %1029 = vst [vmem:[#allocation3 + $0x58] sm:$0xff] %v1009
    %1030 = vst [vmem:[#allocation3 + $0x60] sm:$0xff] %v1010
    %1031 = vst [vmem:[#allocation3 + $0x68] sm:$0xff] %v1011
    %1032 = vst [vmem:[#allocation3 + $0x70] sm:$0xff] %v1012
    %1033 = vst [vmem:[#allocation3 + $0x78] sm:$0xff] %v1013
    %1034 = vst [vmem:[#allocation3 + $0x80] sm:$0xff] %v1014
    %1035 = vst [vmem:[#allocation3 + $0x88] sm:$0xff] %v1015
    %1036 = vst [vmem:[#allocation3 + $0x90] sm:$0xff] %v1016
    %1037 = vst [vmem:[#allocation3 + $0x98] sm:$0xff] %v1017
    %s1038 = scalar_lea.vmem %s2, 1
    %v1039 = vld [vmem:[%s1038] sm:$0x1]
    %v1041 = vlaneseq
    %v1042 = vshrl.u32 %v1041, 7
    %v1043 = vsub.s32 0, %v1042
    %v1044 = vrot.slane %v1039, %v1043
    %v1046 = vld [vmem:[#allocation3] sm:$0xff]
    %v1047 = vld [vmem:[#allocation3 + $0x8] sm:$0xff]
    %v1048 = vld [vmem:[#allocation3 + $0x10] sm:$0xff]
    %v1049 = vld [vmem:[#allocation3 + $0x18] sm:$0xff]
    %v1050 = vld [vmem:[#allocation3 + $0x20] sm:$0xff]
    %v1051 = vld [vmem:[#allocation3 + $0x28] sm:$0xff]
    %v1052 = vld [vmem:[#allocation3 + $0x30] sm:$0xff]
    %v1053 = vld [vmem:[#allocation3 + $0x38] sm:$0xff]
    %v1054 = vld [vmem:[#allocation3 + $0x40] sm:$0xff]
    %v1055 = vld [vmem:[#allocation3 + $0x48] sm:$0xff]
    %v1056 = vld [vmem:[#allocation3 + $0x50] sm:$0xff]
    %v1057 = vld [vmem:[#allocation3 + $0x58] sm:$0xff]
    %v1058 = vld [vmem:[#allocation3 + $0x60] sm:$0xff]
    %v1059 = vld [vmem:[#allocation3 + $0x68] sm:$0xff]
    %s1060 = scalar_lea.vmem [#allocation8], 512
    %v1061 = vld [vmem:[%s1060] sm:$0xff]
    %v1062 = vld [vmem:[%s1060 + $0x8] sm:$0xff]
    %v1063 = vld [vmem:[%s1060 + $0x10] sm:$0xff]
    %v1064 = vld [vmem:[%s1060 + $0x18] sm:$0xff]
    %v1065 = vld [vmem:[%s1060 + $0x20] sm:$0xff]
    %v1066 = vld [vmem:[%s1060 + $0x28] sm:$0xff]
    %v1067 = vld [vmem:[%s1060 + $0x30] sm:$0xff]
    %v1068 = vld [vmem:[%s1060 + $0x38] sm:$0xff]
    %v1069 = vld [vmem:[%s1060 + $0x40] sm:$0xff]
    %v1070 = vld [vmem:[%s1060 + $0x48] sm:$0xff]
    %v1071 = vld [vmem:[%s1060 + $0x50] sm:$0xff]
    %v1072 = vld [vmem:[%s1060 + $0x58] sm:$0xff]
    %v1073 = vld [vmem:[%s1060 + $0x60] sm:$0xff]
    %v1074 = vld [vmem:[%s1060 + $0x68] sm:$0xff]
    %v1075 = vld [vmem:[%s1060 + $0x70] sm:$0xff]
    %v1076 = vld [vmem:[%s1060 + $0x78] sm:$0xff]
    %1077 = vmatprep.subr.mxu0 0.0
    %1078 = vmatpush1.msra.mxu0 %v1061
    %1079 = vmatprep.subr.mxu0 0.0
    %1080 = vmatpush1.msra.mxu0 %v1062
    %1081 = vmatprep.subr.mxu0 0.0
    %1082 = vmatpush1.msra.mxu0 %v1063
    %1083 = vmatprep.subr.mxu0 0.0
    %1084 = vmatpush1.msra.mxu0 %v1064
    %1085 = vmatprep.subr.mxu0 0.0
    %1086 = vmatpush1.msra.mxu0 %v1065
    %1087 = vmatprep.subr.mxu0 0.0
    %1088 = vmatpush1.msra.mxu0 %v1066
    %1089 = vmatprep.subr.mxu0 0.0
    %1090 = vmatpush1.msra.mxu0 %v1067
    %1091 = vmatprep.subr.mxu0 0.0
    %1092 = vmatpush1.msra.mxu0 %v1068
    %1093 = vmatprep.subr.mxu0 0.0
    %1094 = vmatpush1.msra.mxu0 %v1069
    %1095 = vmatprep.subr.mxu0 0.0
    %1096 = vmatpush1.msra.mxu0 %v1070
    %1097 = vmatprep.subr.mxu0 0.0
    %1098 = vmatpush1.msra.mxu0 %v1071
    %1099 = vmatprep.subr.mxu0 0.0
    %1100 = vmatpush1.msra.mxu0 %v1072
    %1101 = vmatprep.subr.mxu0 0.0
    %1102 = vmatpush1.msra.mxu0 %v1073
    %1103 = vmatprep.subr.mxu0 0.0
    %1104 = vmatpush1.msra.mxu0 %v1074
    %1105 = vmatprep.subr.mxu0 0.0
    %1106 = vmatpush1.msra.mxu0 %v1075
    %1107 = vmatprep.subr.mxu0 0.0
    %1108 = vmatpush1.msra.mxu0 %v1076
    %1109 = vmatprep.subr.mxu0 0.0
    %1110 = vmatpush1.msra.mxu0 0.0
    %1111 = vmatprep.subr.mxu0 0.0
    %1112 = vmatpush1.msra.mxu0 0.0
    %1113 = vmatprep.subr.mxu0 0.0
    %1114 = vmatpush1.msra.mxu0 0.0
    %1115 = vmatprep.subr.mxu0 0.0
    %1116 = vmatpush1.msra.mxu0 0.0
    %1117 = vmatprep.subr.mxu0 0.0
    %1118 = vmatpush1.msra.mxu0 0.0
    %1119 = vmatprep.subr.mxu0 0.0
    %1120 = vmatpush1.msra.mxu0 0.0
    %1121 = vmatprep.subr.mxu0 0.0
    %1122 = vmatpush1.msra.mxu0 0.0
    %1123 = vmatprep.subr.mxu0 0.0
    %1124 = vmatpush1.msra.mxu0 0.0
    %1125 = vmatprep.subr.mxu0 0.0
    %1126 = vmatpush1.msra.mxu0 0.0
    %1127 = vmatprep.subr.mxu0 0.0
    %1128 = vmatpush1.msra.mxu0 0.0
    %1129 = vmatprep.subr.mxu0 0.0
    %1130 = vmatpush1.msra.mxu0 0.0
    %1131 = vmatprep.subr.mxu0 0.0
    %1132 = vmatpush1.msra.mxu0 0.0
    %1133 = vmatprep.subr.mxu0 0.0
    %1134 = vmatpush1.msra.mxu0 0.0
    %1135 = vmatprep.subr.mxu0 0.0
    %1136 = vmatpush1.msra.mxu0 0.0
    %1137 = vmatprep.subr.mxu0 0.0
    %1138 = vmatpush1.msra.mxu0 0.0
    %1139 = vmatprep.subr.mxu0 0.0
    %1140 = vmatpush1.msra.mxu0 0.0
    %1141 = vmatprep.mubr.f32.mxu0 0.0
    %1142 = vmatmul.mubr.f32.gmra.mrb[0].mxu0 %v1046
    %v1143 = vpop.f32.mrb[0].mxu0
    %v1144 = vadd.f32 0.0, %v1143
    %v1145 = vpop.f32.mrb[0].mxu0
    %1146 = vmatprep.mubr.f32.mxu0 0.0
    %1147 = vmatmul.mubr.f32.gmra.mrb[0].mxu0 %v1047
    %v1148 = vpop.f32.mrb[0].mxu0
    %v1149 = vadd.f32 0.0, %v1148
    %v1150 = vpop.f32.mrb[0].mxu0
    %1151 = vmatprep.mubr.f32.mxu0 0.0
    %1152 = vmatmul.mubr.f32.gmra.mrb[0].mxu0 %v1048
    %v1153 = vpop.f32.mrb[0].mxu0
    %v1154 = vadd.f32 0.0, %v1153
    %v1155 = vpop.f32.mrb[0].mxu0
    %1156 = vmatprep.mubr.f32.mxu0 0.0
    %1157 = vmatmul.mubr.f32.gmra.mrb[0].mxu0 %v1049
    %v1158 = vpop.f32.mrb[0].mxu0
    %v1159 = vadd.f32 0.0, %v1158
    %v1160 = vpop.f32.mrb[0].mxu0
    %1161 = vmatprep.mubr.f32.mxu0 0.0
    %1162 = vmatmul.mubr.f32.gmra.mrb[0].mxu0 %v1050
    %v1163 = vpop.f32.mrb[0].mxu0
    %v1164 = vadd.f32 0.0, %v1163
    %v1165 = vpop.f32.mrb[0].mxu0
    %1166 = vmatprep.mubr.f32.mxu0 0.0
    %1167 = vmatmul.mubr.f32.gmra.mrb[0].mxu0 %v1051
    %v1168 = vpop.f32.mrb[0].mxu0
    %v1169 = vadd.f32 0.0, %v1168
    %v1170 = vpop.f32.mrb[0].mxu0
    %1171 = vmatprep.mubr.f32.mxu0 0.0
    %1172 = vmatmul.mubr.f32.gmra.mrb[0].mxu0 %v1052
    %v1173 = vpop.f32.mrb[0].mxu0
    %v1174 = vadd.f32 0.0, %v1173
    %v1175 = vpop.f32.mrb[0].mxu0
    %1176 = vmatprep.mubr.f32.mxu0 0.0
    %1177 = vmatmul.mubr.f32.gmra.mrb[0].mxu0 %v1053
    %v1178 = vpop.f32.mrb[0].mxu0
    %v1179 = vadd.f32 0.0, %v1178
    %v1180 = vpop.f32.mrb[0].mxu0
    %1181 = vmatprep.mubr.f32.mxu0 0.0
    %1182 = vmatmul.mubr.f32.gmra.mrb[0].mxu0 %v1054
    %v1183 = vpop.f32.mrb[0].mxu0
    %v1184 = vadd.f32 0.0, %v1183
    %v1185 = vpop.f32.mrb[0].mxu0
    %1186 = vmatprep.mubr.f32.mxu0 0.0
    %1187 = vmatmul.mubr.f32.gmra.mrb[0].mxu0 %v1055
    %v1188 = vpop.f32.mrb[0].mxu0
    %v1189 = vadd.f32 0.0, %v1188
    %v1190 = vpop.f32.mrb[0].mxu0
    %1191 = vmatprep.mubr.f32.mxu0 0.0
    %1192 = vmatmul.mubr.f32.gmra.mrb[0].mxu0 %v1056
    %v1193 = vpop.f32.mrb[0].mxu0
    %v1194 = vadd.f32 0.0, %v1193
    %v1195 = vpop.f32.mrb[0].mxu0
    %1196 = vmatprep.mubr.f32.mxu0 0.0
    %1197 = vmatmul.mubr.f32.gmra.mrb[0].mxu0 %v1057
    %v1198 = vpop.f32.mrb[0].mxu0
    %v1199 = vadd.f32 0.0, %v1198
    %v1200 = vpop.f32.mrb[0].mxu0
    %1201 = vmatprep.mubr.f32.mxu0 0.0
    %1202 = vmatmul.mubr.f32.gmra.mrb[0].mxu0 %v1058
    %v1203 = vpop.f32.mrb[0].mxu0
    %v1204 = vadd.f32 0.0, %v1203
    %v1205 = vpop.f32.mrb[0].mxu0
    %1206 = vmatprep.mubr.f32.mxu0 0.0
    %1207 = vmatmul.mubr.f32.gmra.mrb[0].mxu0 %v1059
    %v1208 = vpop.f32.mrb[0].mxu0
    %v1209 = vadd.f32 0.0, %v1208
    %v1210 = vpop.f32.mrb[0].mxu0
    %1211 = vdwg.mxu0
    %v1212 = vadd.f32 %v1044, %v1144
    %v1213 = vadd.f32 %v1044, %v1149
    %v1214 = vadd.f32 %v1044, %v1154
    %v1215 = vadd.f32 %v1044, %v1159
    %v1216 = vadd.f32 %v1044, %v1164
    %v1217 = vadd.f32 %v1044, %v1169
    %v1218 = vadd.f32 %v1044, %v1174
    %v1219 = vadd.f32 %v1044, %v1179
    %v1220 = vadd.f32 %v1044, %v1184
    %v1221 = vadd.f32 %v1044, %v1189
    %v1222 = vadd.f32 %v1044, %v1194
    %v1223 = vadd.f32 %v1044, %v1199
    %v1224 = vadd.f32 %v1044, %v1204
    %v1225 = vadd.f32 %v1044, %v1209
    %v1226 = vld [vmem:[#allocation3 + $0x10] sm:$0xff]
    %v1227 = vld [vmem:[#allocation3 + $0x18] sm:$0xff]
    %v1228 = vld [vmem:[#allocation3 + $0x20] sm:$0xff]
    %v1229 = vld [vmem:[#allocation3 + $0x28] sm:$0xff]
    %v1230 = vld [vmem:[#allocation3 + $0x30] sm:$0xff]
    %v1231 = vld [vmem:[#allocation3 + $0x38] sm:$0xff]
    %v1232 = vld [vmem:[#allocation3 + $0x40] sm:$0xff]
    %v1233 = vld [vmem:[#allocation3 + $0x48] sm:$0xff]
    %v1234 = vld [vmem:[#allocation3 + $0x50] sm:$0xff]
    %v1235 = vld [vmem:[#allocation3 + $0x58] sm:$0xff]
    %v1236 = vld [vmem:[#allocation3 + $0x60] sm:$0xff]
    %v1237 = vld [vmem:[#allocation3 + $0x68] sm:$0xff]
    %v1238 = vld [vmem:[#allocation3 + $0x70] sm:$0xff]
    %v1239 = vld [vmem:[#allocation3 + $0x78] sm:$0xff]
    %s1240 = scalar_lea.vmem [#allocation8], 640
    %v1241 = vld [vmem:[%s1240] sm:$0xff]
    %v1242 = vld [vmem:[%s1240 + $0x8] sm:$0xff]
    %v1243 = vld [vmem:[%s1240 + $0x10] sm:$0xff]
    %v1244 = vld [vmem:[%s1240 + $0x18] sm:$0xff]
    %v1245 = vld [vmem:[%s1240 + $0x20] sm:$0xff]
    %v1246 = vld [vmem:[%s1240 + $0x28] sm:$0xff]
    %v1247 = vld [vmem:[%s1240 + $0x30] sm:$0xff]
    %v1248 = vld [vmem:[%s1240 + $0x38] sm:$0xff]
    %v1249 = vld [vmem:[%s1240 + $0x40] sm:$0xff]
    %v1250 = vld [vmem:[%s1240 + $0x48] sm:$0xff]
    %v1251 = vld [vmem:[%s1240 + $0x50] sm:$0xff]
    %v1252 = vld [vmem:[%s1240 + $0x58] sm:$0xff]
    %v1253 = vld [vmem:[%s1240 + $0x60] sm:$0xff]
    %v1254 = vld [vmem:[%s1240 + $0x68] sm:$0xff]
    %v1255 = vld [vmem:[%s1240 + $0x70] sm:$0xff]
    %v1256 = vld [vmem:[%s1240 + $0x78] sm:$0xff]
    %1257 = vmatprep.subr.mxu0 0.0
    %1258 = vmatpush1.msra.mxu0 %v1241
    %1259 = vmatprep.subr.mxu0 0.0
    %1260 = vmatpush1.msra.mxu0 %v1242
    %1261 = vmatprep.subr.mxu0 0.0
    %1262 = vmatpush1.msra.mxu0 %v1243
    %1263 = vmatprep.subr.mxu0 0.0
    %1264 = vmatpush1.msra.mxu0 %v1244
    %1265 = vmatprep.subr.mxu0 0.0
    %1266 = vmatpush1.msra.mxu0 %v1245
    %1267 = vmatprep.subr.mxu0 0.0
    %1268 = vmatpush1.msra.mxu0 %v1246
    %1269 = vmatprep.subr.mxu0 0.0
    %1270 = vmatpush1.msra.mxu0 %v1247
    %1271 = vmatprep.subr.mxu0 0.0
    %1272 = vmatpush1.msra.mxu0 %v1248
    %1273 = vmatprep.subr.mxu0 0.0
    %1274 = vmatpush1.msra.mxu0 %v1249
    %1275 = vmatprep.subr.mxu0 0.0
    %1276 = vmatpush1.msra.mxu0 %v1250
    %1277 = vmatprep.subr.mxu0 0.0
    %1278 = vmatpush1.msra.mxu0 %v1251
    %1279 = vmatprep.subr.mxu0 0.0
    %1280 = vmatpush1.msra.mxu0 %v1252
    %1281 = vmatprep.subr.mxu0 0.0
    %1282 = vmatpush1.msra.mxu0 %v1253
    %1283 = vmatprep.subr.mxu0 0.0
    %1284 = vmatpush1.msra.mxu0 %v1254
    %1285 = vmatprep.subr.mxu0 0.0
    %1286 = vmatpush1.msra.mxu0 %v1255
    %1287 = vmatprep.subr.mxu0 0.0
    %1288 = vmatpush1.msra.mxu0 %v1256
    %1289 = vmatprep.subr.mxu0 0.0
    %1290 = vmatpush1.msra.mxu0 0.0
    %1291 = vmatprep.subr.mxu0 0.0
    %1292 = vmatpush1.msra.mxu0 0.0
    %1293 = vmatprep.subr.mxu0 0.0
    %1294 = vmatpush1.msra.mxu0 0.0
    %1295 = vmatprep.subr.mxu0 0.0
    %1296 = vmatpush1.msra.mxu0 0.0
    %1297 = vmatprep.subr.mxu0 0.0
    %1298 = vmatpush1.msra.mxu0 0.0
    %1299 = vmatprep.subr.mxu0 0.0
    %1300 = vmatpush1.msra.mxu0 0.0
    %1301 = vmatprep.subr.mxu0 0.0
    %1302 = vmatpush1.msra.mxu0 0.0
    %1303 = vmatprep.subr.mxu0 0.0
    %1304 = vmatpush1.msra.mxu0 0.0
    %1305 = vmatprep.subr.mxu0 0.0
    %1306 = vmatpush1.msra.mxu0 0.0
    %1307 = vmatprep.subr.mxu0 0.0
    %1308 = vmatpush1.msra.mxu0 0.0
    %1309 = vmatprep.subr.mxu0 0.0
    %1310 = vmatpush1.msra.mxu0 0.0
    %1311 = vmatprep.subr.mxu0 0.0
    %1312 = vmatpush1.msra.mxu0 0.0
    %1313 = vmatprep.subr.mxu0 0.0
    %1314 = vmatpush1.msra.mxu0 0.0
    %1315 = vmatprep.subr.mxu0 0.0
    %1316 = vmatpush1.msra.mxu0 0.0
    %1317 = vmatprep.subr.mxu0 0.0
    %1318 = vmatpush1.msra.mxu0 0.0
    %1319 = vmatprep.subr.mxu0 0.0
    %1320 = vmatpush1.msra.mxu0 0.0
    %1321 = vmatprep.mubr.f32.mxu0 0.0
    %1322 = vmatmul.mubr.f32.gmra.mrb[0].mxu0 %v1226
    %v1323 = vpop.f32.mrb[0].mxu0
    %v1324 = vadd.f32 0.0, %v1323
    %v1325 = vpop.f32.mrb[0].mxu0
    %1326 = vmatprep.mubr.f32.mxu0 0.0
    %1327 = vmatmul.mubr.f32.gmra.mrb[0].mxu0 %v1227
    %v1328 = vpop.f32.mrb[0].mxu0
    %v1329 = vadd.f32 0.0, %v1328
    %v1330 = vpop.f32.mrb[0].mxu0
    %1331 = vmatprep.mubr.f32.mxu0 0.0
    %1332 = vmatmul.mubr.f32.gmra.mrb[0].mxu0 %v1228
    %v1333 = vpop.f32.mrb[0].mxu0
    %v1334 = vadd.f32 0.0, %v1333
    %v1335 = vpop.f32.mrb[0].mxu0
    %1336 = vmatprep.mubr.f32.mxu0 0.0
    %1337 = vmatmul.mubr.f32.gmra.mrb[0].mxu0 %v1229
    %v1338 = vpop.f32.mrb[0].mxu0
    %v1339 = vadd.f32 0.0, %v1338
    %v1340 = vpop.f32.mrb[0].mxu0
    %1341 = vmatprep.mubr.f32.mxu0 0.0
    %1342 = vmatmul.mubr.f32.gmra.mrb[0].mxu0 %v1230
    %v1343 = vpop.f32.mrb[0].mxu0
    %v1344 = vadd.f32 0.0, %v1343
    %v1345 = vpop.f32.mrb[0].mxu0
    %1346 = vmatprep.mubr.f32.mxu0 0.0
    %1347 = vmatmul.mubr.f32.gmra.mrb[0].mxu0 %v1231
    %v1348 = vpop.f32.mrb[0].mxu0
    %v1349 = vadd.f32 0.0, %v1348
    %v1350 = vpop.f32.mrb[0].mxu0
    %1351 = vmatprep.mubr.f32.mxu0 0.0
    %1352 = vmatmul.mubr.f32.gmra.mrb[0].mxu0 %v1232
    %v1353 = vpop.f32.mrb[0].mxu0
    %v1354 = vadd.f32 0.0, %v1353
    %v1355 = vpop.f32.mrb[0].mxu0
    %1356 = vmatprep.mubr.f32.mxu0 0.0
    %1357 = vmatmul.mubr.f32.gmra.mrb[0].mxu0 %v1233
    %v1358 = vpop.f32.mrb[0].mxu0
    %v1359 = vadd.f32 0.0, %v1358
    %v1360 = vpop.f32.mrb[0].mxu0
    %1361 = vmatprep.mubr.f32.mxu0 0.0
    %1362 = vmatmul.mubr.f32.gmra.mrb[0].mxu0 %v1234
    %v1363 = vpop.f32.mrb[0].mxu0
    %v1364 = vadd.f32 0.0, %v1363
    %v1365 = vpop.f32.mrb[0].mxu0
    %1366 = vmatprep.mubr.f32.mxu0 0.0
    %1367 = vmatmul.mubr.f32.gmra.mrb[0].mxu0 %v1235
    %v1368 = vpop.f32.mrb[0].mxu0
    %v1369 = vadd.f32 0.0, %v1368
    %v1370 = vpop.f32.mrb[0].mxu0
    %1371 = vmatprep.mubr.f32.mxu0 0.0
    %1372 = vmatmul.mubr.f32.gmra.mrb[0].mxu0 %v1236
    %v1373 = vpop.f32.mrb[0].mxu0
    %v1374 = vadd.f32 0.0, %v1373
    %v1375 = vpop.f32.mrb[0].mxu0
    %1376 = vmatprep.mubr.f32.mxu0 0.0
    %1377 = vmatmul.mubr.f32.gmra.mrb[0].mxu0 %v1237
    %v1378 = vpop.f32.mrb[0].mxu0
    %v1379 = vadd.f32 0.0, %v1378
    %v1380 = vpop.f32.mrb[0].mxu0
    %1381 = vmatprep.mubr.f32.mxu0 0.0
    %1382 = vmatmul.mubr.f32.gmra.mrb[0].mxu0 %v1238
    %v1383 = vpop.f32.mrb[0].mxu0
    %v1384 = vadd.f32 0.0, %v1383
    %v1385 = vpop.f32.mrb[0].mxu0
    %1386 = vmatprep.mubr.f32.mxu0 0.0
    %1387 = vmatmul.mubr.f32.gmra.mrb[0].mxu0 %v1239
    %v1388 = vpop.f32.mrb[0].mxu0
    %v1389 = vadd.f32 0.0, %v1388
    %v1390 = vpop.f32.mrb[0].mxu0
    %1391 = vdwg.mxu0
    %v1392 = vadd.f32 %v1212, %v1324
    %v1393 = vadd.f32 %v1213, %v1329
    %v1394 = vadd.f32 %v1214, %v1334
    %v1395 = vadd.f32 %v1215, %v1339
    %v1396 = vadd.f32 %v1216, %v1344
    %v1397 = vadd.f32 %v1217, %v1349
    %v1398 = vadd.f32 %v1218, %v1354
    %v1399 = vadd.f32 %v1219, %v1359
    %v1400 = vadd.f32 %v1220, %v1364
    %v1401 = vadd.f32 %v1221, %v1369
    %v1402 = vadd.f32 %v1222, %v1374
    %v1403 = vadd.f32 %v1223, %v1379
    %v1404 = vadd.f32 %v1224, %v1384
    %v1405 = vadd.f32 %v1225, %v1389
    %v1406 = vld [vmem:[#allocation3 + $0x20] sm:$0xff]
    %v1407 = vld [vmem:[#allocation3 + $0x28] sm:$0xff]
    %v1408 = vld [vmem:[#allocation3 + $0x30] sm:$0xff]
    %v1409 = vld [vmem:[#allocation3 + $0x38] sm:$0xff]
    %v1410 = vld [vmem:[#allocation3 + $0x40] sm:$0xff]
    %v1411 = vld [vmem:[#allocation3 + $0x48] sm:$0xff]
    %v1412 = vld [vmem:[#allocation3 + $0x50] sm:$0xff]
    %v1413 = vld [vmem:[#allocation3 + $0x58] sm:$0xff]
    %v1414 = vld [vmem:[#allocation3 + $0x60] sm:$0xff]
    %v1415 = vld [vmem:[#allocation3 + $0x68] sm:$0xff]
    %v1416 = vld [vmem:[#allocation3 + $0x70] sm:$0xff]
    %v1417 = vld [vmem:[#allocation3 + $0x78] sm:$0xff]
    %v1418 = vld [vmem:[#allocation3 + $0x80] sm:$0xff]
    %v1419 = vld [vmem:[#allocation3 + $0x88] sm:$0xff]
    %s1420 = scalar_lea.vmem [#allocation8], 768
    %v1421 = vld [vmem:[%s1420] sm:$0xff]
    %v1422 = vld [vmem:[%s1420 + $0x8] sm:$0xff]
    %v1423 = vld [vmem:[%s1420 + $0x10] sm:$0xff]
    %v1424 = vld [vmem:[%s1420 + $0x18] sm:$0xff]
    %v1425 = vld [vmem:[%s1420 + $0x20] sm:$0xff]
    %v1426 = vld [vmem:[%s1420 + $0x28] sm:$0xff]
    %v1427 = vld [vmem:[%s1420 + $0x30] sm:$0xff]
    %v1428 = vld [vmem:[%s1420 + $0x38] sm:$0xff]
    %v1429 = vld [vmem:[%s1420 + $0x40] sm:$0xff]
    %v1430 = vld [vmem:[%s1420 + $0x48] sm:$0xff]
    %v1431 = vld [vmem:[%s1420 + $0x50] sm:$0xff]
    %v1432 = vld [vmem:[%s1420 + $0x58] sm:$0xff]
    %v1433 = vld [vmem:[%s1420 + $0x60] sm:$0xff]
    %v1434 = vld [vmem:[%s1420 + $0x68] sm:$0xff]
    %v1435 = vld [vmem:[%s1420 + $0x70] sm:$0xff]
    %v1436 = vld [vmem:[%s1420 + $0x78] sm:$0xff]
    %1437 = vmatprep.subr.mxu0 0.0
    %1438 = vmatpush1.msra.mxu0 %v1421
    %1439 = vmatprep.subr.mxu0 0.0
    %1440 = vmatpush1.msra.mxu0 %v1422
    %1441 = vmatprep.subr.mxu0 0.0
    %1442 = vmatpush1.msra.mxu0 %v1423
    %1443 = vmatprep.subr.mxu0 0.0
    %1444 = vmatpush1.msra.mxu0 %v1424
    %1445 = vmatprep.subr.mxu0 0.0
    %1446 = vmatpush1.msra.mxu0 %v1425
    %1447 = vmatprep.subr.mxu0 0.0
    %1448 = vmatpush1.msra.mxu0 %v1426
    %1449 = vmatprep.subr.mxu0 0.0
    %1450 = vmatpush1.msra.mxu0 %v1427
    %1451 = vmatprep.subr.mxu0 0.0
    %1452 = vmatpush1.msra.mxu0 %v1428
    %1453 = vmatprep.subr.mxu0 0.0
    %1454 = vmatpush1.msra.mxu0 %v1429
    %1455 = vmatprep.subr.mxu0 0.0
    %1456 = vmatpush1.msra.mxu0 %v1430
    %1457 = vmatprep.subr.mxu0 0.0
    %1458 = vmatpush1.msra.mxu0 %v1431
    %1459 = vmatprep.subr.mxu0 0.0
    %1460 = vmatpush1.msra.mxu0 %v1432
    %1461 = vmatprep.subr.mxu0 0.0
    %1462 = vmatpush1.msra.mxu0 %v1433
    %1463 = vmatprep.subr.mxu0 0.0
    %1464 = vmatpush1.msra.mxu0 %v1434
    %1465 = vmatprep.subr.mxu0 0.0
    %1466 = vmatpush1.msra.mxu0 %v1435
    %1467 = vmatprep.subr.mxu0 0.0
    %1468 = vmatpush1.msra.mxu0 %v1436
    %1469 = vmatprep.subr.mxu0 0.0
    %1470 = vmatpush1.msra.mxu0 0.0
    %1471 = vmatprep.subr.mxu0 0.0
    %1472 = vmatpush1.msra.mxu0 0.0
    %1473 = vmatprep.subr.mxu0 0.0
    %1474 = vmatpush1.msra.mxu0 0.0
    %1475 = vmatprep.subr.mxu0 0.0
    %1476 = vmatpush1.msra.mxu0 0.0
    %1477 = vmatprep.subr.mxu0 0.0
    %1478 = vmatpush1.msra.mxu0 0.0
    %1479 = vmatprep.subr.mxu0 0.0
    %1480 = vmatpush1.msra.mxu0 0.0
    %1481 = vmatprep.subr.mxu0 0.0
    %1482 = vmatpush1.msra.mxu0 0.0
    %1483 = vmatprep.subr.mxu0 0.0
    %1484 = vmatpush1.msra.mxu0 0.0
    %1485 = vmatprep.subr.mxu0 0.0
    %1486 = vmatpush1.msra.mxu0 0.0
    %1487 = vmatprep.subr.mxu0 0.0
    %1488 = vmatpush1.msra.mxu0 0.0
    %1489 = vmatprep.subr.mxu0 0.0
    %1490 = vmatpush1.msra.mxu0 0.0
    %1491 = vmatprep.subr.mxu0 0.0
    %1492 = vmatpush1.msra.mxu0 0.0
    %1493 = vmatprep.subr.mxu0 0.0
    %1494 = vmatpush1.msra.mxu0 0.0
    %1495 = vmatprep.subr.mxu0 0.0
    %1496 = vmatpush1.msra.mxu0 0.0
    %1497 = vmatprep.subr.mxu0 0.0
    %1498 = vmatpush1.msra.mxu0 0.0
    %1499 = vmatprep.subr.mxu0 0.0
    %1500 = vmatpush1.msra.mxu0 0.0
    %1501 = vmatprep.mubr.f32.mxu0 0.0
    %1502 = vmatmul.mubr.f32.gmra.mrb[0].mxu0 %v1406
    %v1503 = vpop.f32.mrb[0].mxu0
    %v1504 = vadd.f32 0.0, %v1503
    %v1505 = vpop.f32.mrb[0].mxu0
    %1506 = vmatprep.mubr.f32.mxu0 0.0
    %1507 = vmatmul.mubr.f32.gmra.mrb[0].mxu0 %v1407
    %v1508 = vpop.f32.mrb[0].mxu0
    %v1509 = vadd.f32 0.0, %v1508
    %v1510 = vpop.f32.mrb[0].mxu0
    %1511 = vmatprep.mubr.f32.mxu0 0.0
    %1512 = vmatmul.mubr.f32.gmra.mrb[0].mxu0 %v1408
    %v1513 = vpop.f32.mrb[0].mxu0
    %v1514 = vadd.f32 0.0, %v1513
    %v1515 = vpop.f32.mrb[0].mxu0
    %1516 = vmatprep.mubr.f32.mxu0 0.0
    %1517 = vmatmul.mubr.f32.gmra.mrb[0].mxu0 %v1409
    %v1518 = vpop.f32.mrb[0].mxu0
    %v1519 = vadd.f32 0.0, %v1518
    %v1520 = vpop.f32.mrb[0].mxu0
    %1521 = vmatprep.mubr.f32.mxu0 0.0
    %1522 = vmatmul.mubr.f32.gmra.mrb[0].mxu0 %v1410
    %v1523 = vpop.f32.mrb[0].mxu0
    %v1524 = vadd.f32 0.0, %v1523
    %v1525 = vpop.f32.mrb[0].mxu0
    %1526 = vmatprep.mubr.f32.mxu0 0.0
    %1527 = vmatmul.mubr.f32.gmra.mrb[0].mxu0 %v1411
    %v1528 = vpop.f32.mrb[0].mxu0
    %v1529 = vadd.f32 0.0, %v1528
    %v1530 = vpop.f32.mrb[0].mxu0
    %1531 = vmatprep.mubr.f32.mxu0 0.0
    %1532 = vmatmul.mubr.f32.gmra.mrb[0].mxu0 %v1412
    %v1533 = vpop.f32.mrb[0].mxu0
    %v1534 = vadd.f32 0.0, %v1533
    %v1535 = vpop.f32.mrb[0].mxu0
    %1536 = vmatprep.mubr.f32.mxu0 0.0
    %1537 = vmatmul.mubr.f32.gmra.mrb[0].mxu0 %v1413
    %v1538 = vpop.f32.mrb[0].mxu0
    %v1539 = vadd.f32 0.0, %v1538
    %v1540 = vpop.f32.mrb[0].mxu0
    %1541 = vmatprep.mubr.f32.mxu0 0.0
    %1542 = vmatmul.mubr.f32.gmra.mrb[0].mxu0 %v1414
    %v1543 = vpop.f32.mrb[0].mxu0
    %v1544 = vadd.f32 0.0, %v1543
    %v1545 = vpop.f32.mrb[0].mxu0
    %1546 = vmatprep.mubr.f32.mxu0 0.0
    %1547 = vmatmul.mubr.f32.gmra.mrb[0].mxu0 %v1415
    %v1548 = vpop.f32.mrb[0].mxu0
    %v1549 = vadd.f32 0.0, %v1548
    %v1550 = vpop.f32.mrb[0].mxu0
    %1551 = vmatprep.mubr.f32.mxu0 0.0
    %1552 = vmatmul.mubr.f32.gmra.mrb[0].mxu0 %v1416
    %v1553 = vpop.f32.mrb[0].mxu0
    %v1554 = vadd.f32 0.0, %v1553
    %v1555 = vpop.f32.mrb[0].mxu0
    %1556 = vmatprep.mubr.f32.mxu0 0.0
    %1557 = vmatmul.mubr.f32.gmra.mrb[0].mxu0 %v1417
    %v1558 = vpop.f32.mrb[0].mxu0
    %v1559 = vadd.f32 0.0, %v1558
    %v1560 = vpop.f32.mrb[0].mxu0
    %1561 = vmatprep.mubr.f32.mxu0 0.0
    %1562 = vmatmul.mubr.f32.gmra.mrb[0].mxu0 %v1418
    %v1563 = vpop.f32.mrb[0].mxu0
    %v1564 = vadd.f32 0.0, %v1563
    %v1565 = vpop.f32.mrb[0].mxu0
    %1566 = vmatprep.mubr.f32.mxu0 0.0
    %1567 = vmatmul.mubr.f32.gmra.mrb[0].mxu0 %v1419
    %v1568 = vpop.f32.mrb[0].mxu0
    %v1569 = vadd.f32 0.0, %v1568
    %v1570 = vpop.f32.mrb[0].mxu0
    %1571 = vdwg.mxu0
    %v1572 = vadd.f32 %v1392, %v1504
    %v1573 = vadd.f32 %v1393, %v1509
    %v1574 = vadd.f32 %v1394, %v1514
    %v1575 = vadd.f32 %v1395, %v1519
    %v1576 = vadd.f32 %v1396, %v1524
    %v1577 = vadd.f32 %v1397, %v1529
    %v1578 = vadd.f32 %v1398, %v1534
    %v1579 = vadd.f32 %v1399, %v1539
    %v1580 = vadd.f32 %v1400, %v1544
    %v1581 = vadd.f32 %v1401, %v1549
    %v1582 = vadd.f32 %v1402, %v1554
    %v1583 = vadd.f32 %v1403, %v1559
    %v1584 = vadd.f32 %v1404, %v1564
    %v1585 = vadd.f32 %v1405, %v1569
    %v1586 = vld [vmem:[#allocation3 + $0x30] sm:$0xff]
    %v1587 = vld [vmem:[#allocation3 + $0x38] sm:$0xff]
    %v1588 = vld [vmem:[#allocation3 + $0x40] sm:$0xff]
    %v1589 = vld [vmem:[#allocation3 + $0x48] sm:$0xff]
    %v1590 = vld [vmem:[#allocation3 + $0x50] sm:$0xff]
    %v1591 = vld [vmem:[#allocation3 + $0x58] sm:$0xff]
    %v1592 = vld [vmem:[#allocation3 + $0x60] sm:$0xff]
    %v1593 = vld [vmem:[#allocation3 + $0x68] sm:$0xff]
    %v1594 = vld [vmem:[#allocation3 + $0x70] sm:$0xff]
    %v1595 = vld [vmem:[#allocation3 + $0x78] sm:$0xff]
    %v1596 = vld [vmem:[#allocation3 + $0x80] sm:$0xff]
    %v1597 = vld [vmem:[#allocation3 + $0x88] sm:$0xff]
    %v1598 = vld [vmem:[#allocation3 + $0x90] sm:$0xff]
    %v1599 = vld [vmem:[#allocation3 + $0x98] sm:$0xff]
    %s1600 = scalar_lea.vmem [#allocation8], 896
    %v1601 = vld [vmem:[%s1600] sm:$0xff]
    %v1602 = vld [vmem:[%s1600 + $0x8] sm:$0xff]
    %v1603 = vld [vmem:[%s1600 + $0x10] sm:$0xff]
    %v1604 = vld [vmem:[%s1600 + $0x18] sm:$0xff]
    %v1605 = vld [vmem:[%s1600 + $0x20] sm:$0xff]
    %v1606 = vld [vmem:[%s1600 + $0x28] sm:$0xff]
    %v1607 = vld [vmem:[%s1600 + $0x30] sm:$0xff]
    %v1608 = vld [vmem:[%s1600 + $0x38] sm:$0xff]
    %v1609 = vld [vmem:[%s1600 + $0x40] sm:$0xff]
    %v1610 = vld [vmem:[%s1600 + $0x48] sm:$0xff]
    %v1611 = vld [vmem:[%s1600 + $0x50] sm:$0xff]
    %v1612 = vld [vmem:[%s1600 + $0x58] sm:$0xff]
    %v1613 = vld [vmem:[%s1600 + $0x60] sm:$0xff]
    %v1614 = vld [vmem:[%s1600 + $0x68] sm:$0xff]
    %v1615 = vld [vmem:[%s1600 + $0x70] sm:$0xff]
    %v1616 = vld [vmem:[%s1600 + $0x78] sm:$0xff]
    %1617 = vmatprep.subr.mxu0 0.0
    %1618 = vmatpush1.msra.mxu0 %v1601
    %1619 = vmatprep.subr.mxu0 0.0
    %1620 = vmatpush1.msra.mxu0 %v1602
    %1621 = vmatprep.subr.mxu0 0.0
    %1622 = vmatpush1.msra.mxu0 %v1603
    %1623 = vmatprep.subr.mxu0 0.0
    %1624 = vmatpush1.msra.mxu0 %v1604
    %1625 = vmatprep.subr.mxu0 0.0
    %1626 = vmatpush1.msra.mxu0 %v1605
    %1627 = vmatprep.subr.mxu0 0.0
    %1628 = vmatpush1.msra.mxu0 %v1606
    %1629 = vmatprep.subr.mxu0 0.0
    %1630 = vmatpush1.msra.mxu0 %v1607
    %1631 = vmatprep.subr.mxu0 0.0
    %1632 = vmatpush1.msra.mxu0 %v1608
    %1633 = vmatprep.subr.mxu0 0.0
    %1634 = vmatpush1.msra.mxu0 %v1609
    %1635 = vmatprep.subr.mxu0 0.0
    %1636 = vmatpush1.msra.mxu0 %v1610
    %1637 = vmatprep.subr.mxu0 0.0
    %1638 = vmatpush1.msra.mxu0 %v1611
    %1639 = vmatprep.subr.mxu0 0.0
    %1640 = vmatpush1.msra.mxu0 %v1612
    %1641 = vmatprep.subr.mxu0 0.0
    %1642 = vmatpush1.msra.mxu0 %v1613
    %1643 = vmatprep.subr.mxu0 0.0
    %1644 = vmatpush1.msra.mxu0 %v1614
    %1645 = vmatprep.subr.mxu0 0.0
    %1646 = vmatpush1.msra.mxu0 %v1615
    %1647 = vmatprep.subr.mxu0 0.0
    %1648 = vmatpush1.msra.mxu0 %v1616
    %1649 = vmatprep.subr.mxu0 0.0
    %1650 = vmatpush1.msra.mxu0 0.0
    %1651 = vmatprep.subr.mxu0 0.0
    %1652 = vmatpush1.msra.mxu0 0.0
    %1653 = vmatprep.subr.mxu0 0.0
    %1654 = vmatpush1.msra.mxu0 0.0
    %1655 = vmatprep.subr.mxu0 0.0
    %1656 = vmatpush1.msra.mxu0 0.0
    %1657 = vmatprep.subr.mxu0 0.0
    %1658 = vmatpush1.msra.mxu0 0.0
    %1659 = vmatprep.subr.mxu0 0.0
    %1660 = vmatpush1.msra.mxu0 0.0
    %1661 = vmatprep.subr.mxu0 0.0
    %1662 = vmatpush1.msra.mxu0 0.0
    %1663 = vmatprep.subr.mxu0 0.0
    %1664 = vmatpush1.msra.mxu0 0.0
    %1665 = vmatprep.subr.mxu0 0.0
    %1666 = vmatpush1.msra.mxu0 0.0
    %1667 = vmatprep.subr.mxu0 0.0
    %1668 = vmatpush1.msra.mxu0 0.0
    %1669 = vmatprep.subr.mxu0 0.0
    %1670 = vmatpush1.msra.mxu0 0.0
    %1671 = vmatprep.subr.mxu0 0.0
    %1672 = vmatpush1.msra.mxu0 0.0
    %1673 = vmatprep.subr.mxu0 0.0
    %1674 = vmatpush1.msra.mxu0 0.0
    %1675 = vmatprep.subr.mxu0 0.0
    %1676 = vmatpush1.msra.mxu0 0.0
    %1677 = vmatprep.subr.mxu0 0.0
    %1678 = vmatpush1.msra.mxu0 0.0
    %1679 = vmatprep.subr.mxu0 0.0
    %1680 = vmatpush1.msra.mxu0 0.0
    %1681 = vmatprep.mubr.f32.mxu0 0.0
    %1682 = vmatmul.mubr.f32.gmra.mrb[0].mxu0 %v1586
    %v1683 = vpop.f32.mrb[0].mxu0
    %v1684 = vadd.f32 0.0, %v1683
    %v1685 = vpop.f32.mrb[0].mxu0
    %1686 = vmatprep.mubr.f32.mxu0 0.0
    %1687 = vmatmul.mubr.f32.gmra.mrb[0].mxu0 %v1587
    %v1688 = vpop.f32.mrb[0].mxu0
    %v1689 = vadd.f32 0.0, %v1688
    %v1690 = vpop.f32.mrb[0].mxu0
    %1691 = vmatprep.mubr.f32.mxu0 0.0
    %1692 = vmatmul.mubr.f32.gmra.mrb[0].mxu0 %v1588
    %v1693 = vpop.f32.mrb[0].mxu0
    %v1694 = vadd.f32 0.0, %v1693
    %v1695 = vpop.f32.mrb[0].mxu0
    %1696 = vmatprep.mubr.f32.mxu0 0.0
    %1697 = vmatmul.mubr.f32.gmra.mrb[0].mxu0 %v1589
    %v1698 = vpop.f32.mrb[0].mxu0
    %v1699 = vadd.f32 0.0, %v1698
    %v1700 = vpop.f32.mrb[0].mxu0
    %1701 = vmatprep.mubr.f32.mxu0 0.0
    %1702 = vmatmul.mubr.f32.gmra.mrb[0].mxu0 %v1590
    %v1703 = vpop.f32.mrb[0].mxu0
    %v1704 = vadd.f32 0.0, %v1703
    %v1705 = vpop.f32.mrb[0].mxu0
    %1706 = vmatprep.mubr.f32.mxu0 0.0
    %1707 = vmatmul.mubr.f32.gmra.mrb[0].mxu0 %v1591
    %v1708 = vpop.f32.mrb[0].mxu0
    %v1709 = vadd.f32 0.0, %v1708
    %v1710 = vpop.f32.mrb[0].mxu0
    %1711 = vmatprep.mubr.f32.mxu0 0.0
    %1712 = vmatmul.mubr.f32.gmra.mrb[0].mxu0 %v1592
    %v1713 = vpop.f32.mrb[0].mxu0
    %v1714 = vadd.f32 0.0, %v1713
    %v1715 = vpop.f32.mrb[0].mxu0
    %1716 = vmatprep.mubr.f32.mxu0 0.0
    %1717 = vmatmul.mubr.f32.gmra.mrb[0].mxu0 %v1593
    %v1718 = vpop.f32.mrb[0].mxu0
    %v1719 = vadd.f32 0.0, %v1718
    %v1720 = vpop.f32.mrb[0].mxu0
    %1721 = vmatprep.mubr.f32.mxu0 0.0
    %1722 = vmatmul.mubr.f32.gmra.mrb[0].mxu0 %v1594
    %v1723 = vpop.f32.mrb[0].mxu0
    %v1724 = vadd.f32 0.0, %v1723
    %v1725 = vpop.f32.mrb[0].mxu0
    %1726 = vmatprep.mubr.f32.mxu0 0.0
    %1727 = vmatmul.mubr.f32.gmra.mrb[0].mxu0 %v1595
    %v1728 = vpop.f32.mrb[0].mxu0
    %v1729 = vadd.f32 0.0, %v1728
    %v1730 = vpop.f32.mrb[0].mxu0
    %1731 = vmatprep.mubr.f32.mxu0 0.0
    %1732 = vmatmul.mubr.f32.gmra.mrb[0].mxu0 %v1596
    %v1733 = vpop.f32.mrb[0].mxu0
    %v1734 = vadd.f32 0.0, %v1733
    %v1735 = vpop.f32.mrb[0].mxu0
    %1736 = vmatprep.mubr.f32.mxu0 0.0
    %1737 = vmatmul.mubr.f32.gmra.mrb[0].mxu0 %v1597
    %v1738 = vpop.f32.mrb[0].mxu0
    %v1739 = vadd.f32 0.0, %v1738
    %v1740 = vpop.f32.mrb[0].mxu0
    %1741 = vmatprep.mubr.f32.mxu0 0.0
    %1742 = vmatmul.mubr.f32.gmra.mrb[0].mxu0 %v1598
    %v1743 = vpop.f32.mrb[0].mxu0
    %v1744 = vadd.f32 0.0, %v1743
    %v1745 = vpop.f32.mrb[0].mxu0
    %1746 = vmatprep.mubr.f32.mxu0 0.0
    %1747 = vmatmul.mubr.f32.gmra.mrb[0].mxu0 %v1599
    %v1748 = vpop.f32.mrb[0].mxu0
    %v1749 = vadd.f32 0.0, %v1748
    %v1750 = vpop.f32.mrb[0].mxu0
    %1751 = vdwg.mxu0
    %v1752 = vadd.f32 %v1572, %v1684
    %v1753 = vadd.f32 %v1573, %v1689
    %v1754 = vadd.f32 %v1574, %v1694
    %v1755 = vadd.f32 %v1575, %v1699
    %v1756 = vadd.f32 %v1576, %v1704
    %v1757 = vadd.f32 %v1577, %v1709
    %v1758 = vadd.f32 %v1578, %v1714
    %v1759 = vadd.f32 %v1579, %v1719
    %v1760 = vadd.f32 %v1580, %v1724
    %v1761 = vadd.f32 %v1581, %v1729
    %v1762 = vadd.f32 %v1582, %v1734
    %v1763 = vadd.f32 %v1583, %v1739
    %v1764 = vadd.f32 %v1584, %v1744
    %v1765 = vadd.f32 %v1585, %v1749
    %v1766 = vmax.f32 %v1752, 0.0
    %v1767 = vmax.f32 %v1753, 0.0
    %v1768 = vmax.f32 %v1754, 0.0
    %v1769 = vmax.f32 %v1755, 0.0
    %v1770 = vmax.f32 %v1756, 0.0
    %v1771 = vmax.f32 %v1757, 0.0
    %v1772 = vmax.f32 %v1758, 0.0
    %v1773 = vmax.f32 %v1759, 0.0
    %v1774 = vmax.f32 %v1760, 0.0
    %v1775 = vmax.f32 %v1761, 0.0
    %v1776 = vmax.f32 %v1762, 0.0
    %v1777 = vmax.f32 %v1763, 0.0
    %v1778 = vmax.f32 %v1764, 0.0
    %v1779 = vmax.f32 %v1765, 0.0
    %1780 = vst [vmem:[#allocation4] sm:$0xff] %v1766
    %1781 = vst [vmem:[#allocation4 + $0x8] sm:$0xff] %v1767
    %1782 = vst [vmem:[#allocation4 + $0x10] sm:$0xff] %v1768
    %1783 = vst [vmem:[#allocation4 + $0x18] sm:$0xff] %v1769
    %1784 = vst [vmem:[#allocation4 + $0x20] sm:$0xff] %v1770
    %1785 = vst [vmem:[#allocation4 + $0x28] sm:$0xff] %v1771
    %1786 = vst [vmem:[#allocation4 + $0x30] sm:$0xff] %v1772
    %1787 = vst [vmem:[#allocation4 + $0x38] sm:$0xff] %v1773
    %1788 = vst [vmem:[#allocation4 + $0x40] sm:$0xff] %v1774
    %1789 = vst [vmem:[#allocation4 + $0x48] sm:$0xff] %v1775
    %1790 = vst [vmem:[#allocation4 + $0x50] sm:$0xff] %v1776
    %1791 = vst [vmem:[#allocation4 + $0x58] sm:$0xff] %v1777
    %1792 = vst [vmem:[#allocation4 + $0x60] sm:$0xff] %v1778
    %1793 = vst [vmem:[#allocation4 + $0x68] sm:$0xff] %v1779
    %s1794 = scalar_lea.vmem %s2, 2
    %v1795 = vld [vmem:[%s1794] sm:$0x1]
    %v1797 = vlaneseq
    %v1798 = vshrl.u32 %v1797, 7
    %v1799 = vsub.s32 0, %v1798
    %v1800 = vrot.slane %v1795, %v1799
    %v1802 = vld [vmem:[#allocation4] sm:$0xff]
    %v1803 = vld [vmem:[#allocation4 + $0x8] sm:$0xff]
    %v1804 = vld [vmem:[#allocation4 + $0x10] sm:$0xff]
    %v1805 = vld [vmem:[#allocation4 + $0x18] sm:$0xff]
    %v1806 = vld [vmem:[#allocation4 + $0x20] sm:$0xff]
    %v1807 = vld [vmem:[#allocation4 + $0x28] sm:$0xff]
    %v1808 = vld [vmem:[#allocation4 + $0x30] sm:$0xff]
    %v1809 = vld [vmem:[#allocation4 + $0x38] sm:$0xff]
    %s1810 = scalar_lea.vmem [#allocation8], 1024
    %v1811 = vld [vmem:[%s1810] sm:$0xff]
    %v1812 = vld [vmem:[%s1810 + $0x8] sm:$0xff]
    %v1813 = vld [vmem:[%s1810 + $0x10] sm:$0xff]
    %v1814 = vld [vmem:[%s1810 + $0x18] sm:$0xff]
    %v1815 = vld [vmem:[%s1810 + $0x20] sm:$0xff]
    %v1816 = vld [vmem:[%s1810 + $0x28] sm:$0xff]
    %v1817 = vld [vmem:[%s1810 + $0x30] sm:$0xff]
    %v1818 = vld [vmem:[%s1810 + $0x38] sm:$0xff]
    %v1819 = vld [vmem:[%s1810 + $0x40] sm:$0xff]
    %v1820 = vld [vmem:[%s1810 + $0x48] sm:$0xff]
    %v1821 = vld [vmem:[%s1810 + $0x50] sm:$0xff]
    %v1822 = vld [vmem:[%s1810 + $0x58] sm:$0xff]
    %v1823 = vld [vmem:[%s1810 + $0x60] sm:$0xff]
    %v1824 = vld [vmem:[%s1810 + $0x68] sm:$0xff]
    %v1825 = vld [vmem:[%s1810 + $0x70] sm:$0xff]
    %v1826 = vld [vmem:[%s1810 + $0x78] sm:$0xff]
    %1827 = vmatprep.subr.mxu0 0.0
    %1828 = vmatpush1.msra.mxu0 %v1811
    %1829 = vmatprep.subr.mxu0 0.0
    %1830 = vmatpush1.msra.mxu0 %v1812
    %1831 = vmatprep.subr.mxu0 0.0
    %1832 = vmatpush1.msra.mxu0 %v1813
    %1833 = vmatprep.subr.mxu0 0.0
    %1834 = vmatpush1.msra.mxu0 %v1814
    %1835 = vmatprep.subr.mxu0 0.0
    %1836 = vmatpush1.msra.mxu0 %v1815
    %1837 = vmatprep.subr.mxu0 0.0
    %1838 = vmatpush1.msra.mxu0 %v1816
    %1839 = vmatprep.subr.mxu0 0.0
    %1840 = vmatpush1.msra.mxu0 %v1817
    %1841 = vmatprep.subr.mxu0 0.0
    %1842 = vmatpush1.msra.mxu0 %v1818
    %1843 = vmatprep.subr.mxu0 0.0
    %1844 = vmatpush1.msra.mxu0 %v1819
    %1845 = vmatprep.subr.mxu0 0.0
    %1846 = vmatpush1.msra.mxu0 %v1820
    %1847 = vmatprep.subr.mxu0 0.0
    %1848 = vmatpush1.msra.mxu0 %v1821
    %1849 = vmatprep.subr.mxu0 0.0
    %1850 = vmatpush1.msra.mxu0 %v1822
    %1851 = vmatprep.subr.mxu0 0.0
    %1852 = vmatpush1.msra.mxu0 %v1823
    %1853 = vmatprep.subr.mxu0 0.0
    %1854 = vmatpush1.msra.mxu0 %v1824
    %1855 = vmatprep.subr.mxu0 0.0
    %1856 = vmatpush1.msra.mxu0 %v1825
    %1857 = vmatprep.subr.mxu0 0.0
    %1858 = vmatpush1.msra.mxu0 %v1826
    %1859 = vmatprep.subr.mxu0 0.0
    %1860 = vmatpush1.msra.mxu0 0.0
    %1861 = vmatprep.subr.mxu0 0.0
    %1862 = vmatpush1.msra.mxu0 0.0
    %1863 = vmatprep.subr.mxu0 0.0
    %1864 = vmatpush1.msra.mxu0 0.0
    %1865 = vmatprep.subr.mxu0 0.0
    %1866 = vmatpush1.msra.mxu0 0.0
    %1867 = vmatprep.subr.mxu0 0.0
    %1868 = vmatpush1.msra.mxu0 0.0
    %1869 = vmatprep.subr.mxu0 0.0
    %1870 = vmatpush1.msra.mxu0 0.0
    %1871 = vmatprep.subr.mxu0 0.0
    %1872 = vmatpush1.msra.mxu0 0.0
    %1873 = vmatprep.subr.mxu0 0.0
    %1874 = vmatpush1.msra.mxu0 0.0
    %1875 = vmatprep.subr.mxu0 0.0
    %1876 = vmatpush1.msra.mxu0 0.0
    %1877 = vmatprep.subr.mxu0 0.0
    %1878 = vmatpush1.msra.mxu0 0.0
    %1879 = vmatprep.subr.mxu0 0.0
    %1880 = vmatpush1.msra.mxu0 0.0
    %1881 = vmatprep.subr.mxu0 0.0
    %1882 = vmatpush1.msra.mxu0 0.0
    %1883 = vmatprep.subr.mxu0 0.0
    %1884 = vmatpush1.msra.mxu0 0.0
    %1885 = vmatprep.subr.mxu0 0.0
    %1886 = vmatpush1.msra.mxu0 0.0
    %1887 = vmatprep.subr.mxu0 0.0
    %1888 = vmatpush1.msra.mxu0 0.0
    %1889 = vmatprep.subr.mxu0 0.0
    %1890 = vmatpush1.msra.mxu0 0.0
    %1891 = vmatprep.mubr.f32.mxu0 0.0
    %1892 = vmatmul.mubr.f32.gmra.mrb[0].mxu0 %v1802
    %v1893 = vpop.f32.mrb[0].mxu0
    %v1894 = vadd.f32 0.0, %v1893
    %v1895 = vpop.f32.mrb[0].mxu0
    %1896 = vmatprep.mubr.f32.mxu0 0.0
    %1897 = vmatmul.mubr.f32.gmra.mrb[0].mxu0 %v1803
    %v1898 = vpop.f32.mrb[0].mxu0
    %v1899 = vadd.f32 0.0, %v1898
    %v1900 = vpop.f32.mrb[0].mxu0
    %1901 = vmatprep.mubr.f32.mxu0 0.0
    %1902 = vmatmul.mubr.f32.gmra.mrb[0].mxu0 %v1804
    %v1903 = vpop.f32.mrb[0].mxu0
    %v1904 = vadd.f32 0.0, %v1903
    %v1905 = vpop.f32.mrb[0].mxu0
    %1906 = vmatprep.mubr.f32.mxu0 0.0
    %1907 = vmatmul.mubr.f32.gmra.mrb[0].mxu0 %v1805
    %v1908 = vpop.f32.mrb[0].mxu0
    %v1909 = vadd.f32 0.0, %v1908
    %v1910 = vpop.f32.mrb[0].mxu0
    %1911 = vmatprep.mubr.f32.mxu0 0.0
    %1912 = vmatmul.mubr.f32.gmra.mrb[0].mxu0 %v1806
    %v1913 = vpop.f32.mrb[0].mxu0
    %v1914 = vadd.f32 0.0, %v1913
    %v1915 = vpop.f32.mrb[0].mxu0
    %1916 = vmatprep.mubr.f32.mxu0 0.0
    %1917 = vmatmul.mubr.f32.gmra.mrb[0].mxu0 %v1807
    %v1918 = vpop.f32.mrb[0].mxu0
    %v1919 = vadd.f32 0.0, %v1918
    %v1920 = vpop.f32.mrb[0].mxu0
    %1921 = vmatprep.mubr.f32.mxu0 0.0
    %1922 = vmatmul.mubr.f32.gmra.mrb[0].mxu0 %v1808
    %v1923 = vpop.f32.mrb[0].mxu0
    %v1924 = vadd.f32 0.0, %v1923
    %v1925 = vpop.f32.mrb[0].mxu0
    %1926 = vmatprep.mubr.f32.mxu0 0.0
    %1927 = vmatmul.mubr.f32.gmra.mrb[0].mxu0 %v1809
    %v1928 = vpop.f32.mrb[0].mxu0
    %v1929 = vadd.f32 0.0, %v1928
    %v1930 = vpop.f32.mrb[0].mxu0
    %1931 = vdwg.mxu0
    %v1932 = vadd.f32 %v1800, %v1894
    %v1933 = vadd.f32 %v1800, %v1899
    %v1934 = vadd.f32 %v1800, %v1904
    %v1935 = vadd.f32 %v1800, %v1909
    %v1936 = vadd.f32 %v1800, %v1914
    %v1937 = vadd.f32 %v1800, %v1919
    %v1938 = vadd.f32 %v1800, %v1924
    %v1939 = vadd.f32 %v1800, %v1929
    %v1940 = vld [vmem:[#allocation4 + $0x10] sm:$0xff]
    %v1941 = vld [vmem:[#allocation4 + $0x18] sm:$0xff]
    %v1942 = vld [vmem:[#allocation4 + $0x20] sm:$0xff]
    %v1943 = vld [vmem:[#allocation4 + $0x28] sm:$0xff]
    %v1944 = vld [vmem:[#allocation4 + $0x30] sm:$0xff]
    %v1945 = vld [vmem:[#allocation4 + $0x38] sm:$0xff]
    %v1946 = vld [vmem:[#allocation4 + $0x40] sm:$0xff]
    %v1947 = vld [vmem:[#allocation4 + $0x48] sm:$0xff]
    %s1948 = scalar_lea.vmem [#allocation8], 1152
    %v1949 = vld [vmem:[%s1948] sm:$0xff]
    %v1950 = vld [vmem:[%s1948 + $0x8] sm:$0xff]
    %v1951 = vld [vmem:[%s1948 + $0x10] sm:$0xff]
    %v1952 = vld [vmem:[%s1948 + $0x18] sm:$0xff]
    %v1953 = vld [vmem:[%s1948 + $0x20] sm:$0xff]
    %v1954 = vld [vmem:[%s1948 + $0x28] sm:$0xff]
    %v1955 = vld [vmem:[%s1948 + $0x30] sm:$0xff]
    %v1956 = vld [vmem:[%s1948 + $0x38] sm:$0xff]
    %v1957 = vld [vmem:[%s1948 + $0x40] sm:$0xff]
    %v1958 = vld [vmem:[%s1948 + $0x48] sm:$0xff]
    %v1959 = vld [vmem:[%s1948 + $0x50] sm:$0xff]
    %v1960 = vld [vmem:[%s1948 + $0x58] sm:$0xff]
    %v1961 = vld [vmem:[%s1948 + $0x60] sm:$0xff]
    %v1962 = vld [vmem:[%s1948 + $0x68] sm:$0xff]
    %v1963 = vld [vmem:[%s1948 + $0x70] sm:$0xff]
    %v1964 = vld [vmem:[%s1948 + $0x78] sm:$0xff]
    %1965 = vmatprep.subr.mxu0 0.0
    %1966 = vmatpush1.msra.mxu0 %v1949
    %1967 = vmatprep.subr.mxu0 0.0
    %1968 = vmatpush1.msra.mxu0 %v1950
    %1969 = vmatprep.subr.mxu0 0.0
    %1970 = vmatpush1.msra.mxu0 %v1951
    %1971 = vmatprep.subr.mxu0 0.0
    %1972 = vmatpush1.msra.mxu0 %v1952
    %1973 = vmatprep.subr.mxu0 0.0
    %1974 = vmatpush1.msra.mxu0 %v1953
    %1975 = vmatprep.subr.mxu0 0.0
    %1976 = vmatpush1.msra.mxu0 %v1954
    %1977 = vmatprep.subr.mxu0 0.0
    %1978 = vmatpush1.msra.mxu0 %v1955
    %1979 = vmatprep.subr.mxu0 0.0
    %1980 = vmatpush1.msra.mxu0 %v1956
    %1981 = vmatprep.subr.mxu0 0.0
    %1982 = vmatpush1.msra.mxu0 %v1957
    %1983 = vmatprep.subr.mxu0 0.0
    %1984 = vmatpush1.msra.mxu0 %v1958
    %1985 = vmatprep.subr.mxu0 0.0
    %1986 = vmatpush1.msra.mxu0 %v1959
    %1987 = vmatprep.subr.mxu0 0.0
    %1988 = vmatpush1.msra.mxu0 %v1960
    %1989 = vmatprep.subr.mxu0 0.0
    %1990 = vmatpush1.msra.mxu0 %v1961
    %1991 = vmatprep.subr.mxu0 0.0
    %1992 = vmatpush1.msra.mxu0 %v1962
    %1993 = vmatprep.subr.mxu0 0.0
    %1994 = vmatpush1.msra.mxu0 %v1963
    %1995 = vmatprep.subr.mxu0 0.0
    %1996 = vmatpush1.msra.mxu0 %v1964
    %1997 = vmatprep.subr.mxu0 0.0
    %1998 = vmatpush1.msra.mxu0 0.0
    %1999 = vmatprep.subr.mxu0 0.0
    %2000 = vmatpush1.msra.mxu0 0.0
    %2001 = vmatprep.subr.mxu0 0.0
    %2002 = vmatpush1.msra.mxu0 0.0
    %2003 = vmatprep.subr.mxu0 0.0
    %2004 = vmatpush1.msra.mxu0 0.0
    %2005 = vmatprep.subr.mxu0 0.0
    %2006 = vmatpush1.msra.mxu0 0.0
    %2007 = vmatprep.subr.mxu0 0.0
    %2008 = vmatpush1.msra.mxu0 0.0
    %2009 = vmatprep.subr.mxu0 0.0
    %2010 = vmatpush1.msra.mxu0 0.0
    %2011 = vmatprep.subr.mxu0 0.0
    %2012 = vmatpush1.msra.mxu0 0.0
    %2013 = vmatprep.subr.mxu0 0.0
    %2014 = vmatpush1.msra.mxu0 0.0
    %2015 = vmatprep.subr.mxu0 0.0
    %2016 = vmatpush1.msra.mxu0 0.0
    %2017 = vmatprep.subr.mxu0 0.0
    %2018 = vmatpush1.msra.mxu0 0.0
    %2019 = vmatprep.subr.mxu0 0.0
    %2020 = vmatpush1.msra.mxu0 0.0
    %2021 = vmatprep.subr.mxu0 0.0
    %2022 = vmatpush1.msra.mxu0 0.0
    %2023 = vmatprep.subr.mxu0 0.0
    %2024 = vmatpush1.msra.mxu0 0.0
    %2025 = vmatprep.subr.mxu0 0.0
    %2026 = vmatpush1.msra.mxu0 0.0
    %2027 = vmatprep.subr.mxu0 0.0
    %2028 = vmatpush1.msra.mxu0 0.0
    %2029 = vmatprep.mubr.f32.mxu0 0.0
    %2030 = vmatmul.mubr.f32.gmra.mrb[0].mxu0 %v1940
    %v2031 = vpop.f32.mrb[0].mxu0
    %v2032 = vadd.f32 0.0, %v2031
    %v2033 = vpop.f32.mrb[0].mxu0
    %2034 = vmatprep.mubr.f32.mxu0 0.0
    %2035 = vmatmul.mubr.f32.gmra.mrb[0].mxu0 %v1941
    %v2036 = vpop.f32.mrb[0].mxu0
    %v2037 = vadd.f32 0.0, %v2036
    %v2038 = vpop.f32.mrb[0].mxu0
    %2039 = vmatprep.mubr.f32.mxu0 0.0
    %2040 = vmatmul.mubr.f32.gmra.mrb[0].mxu0 %v1942
    %v2041 = vpop.f32.mrb[0].mxu0
    %v2042 = vadd.f32 0.0, %v2041
    %v2043 = vpop.f32.mrb[0].mxu0
    %2044 = vmatprep.mubr.f32.mxu0 0.0
    %2045 = vmatmul.mubr.f32.gmra.mrb[0].mxu0 %v1943
    %v2046 = vpop.f32.mrb[0].mxu0
    %v2047 = vadd.f32 0.0, %v2046
    %v2048 = vpop.f32.mrb[0].mxu0
    %2049 = vmatprep.mubr.f32.mxu0 0.0
    %2050 = vmatmul.mubr.f32.gmra.mrb[0].mxu0 %v1944
    %v2051 = vpop.f32.mrb[0].mxu0
    %v2052 = vadd.f32 0.0, %v2051
    %v2053 = vpop.f32.mrb[0].mxu0
    %2054 = vmatprep.mubr.f32.mxu0 0.0
    %2055 = vmatmul.mubr.f32.gmra.mrb[0].mxu0 %v1945
    %v2056 = vpop.f32.mrb[0].mxu0
    %v2057 = vadd.f32 0.0, %v2056
    %v2058 = vpop.f32.mrb[0].mxu0
    %2059 = vmatprep.mubr.f32.mxu0 0.0
    %2060 = vmatmul.mubr.f32.gmra.mrb[0].mxu0 %v1946
    %v2061 = vpop.f32.mrb[0].mxu0
    %v2062 = vadd.f32 0.0, %v2061
    %v2063 = vpop.f32.mrb[0].mxu0
    %2064 = vmatprep.mubr.f32.mxu0 0.0
    %2065 = vmatmul.mubr.f32.gmra.mrb[0].mxu0 %v1947
    %v2066 = vpop.f32.mrb[0].mxu0
    %v2067 = vadd.f32 0.0, %v2066
    %v2068 = vpop.f32.mrb[0].mxu0
    %2069 = vdwg.mxu0
    %v2070 = vadd.f32 %v1932, %v2032
    %v2071 = vadd.f32 %v1933, %v2037
    %v2072 = vadd.f32 %v1934, %v2042
    %v2073 = vadd.f32 %v1935, %v2047
    %v2074 = vadd.f32 %v1936, %v2052
    %v2075 = vadd.f32 %v1937, %v2057
    %v2076 = vadd.f32 %v1938, %v2062
    %v2077 = vadd.f32 %v1939, %v2067
    %v2078 = vld [vmem:[#allocation4 + $0x20] sm:$0xff]
    %v2079 = vld [vmem:[#allocation4 + $0x28] sm:$0xff]
    %v2080 = vld [vmem:[#allocation4 + $0x30] sm:$0xff]
    %v2081 = vld [vmem:[#allocation4 + $0x38] sm:$0xff]
    %v2082 = vld [vmem:[#allocation4 + $0x40] sm:$0xff]
    %v2083 = vld [vmem:[#allocation4 + $0x48] sm:$0xff]
    %v2084 = vld [vmem:[#allocation4 + $0x50] sm:$0xff]
    %v2085 = vld [vmem:[#allocation4 + $0x58] sm:$0xff]
    %s2086 = scalar_lea.vmem [#allocation8], 1280
    %v2087 = vld [vmem:[%s2086] sm:$0xff]
    %v2088 = vld [vmem:[%s2086 + $0x8] sm:$0xff]
    %v2089 = vld [vmem:[%s2086 + $0x10] sm:$0xff]
    %v2090 = vld [vmem:[%s2086 + $0x18] sm:$0xff]
    %v2091 = vld [vmem:[%s2086 + $0x20] sm:$0xff]
    %v2092 = vld [vmem:[%s2086 + $0x28] sm:$0xff]
    %v2093 = vld [vmem:[%s2086 + $0x30] sm:$0xff]
    %v2094 = vld [vmem:[%s2086 + $0x38] sm:$0xff]
    %v2095 = vld [vmem:[%s2086 + $0x40] sm:$0xff]
    %v2096 = vld [vmem:[%s2086 + $0x48] sm:$0xff]
    %v2097 = vld [vmem:[%s2086 + $0x50] sm:$0xff]
    %v2098 = vld [vmem:[%s2086 + $0x58] sm:$0xff]
    %v2099 = vld [vmem:[%s2086 + $0x60] sm:$0xff]
    %v2100 = vld [vmem:[%s2086 + $0x68] sm:$0xff]
    %v2101 = vld [vmem:[%s2086 + $0x70] sm:$0xff]
    %v2102 = vld [vmem:[%s2086 + $0x78] sm:$0xff]
    %2103 = vmatprep.subr.mxu0 0.0
    %2104 = vmatpush1.msra.mxu0 %v2087
    %2105 = vmatprep.subr.mxu0 0.0
    %2106 = vmatpush1.msra.mxu0 %v2088
    %2107 = vmatprep.subr.mxu0 0.0
    %2108 = vmatpush1.msra.mxu0 %v2089
    %2109 = vmatprep.subr.mxu0 0.0
    %2110 = vmatpush1.msra.mxu0 %v2090
    %2111 = vmatprep.subr.mxu0 0.0
    %2112 = vmatpush1.msra.mxu0 %v2091
    %2113 = vmatprep.subr.mxu0 0.0
    %2114 = vmatpush1.msra.mxu0 %v2092
    %2115 = vmatprep.subr.mxu0 0.0
    %2116 = vmatpush1.msra.mxu0 %v2093
    %2117 = vmatprep.subr.mxu0 0.0
    %2118 = vmatpush1.msra.mxu0 %v2094
    %2119 = vmatprep.subr.mxu0 0.0
    %2120 = vmatpush1.msra.mxu0 %v2095
    %2121 = vmatprep.subr.mxu0 0.0
    %2122 = vmatpush1.msra.mxu0 %v2096
    %2123 = vmatprep.subr.mxu0 0.0
    %2124 = vmatpush1.msra.mxu0 %v2097
    %2125 = vmatprep.subr.mxu0 0.0
    %2126 = vmatpush1.msra.mxu0 %v2098
    %2127 = vmatprep.subr.mxu0 0.0
    %2128 = vmatpush1.msra.mxu0 %v2099
    %2129 = vmatprep.subr.mxu0 0.0
    %2130 = vmatpush1.msra.mxu0 %v2100
    %2131 = vmatprep.subr.mxu0 0.0
    %2132 = vmatpush1.msra.mxu0 %v2101
    %2133 = vmatprep.subr.mxu0 0.0
    %2134 = vmatpush1.msra.mxu0 %v2102
    %2135 = vmatprep.subr.mxu0 0.0
    %2136 = vmatpush1.msra.mxu0 0.0
    %2137 = vmatprep.subr.mxu0 0.0
    %2138 = vmatpush1.msra.mxu0 0.0
    %2139 = vmatprep.subr.mxu0 0.0
    %2140 = vmatpush1.msra.mxu0 0.0
    %2141 = vmatprep.subr.mxu0 0.0
    %2142 = vmatpush1.msra.mxu0 0.0
    %2143 = vmatprep.subr.mxu0 0.0
    %2144 = vmatpush1.msra.mxu0 0.0
    %2145 = vmatprep.subr.mxu0 0.0
    %2146 = vmatpush1.msra.mxu0 0.0
    %2147 = vmatprep.subr.mxu0 0.0
    %2148 = vmatpush1.msra.mxu0 0.0
    %2149 = vmatprep.subr.mxu0 0.0
    %2150 = vmatpush1.msra.mxu0 0.0
    %2151 = vmatprep.subr.mxu0 0.0
    %2152 = vmatpush1.msra.mxu0 0.0
    %2153 = vmatprep.subr.mxu0 0.0
    %2154 = vmatpush1.msra.mxu0 0.0
    %2155 = vmatprep.subr.mxu0 0.0
    %2156 = vmatpush1.msra.mxu0 0.0
    %2157 = vmatprep.subr.mxu0 0.0
    %2158 = vmatpush1.msra.mxu0 0.0
    %2159 = vmatprep.subr.mxu0 0.0
    %2160 = vmatpush1.msra.mxu0 0.0
    %2161 = vmatprep.subr.mxu0 0.0
    %2162 = vmatpush1.msra.mxu0 0.0
    %2163 = vmatprep.subr.mxu0 0.0
    %2164 = vmatpush1.msra.mxu0 0.0
    %2165 = vmatprep.subr.mxu0 0.0
    %2166 = vmatpush1.msra.mxu0 0.0
    %2167 = vmatprep.mubr.f32.mxu0 0.0
    %2168 = vmatmul.mubr.f32.gmra.mrb[0].mxu0 %v2078
    %v2169 = vpop.f32.mrb[0].mxu0
    %v2170 = vadd.f32 0.0, %v2169
    %v2171 = vpop.f32.mrb[0].mxu0
    %2172 = vmatprep.mubr.f32.mxu0 0.0
    %2173 = vmatmul.mubr.f32.gmra.mrb[0].mxu0 %v2079
    %v2174 = vpop.f32.mrb[0].mxu0
    %v2175 = vadd.f32 0.0, %v2174
    %v2176 = vpop.f32.mrb[0].mxu0
    %2177 = vmatprep.mubr.f32.mxu0 0.0
    %2178 = vmatmul.mubr.f32.gmra.mrb[0].mxu0 %v2080
    %v2179 = vpop.f32.mrb[0].mxu0
    %v2180 = vadd.f32 0.0, %v2179
    %v2181 = vpop.f32.mrb[0].mxu0
    %2182 = vmatprep.mubr.f32.mxu0 0.0
    %2183 = vmatmul.mubr.f32.gmra.mrb[0].mxu0 %v2081
    %v2184 = vpop.f32.mrb[0].mxu0
    %v2185 = vadd.f32 0.0, %v2184
    %v2186 = vpop.f32.mrb[0].mxu0
    %2187 = vmatprep.mubr.f32.mxu0 0.0
    %2188 = vmatmul.mubr.f32.gmra.mrb[0].mxu0 %v2082
    %v2189 = vpop.f32.mrb[0].mxu0
    %v2190 = vadd.f32 0.0, %v2189
    %v2191 = vpop.f32.mrb[0].mxu0
    %2192 = vmatprep.mubr.f32.mxu0 0.0
    %2193 = vmatmul.mubr.f32.gmra.mrb[0].mxu0 %v2083
    %v2194 = vpop.f32.mrb[0].mxu0
    %v2195 = vadd.f32 0.0, %v2194
    %v2196 = vpop.f32.mrb[0].mxu0
    %2197 = vmatprep.mubr.f32.mxu0 0.0
    %2198 = vmatmul.mubr.f32.gmra.mrb[0].mxu0 %v2084
    %v2199 = vpop.f32.mrb[0].mxu0
    %v2200 = vadd.f32 0.0, %v2199
    %v2201 = vpop.f32.mrb[0].mxu0
    %2202 = vmatprep.mubr.f32.mxu0 0.0
    %2203 = vmatmul.mubr.f32.gmra.mrb[0].mxu0 %v2085
    %v2204 = vpop.f32.mrb[0].mxu0
    %v2205 = vadd.f32 0.0, %v2204
    %v2206 = vpop.f32.mrb[0].mxu0
    %2207 = vdwg.mxu0
    %v2208 = vadd.f32 %v2070, %v2170
    %v2209 = vadd.f32 %v2071, %v2175
    %v2210 = vadd.f32 %v2072, %v2180
    %v2211 = vadd.f32 %v2073, %v2185
    %v2212 = vadd.f32 %v2074, %v2190
    %v2213 = vadd.f32 %v2075, %v2195
    %v2214 = vadd.f32 %v2076, %v2200
    %v2215 = vadd.f32 %v2077, %v2205
    %v2216 = vld [vmem:[#allocation4 + $0x30] sm:$0xff]
    %v2217 = vld [vmem:[#allocation4 + $0x38] sm:$0xff]
    %v2218 = vld [vmem:[#allocation4 + $0x40] sm:$0xff]
    %v2219 = vld [vmem:[#allocation4 + $0x48] sm:$0xff]
    %v2220 = vld [vmem:[#allocation4 + $0x50] sm:$0xff]
    %v2221 = vld [vmem:[#allocation4 + $0x58] sm:$0xff]
    %v2222 = vld [vmem:[#allocation4 + $0x60] sm:$0xff]
    %v2223 = vld [vmem:[#allocation4 + $0x68] sm:$0xff]
    %s2224 = scalar_lea.vmem [#allocation8], 1408
    %v2225 = vld [vmem:[%s2224] sm:$0xff]
    %v2226 = vld [vmem:[%s2224 + $0x8] sm:$0xff]
    %v2227 = vld [vmem:[%s2224 + $0x10] sm:$0xff]
    %v2228 = vld [vmem:[%s2224 + $0x18] sm:$0xff]
    %v2229 = vld [vmem:[%s2224 + $0x20] sm:$0xff]
    %v2230 = vld [vmem:[%s2224 + $0x28] sm:$0xff]
    %v2231 = vld [vmem:[%s2224 + $0x30] sm:$0xff]
    %v2232 = vld [vmem:[%s2224 + $0x38] sm:$0xff]
    %v2233 = vld [vmem:[%s2224 + $0x40] sm:$0xff]
    %v2234 = vld [vmem:[%s2224 + $0x48] sm:$0xff]
    %v2235 = vld [vmem:[%s2224 + $0x50] sm:$0xff]
    %v2236 = vld [vmem:[%s2224 + $0x58] sm:$0xff]
    %v2237 = vld [vmem:[%s2224 + $0x60] sm:$0xff]
    %v2238 = vld [vmem:[%s2224 + $0x68] sm:$0xff]
    %v2239 = vld [vmem:[%s2224 + $0x70] sm:$0xff]
    %v2240 = vld [vmem:[%s2224 + $0x78] sm:$0xff]
    %2241 = vmatprep.subr.mxu0 0.0
    %2242 = vmatpush1.msra.mxu0 %v2225
    %2243 = vmatprep.subr.mxu0 0.0
    %2244 = vmatpush1.msra.mxu0 %v2226
    %2245 = vmatprep.subr.mxu0 0.0
    %2246 = vmatpush1.msra.mxu0 %v2227
    %2247 = vmatprep.subr.mxu0 0.0
    %2248 = vmatpush1.msra.mxu0 %v2228
    %2249 = vmatprep.subr.mxu0 0.0
    %2250 = vmatpush1.msra.mxu0 %v2229
    %2251 = vmatprep.subr.mxu0 0.0
    %2252 = vmatpush1.msra.mxu0 %v2230
    %2253 = vmatprep.subr.mxu0 0.0
    %2254 = vmatpush1.msra.mxu0 %v2231
    %2255 = vmatprep.subr.mxu0 0.0
    %2256 = vmatpush1.msra.mxu0 %v2232
    %2257 = vmatprep.subr.mxu0 0.0
    %2258 = vmatpush1.msra.mxu0 %v2233
    %2259 = vmatprep.subr.mxu0 0.0
    %2260 = vmatpush1.msra.mxu0 %v2234
    %2261 = vmatprep.subr.mxu0 0.0
    %2262 = vmatpush1.msra.mxu0 %v2235
    %2263 = vmatprep.subr.mxu0 0.0
    %2264 = vmatpush1.msra.mxu0 %v2236
    %2265 = vmatprep.subr.mxu0 0.0
    %2266 = vmatpush1.msra.mxu0 %v2237
    %2267 = vmatprep.subr.mxu0 0.0
    %2268 = vmatpush1.msra.mxu0 %v2238
    %2269 = vmatprep.subr.mxu0 0.0
    %2270 = vmatpush1.msra.mxu0 %v2239
    %2271 = vmatprep.subr.mxu0 0.0
    %2272 = vmatpush1.msra.mxu0 %v2240
    %2273 = vmatprep.subr.mxu0 0.0
    %2274 = vmatpush1.msra.mxu0 0.0
    %2275 = vmatprep.subr.mxu0 0.0
    %2276 = vmatpush1.msra.mxu0 0.0
    %2277 = vmatprep.subr.mxu0 0.0
    %2278 = vmatpush1.msra.mxu0 0.0
    %2279 = vmatprep.subr.mxu0 0.0
    %2280 = vmatpush1.msra.mxu0 0.0
    %2281 = vmatprep.subr.mxu0 0.0
    %2282 = vmatpush1.msra.mxu0 0.0
    %2283 = vmatprep.subr.mxu0 0.0
    %2284 = vmatpush1.msra.mxu0 0.0
    %2285 = vmatprep.subr.mxu0 0.0
    %2286 = vmatpush1.msra.mxu0 0.0
    %2287 = vmatprep.subr.mxu0 0.0
    %2288 = vmatpush1.msra.mxu0 0.0
    %2289 = vmatprep.subr.mxu0 0.0
    %2290 = vmatpush1.msra.mxu0 0.0
    %2291 = vmatprep.subr.mxu0 0.0
    %2292 = vmatpush1.msra.mxu0 0.0
    %2293 = vmatprep.subr.mxu0 0.0
    %2294 = vmatpush1.msra.mxu0 0.0
    %2295 = vmatprep.subr.mxu0 0.0
    %2296 = vmatpush1.msra.mxu0 0.0
    %2297 = vmatprep.subr.mxu0 0.0
    %2298 = vmatpush1.msra.mxu0 0.0
    %2299 = vmatprep.subr.mxu0 0.0
    %2300 = vmatpush1.msra.mxu0 0.0
    %2301 = vmatprep.subr.mxu0 0.0
    %2302 = vmatpush1.msra.mxu0 0.0
    %2303 = vmatprep.subr.mxu0 0.0
    %2304 = vmatpush1.msra.mxu0 0.0
    %2305 = vmatprep.mubr.f32.mxu0 0.0
    %2306 = vmatmul.mubr.f32.gmra.mrb[0].mxu0 %v2216
    %v2307 = vpop.f32.mrb[0].mxu0
    %v2308 = vadd.f32 0.0, %v2307
    %v2309 = vpop.f32.mrb[0].mxu0
    %2310 = vmatprep.mubr.f32.mxu0 0.0
    %2311 = vmatmul.mubr.f32.gmra.mrb[0].mxu0 %v2217
    %v2312 = vpop.f32.mrb[0].mxu0
    %v2313 = vadd.f32 0.0, %v2312
    %v2314 = vpop.f32.mrb[0].mxu0
    %2315 = vmatprep.mubr.f32.mxu0 0.0
    %2316 = vmatmul.mubr.f32.gmra.mrb[0].mxu0 %v2218
    %v2317 = vpop.f32.mrb[0].mxu0
    %v2318 = vadd.f32 0.0, %v2317
    %v2319 = vpop.f32.mrb[0].mxu0
    %2320 = vmatprep.mubr.f32.mxu0 0.0
    %2321 = vmatmul.mubr.f32.gmra.mrb[0].mxu0 %v2219
    %v2322 = vpop.f32.mrb[0].mxu0
    %v2323 = vadd.f32 0.0, %v2322
    %v2324 = vpop.f32.mrb[0].mxu0
    %2325 = vmatprep.mubr.f32.mxu0 0.0
    %2326 = vmatmul.mubr.f32.gmra.mrb[0].mxu0 %v2220
    %v2327 = vpop.f32.mrb[0].mxu0
    %v2328 = vadd.f32 0.0, %v2327
    %v2329 = vpop.f32.mrb[0].mxu0
    %2330 = vmatprep.mubr.f32.mxu0 0.0
    %2331 = vmatmul.mubr.f32.gmra.mrb[0].mxu0 %v2221
    %v2332 = vpop.f32.mrb[0].mxu0
    %v2333 = vadd.f32 0.0, %v2332
    %v2334 = vpop.f32.mrb[0].mxu0
    %2335 = vmatprep.mubr.f32.mxu0 0.0
    %2336 = vmatmul.mubr.f32.gmra.mrb[0].mxu0 %v2222
    %v2337 = vpop.f32.mrb[0].mxu0
    %v2338 = vadd.f32 0.0, %v2337
    %v2339 = vpop.f32.mrb[0].mxu0
    %2340 = vmatprep.mubr.f32.mxu0 0.0
    %2341 = vmatmul.mubr.f32.gmra.mrb[0].mxu0 %v2223
    %v2342 = vpop.f32.mrb[0].mxu0
    %v2343 = vadd.f32 0.0, %v2342
    %v2344 = vpop.f32.mrb[0].mxu0
    %2345 = vdwg.mxu0
    %v2346 = vadd.f32 %v2208, %v2308
    %v2347 = vadd.f32 %v2209, %v2313
    %v2348 = vadd.f32 %v2210, %v2318
    %v2349 = vadd.f32 %v2211, %v2323
    %v2350 = vadd.f32 %v2212, %v2328
    %v2351 = vadd.f32 %v2213, %v2333
    %v2352 = vadd.f32 %v2214, %v2338
    %v2353 = vadd.f32 %v2215, %v2343
    %v2354 = vmax.f32 %v2346, 0.0
    %v2355 = vmax.f32 %v2347, 0.0
    %v2356 = vmax.f32 %v2348, 0.0
    %v2357 = vmax.f32 %v2349, 0.0
    %v2358 = vmax.f32 %v2350, 0.0
    %v2359 = vmax.f32 %v2351, 0.0
    %v2360 = vmax.f32 %v2352, 0.0
    %v2361 = vmax.f32 %v2353, 0.0
    %2362 = vst [vmem:[#allocation3] sm:$0xff] %v2354
    %2363 = vst [vmem:[#allocation3 + $0x8] sm:$0xff] %v2355
    %2364 = vst [vmem:[#allocation3 + $0x10] sm:$0xff] %v2356
    %2365 = vst [vmem:[#allocation3 + $0x18] sm:$0xff] %v2357
    %2366 = vst [vmem:[#allocation3 + $0x20] sm:$0xff] %v2358
    %2367 = vst [vmem:[#allocation3 + $0x28] sm:$0xff] %v2359
    %2368 = vst [vmem:[#allocation3 + $0x30] sm:$0xff] %v2360
    %2369 = vst [vmem:[#allocation3 + $0x38] sm:$0xff] %v2361
    %s2370 = scalar_lea.vmem %s2, 3
    %v2371 = vld [vmem:[%s2370] sm:$0x1]
    %v2373 = vlaneseq
    %v2374 = vshrl.u32 %v2373, 7
    %v2375 = vsub.s32 0, %v2374
    %v2376 = vrot.slane %v2371, %v2375
    %v2378 = vld [vmem:[#allocation3] sm:$0xff]
    %v2379 = vld [vmem:[#allocation3 + $0x8] sm:$0xff]
    %s2380 = scalar_lea.vmem [#allocation8], 1536
    %v2381 = vld [vmem:[%s2380] sm:$0xff]
    %v2382 = vld [vmem:[%s2380 + $0x8] sm:$0xff]
    %v2383 = vld [vmem:[%s2380 + $0x10] sm:$0xff]
    %v2384 = vld [vmem:[%s2380 + $0x18] sm:$0xff]
    %v2385 = vld [vmem:[%s2380 + $0x20] sm:$0xff]
    %v2386 = vld [vmem:[%s2380 + $0x28] sm:$0xff]
    %v2387 = vld [vmem:[%s2380 + $0x30] sm:$0xff]
    %v2388 = vld [vmem:[%s2380 + $0x38] sm:$0xff]
    %v2389 = vld [vmem:[%s2380 + $0x40] sm:$0xff]
    %v2390 = vld [vmem:[%s2380 + $0x48] sm:$0xff]
    %v2391 = vld [vmem:[%s2380 + $0x50] sm:$0xff]
    %v2392 = vld [vmem:[%s2380 + $0x58] sm:$0xff]
    %v2393 = vld [vmem:[%s2380 + $0x60] sm:$0xff]
    %v2394 = vld [vmem:[%s2380 + $0x68] sm:$0xff]
    %v2395 = vld [vmem:[%s2380 + $0x70] sm:$0xff]
    %v2396 = vld [vmem:[%s2380 + $0x78] sm:$0xff]
    %2397 = vmatprep.subr.mxu0 0.0
    %2398 = vmatpush1.msra.mxu0 %v2381
    %2399 = vmatprep.subr.mxu0 0.0
    %2400 = vmatpush1.msra.mxu0 %v2382
    %2401 = vmatprep.subr.mxu0 0.0
    %2402 = vmatpush1.msra.mxu0 %v2383
    %2403 = vmatprep.subr.mxu0 0.0
    %2404 = vmatpush1.msra.mxu0 %v2384
    %2405 = vmatprep.subr.mxu0 0.0
    %2406 = vmatpush1.msra.mxu0 %v2385
    %2407 = vmatprep.subr.mxu0 0.0
    %2408 = vmatpush1.msra.mxu0 %v2386
    %2409 = vmatprep.subr.mxu0 0.0
    %2410 = vmatpush1.msra.mxu0 %v2387
    %2411 = vmatprep.subr.mxu0 0.0
    %2412 = vmatpush1.msra.mxu0 %v2388
    %2413 = vmatprep.subr.mxu0 0.0
    %2414 = vmatpush1.msra.mxu0 %v2389
    %2415 = vmatprep.subr.mxu0 0.0
    %2416 = vmatpush1.msra.mxu0 %v2390
    %2417 = vmatprep.subr.mxu0 0.0
    %2418 = vmatpush1.msra.mxu0 %v2391
    %2419 = vmatprep.subr.mxu0 0.0
    %2420 = vmatpush1.msra.mxu0 %v2392
    %2421 = vmatprep.subr.mxu0 0.0
    %2422 = vmatpush1.msra.mxu0 %v2393
    %2423 = vmatprep.subr.mxu0 0.0
    %2424 = vmatpush1.msra.mxu0 %v2394
    %2425 = vmatprep.subr.mxu0 0.0
    %2426 = vmatpush1.msra.mxu0 %v2395
    %2427 = vmatprep.subr.mxu0 0.0
    %2428 = vmatpush1.msra.mxu0 %v2396
    %2429 = vmatprep.subr.mxu0 0.0
    %2430 = vmatpush1.msra.mxu0 0.0
    %2431 = vmatprep.subr.mxu0 0.0
    %2432 = vmatpush1.msra.mxu0 0.0
    %2433 = vmatprep.subr.mxu0 0.0
    %2434 = vmatpush1.msra.mxu0 0.0
    %2435 = vmatprep.subr.mxu0 0.0
    %2436 = vmatpush1.msra.mxu0 0.0
    %2437 = vmatprep.subr.mxu0 0.0
    %2438 = vmatpush1.msra.mxu0 0.0
    %2439 = vmatprep.subr.mxu0 0.0
    %2440 = vmatpush1.msra.mxu0 0.0
    %2441 = vmatprep.subr.mxu0 0.0
    %2442 = vmatpush1.msra.mxu0 0.0
    %2443 = vmatprep.subr.mxu0 0.0
    %2444 = vmatpush1.msra.mxu0 0.0
    %2445 = vmatprep.subr.mxu0 0.0
    %2446 = vmatpush1.msra.mxu0 0.0
    %2447 = vmatprep.subr.mxu0 0.0
    %2448 = vmatpush1.msra.mxu0 0.0
    %2449 = vmatprep.subr.mxu0 0.0
    %2450 = vmatpush1.msra.mxu0 0.0
    %2451 = vmatprep.subr.mxu0 0.0
    %2452 = vmatpush1.msra.mxu0 0.0
    %2453 = vmatprep.subr.mxu0 0.0
    %2454 = vmatpush1.msra.mxu0 0.0
    %2455 = vmatprep.subr.mxu0 0.0
    %2456 = vmatpush1.msra.mxu0 0.0
    %2457 = vmatprep.subr.mxu0 0.0
    %2458 = vmatpush1.msra.mxu0 0.0
    %2459 = vmatprep.subr.mxu0 0.0
    %2460 = vmatpush1.msra.mxu0 0.0
    %2461 = vmatprep.mubr.f32.mxu0 0.0
    %2462 = vmatmul.mubr.f32.gmra.mrb[0].mxu0 %v2378
    %v2463 = vpop.f32.mrb[0].mxu0
    %v2464 = vadd.f32 0.0, %v2463
    %v2465 = vpop.f32.mrb[0].mxu0
    %2466 = vmatprep.mubr.f32.mxu0 0.0
    %2467 = vmatmul.mubr.f32.gmra.mrb[0].mxu0 %v2379
    %v2468 = vpop.f32.mrb[0].mxu0
    %v2469 = vadd.f32 0.0, %v2468
    %v2470 = vpop.f32.mrb[0].mxu0
    %2471 = vdwg.mxu0
    %v2472 = vadd.f32 %v2376, %v2464
    %v2473 = vadd.f32 %v2376, %v2469
    %v2474 = vld [vmem:[#allocation3 + $0x10] sm:$0xff]
    %v2475 = vld [vmem:[#allocation3 + $0x18] sm:$0xff]
    %s2476 = scalar_lea.vmem [#allocation8], 1664
    %v2477 = vld [vmem:[%s2476] sm:$0xff]
    %v2478 = vld [vmem:[%s2476 + $0x8] sm:$0xff]
    %v2479 = vld [vmem:[%s2476 + $0x10] sm:$0xff]
    %v2480 = vld [vmem:[%s2476 + $0x18] sm:$0xff]
    %v2481 = vld [vmem:[%s2476 + $0x20] sm:$0xff]
    %v2482 = vld [vmem:[%s2476 + $0x28] sm:$0xff]
    %v2483 = vld [vmem:[%s2476 + $0x30] sm:$0xff]
    %v2484 = vld [vmem:[%s2476 + $0x38] sm:$0xff]
    %v2485 = vld [vmem:[%s2476 + $0x40] sm:$0xff]
    %v2486 = vld [vmem:[%s2476 + $0x48] sm:$0xff]
    %v2487 = vld [vmem:[%s2476 + $0x50] sm:$0xff]
    %v2488 = vld [vmem:[%s2476 + $0x58] sm:$0xff]
    %v2489 = vld [vmem:[%s2476 + $0x60] sm:$0xff]
    %v2490 = vld [vmem:[%s2476 + $0x68] sm:$0xff]
    %v2491 = vld [vmem:[%s2476 + $0x70] sm:$0xff]
    %v2492 = vld [vmem:[%s2476 + $0x78] sm:$0xff]
    %2493 = vmatprep.subr.mxu0 0.0
    %2494 = vmatpush1.msra.mxu0 %v2477
    %2495 = vmatprep.subr.mxu0 0.0
    %2496 = vmatpush1.msra.mxu0 %v2478
    %2497 = vmatprep.subr.mxu0 0.0
    %2498 = vmatpush1.msra.mxu0 %v2479
    %2499 = vmatprep.subr.mxu0 0.0
    %2500 = vmatpush1.msra.mxu0 %v2480
    %2501 = vmatprep.subr.mxu0 0.0
    %2502 = vmatpush1.msra.mxu0 %v2481
    %2503 = vmatprep.subr.mxu0 0.0
    %2504 = vmatpush1.msra.mxu0 %v2482
    %2505 = vmatprep.subr.mxu0 0.0
    %2506 = vmatpush1.msra.mxu0 %v2483
    %2507 = vmatprep.subr.mxu0 0.0
    %2508 = vmatpush1.msra.mxu0 %v2484
    %2509 = vmatprep.subr.mxu0 0.0
    %2510 = vmatpush1.msra.mxu0 %v2485
    %2511 = vmatprep.subr.mxu0 0.0
    %2512 = vmatpush1.msra.mxu0 %v2486
    %2513 = vmatprep.subr.mxu0 0.0
    %2514 = vmatpush1.msra.mxu0 %v2487
    %2515 = vmatprep.subr.mxu0 0.0
    %2516 = vmatpush1.msra.mxu0 %v2488
    %2517 = vmatprep.subr.mxu0 0.0
    %2518 = vmatpush1.msra.mxu0 %v2489
    %2519 = vmatprep.subr.mxu0 0.0
    %2520 = vmatpush1.msra.mxu0 %v2490
    %2521 = vmatprep.subr.mxu0 0.0
    %2522 = vmatpush1.msra.mxu0 %v2491
    %2523 = vmatprep.subr.mxu0 0.0
    %2524 = vmatpush1.msra.mxu0 %v2492
    %2525 = vmatprep.subr.mxu0 0.0
    %2526 = vmatpush1.msra.mxu0 0.0
    %2527 = vmatprep.subr.mxu0 0.0
    %2528 = vmatpush1.msra.mxu0 0.0
    %2529 = vmatprep.subr.mxu0 0.0
    %2530 = vmatpush1.msra.mxu0 0.0
    %2531 = vmatprep.subr.mxu0 0.0
    %2532 = vmatpush1.msra.mxu0 0.0
    %2533 = vmatprep.subr.mxu0 0.0
    %2534 = vmatpush1.msra.mxu0 0.0
    %2535 = vmatprep.subr.mxu0 0.0
    %2536 = vmatpush1.msra.mxu0 0.0
    %2537 = vmatprep.subr.mxu0 0.0
    %2538 = vmatpush1.msra.mxu0 0.0
    %2539 = vmatprep.subr.mxu0 0.0
    %2540 = vmatpush1.msra.mxu0 0.0
    %2541 = vmatprep.subr.mxu0 0.0
    %2542 = vmatpush1.msra.mxu0 0.0
    %2543 = vmatprep.subr.mxu0 0.0
    %2544 = vmatpush1.msra.mxu0 0.0
    %2545 = vmatprep.subr.mxu0 0.0
    %2546 = vmatpush1.msra.mxu0 0.0
    %2547 = vmatprep.subr.mxu0 0.0
    %2548 = vmatpush1.msra.mxu0 0.0
    %2549 = vmatprep.subr.mxu0 0.0
    %2550 = vmatpush1.msra.mxu0 0.0
    %2551 = vmatprep.subr.mxu0 0.0
    %2552 = vmatpush1.msra.mxu0 0.0
    %2553 = vmatprep.subr.mxu0 0.0
    %2554 = vmatpush1.msra.mxu0 0.0
    %2555 = vmatprep.subr.mxu0 0.0
    %2556 = vmatpush1.msra.mxu0 0.0
    %2557 = vmatprep.mubr.f32.mxu0 0.0
    %2558 = vmatmul.mubr.f32.gmra.mrb[0].mxu0 %v2474
    %v2559 = vpop.f32.mrb[0].mxu0
    %v2560 = vadd.f32 0.0, %v2559
    %v2561 = vpop.f32.mrb[0].mxu0
    %2562 = vmatprep.mubr.f32.mxu0 0.0
    %2563 = vmatmul.mubr.f32.gmra.mrb[0].mxu0 %v2475
    %v2564 = vpop.f32.mrb[0].mxu0
    %v2565 = vadd.f32 0.0, %v2564
    %v2566 = vpop.f32.mrb[0].mxu0
    %2567 = vdwg.mxu0
    %v2568 = vadd.f32 %v2472, %v2560
    %v2569 = vadd.f32 %v2473, %v2565
    %v2570 = vld [vmem:[#allocation3 + $0x20] sm:$0xff]
    %v2571 = vld [vmem:[#allocation3 + $0x28] sm:$0xff]
    %s2572 = scalar_lea.vmem [#allocation8], 1792
    %v2573 = vld [vmem:[%s2572] sm:$0xff]
    %v2574 = vld [vmem:[%s2572 + $0x8] sm:$0xff]
    %v2575 = vld [vmem:[%s2572 + $0x10] sm:$0xff]
    %v2576 = vld [vmem:[%s2572 + $0x18] sm:$0xff]
    %v2577 = vld [vmem:[%s2572 + $0x20] sm:$0xff]
    %v2578 = vld [vmem:[%s2572 + $0x28] sm:$0xff]
    %v2579 = vld [vmem:[%s2572 + $0x30] sm:$0xff]
    %v2580 = vld [vmem:[%s2572 + $0x38] sm:$0xff]
    %v2581 = vld [vmem:[%s2572 + $0x40] sm:$0xff]
    %v2582 = vld [vmem:[%s2572 + $0x48] sm:$0xff]
    %v2583 = vld [vmem:[%s2572 + $0x50] sm:$0xff]
    %v2584 = vld [vmem:[%s2572 + $0x58] sm:$0xff]
    %v2585 = vld [vmem:[%s2572 + $0x60] sm:$0xff]
    %v2586 = vld [vmem:[%s2572 + $0x68] sm:$0xff]
    %v2587 = vld [vmem:[%s2572 + $0x70] sm:$0xff]
    %v2588 = vld [vmem:[%s2572 + $0x78] sm:$0xff]
    %2589 = vmatprep.subr.mxu0 0.0
    %2590 = vmatpush1.msra.mxu0 %v2573
    %2591 = vmatprep.subr.mxu0 0.0
    %2592 = vmatpush1.msra.mxu0 %v2574
    %2593 = vmatprep.subr.mxu0 0.0
    %2594 = vmatpush1.msra.mxu0 %v2575
    %2595 = vmatprep.subr.mxu0 0.0
    %2596 = vmatpush1.msra.mxu0 %v2576
    %2597 = vmatprep.subr.mxu0 0.0
    %2598 = vmatpush1.msra.mxu0 %v2577
    %2599 = vmatprep.subr.mxu0 0.0
    %2600 = vmatpush1.msra.mxu0 %v2578
    %2601 = vmatprep.subr.mxu0 0.0
    %2602 = vmatpush1.msra.mxu0 %v2579
    %2603 = vmatprep.subr.mxu0 0.0
    %2604 = vmatpush1.msra.mxu0 %v2580
    %2605 = vmatprep.subr.mxu0 0.0
    %2606 = vmatpush1.msra.mxu0 %v2581
    %2607 = vmatprep.subr.mxu0 0.0
    %2608 = vmatpush1.msra.mxu0 %v2582
    %2609 = vmatprep.subr.mxu0 0.0
    %2610 = vmatpush1.msra.mxu0 %v2583
    %2611 = vmatprep.subr.mxu0 0.0
    %2612 = vmatpush1.msra.mxu0 %v2584
    %2613 = vmatprep.subr.mxu0 0.0
    %2614 = vmatpush1.msra.mxu0 %v2585
    %2615 = vmatprep.subr.mxu0 0.0
    %2616 = vmatpush1.msra.mxu0 %v2586
    %2617 = vmatprep.subr.mxu0 0.0
    %2618 = vmatpush1.msra.mxu0 %v2587
    %2619 = vmatprep.subr.mxu0 0.0
    %2620 = vmatpush1.msra.mxu0 %v2588
    %2621 = vmatprep.subr.mxu0 0.0
    %2622 = vmatpush1.msra.mxu0 0.0
    %2623 = vmatprep.subr.mxu0 0.0
    %2624 = vmatpush1.msra.mxu0 0.0
    %2625 = vmatprep.subr.mxu0 0.0
    %2626 = vmatpush1.msra.mxu0 0.0
    %2627 = vmatprep.subr.mxu0 0.0
    %2628 = vmatpush1.msra.mxu0 0.0
    %2629 = vmatprep.subr.mxu0 0.0
    %2630 = vmatpush1.msra.mxu0 0.0
    %2631 = vmatprep.subr.mxu0 0.0
    %2632 = vmatpush1.msra.mxu0 0.0
    %2633 = vmatprep.subr.mxu0 0.0
    %2634 = vmatpush1.msra.mxu0 0.0
    %2635 = vmatprep.subr.mxu0 0.0
    %2636 = vmatpush1.msra.mxu0 0.0
    %2637 = vmatprep.subr.mxu0 0.0
    %2638 = vmatpush1.msra.mxu0 0.0
    %2639 = vmatprep.subr.mxu0 0.0
    %2640 = vmatpush1.msra.mxu0 0.0
    %2641 = vmatprep.subr.mxu0 0.0
    %2642 = vmatpush1.msra.mxu0 0.0
    %2643 = vmatprep.subr.mxu0 0.0
    %2644 = vmatpush1.msra.mxu0 0.0
    %2645 = vmatprep.subr.mxu0 0.0
    %2646 = vmatpush1.msra.mxu0 0.0
    %2647 = vmatprep.subr.mxu0 0.0
    %2648 = vmatpush1.msra.mxu0 0.0
    %2649 = vmatprep.subr.mxu0 0.0
    %2650 = vmatpush1.msra.mxu0 0.0
    %2651 = vmatprep.subr.mxu0 0.0
    %2652 = vmatpush1.msra.mxu0 0.0
    %2653 = vmatprep.mubr.f32.mxu0 0.0
    %2654 = vmatmul.mubr.f32.gmra.mrb[0].mxu0 %v2570
    %v2655 = vpop.f32.mrb[0].mxu0
    %v2656 = vadd.f32 0.0, %v2655
    %v2657 = vpop.f32.mrb[0].mxu0
    %2658 = vmatprep.mubr.f32.mxu0 0.0
    %2659 = vmatmul.mubr.f32.gmra.mrb[0].mxu0 %v2571
    %v2660 = vpop.f32.mrb[0].mxu0
    %v2661 = vadd.f32 0.0, %v2660
    %v2662 = vpop.f32.mrb[0].mxu0
    %2663 = vdwg.mxu0
    %v2664 = vadd.f32 %v2568, %v2656
    %v2665 = vadd.f32 %v2569, %v2661
    %v2666 = vld [vmem:[#allocation3 + $0x30] sm:$0xff]
    %v2667 = vld [vmem:[#allocation3 + $0x38] sm:$0xff]
    %s2668 = scalar_lea.vmem [#allocation8], 1920
    %v2669 = vld [vmem:[%s2668] sm:$0xff]
    %v2670 = vld [vmem:[%s2668 + $0x8] sm:$0xff]
    %v2671 = vld [vmem:[%s2668 + $0x10] sm:$0xff]
    %v2672 = vld [vmem:[%s2668 + $0x18] sm:$0xff]
    %v2673 = vld [vmem:[%s2668 + $0x20] sm:$0xff]
    %v2674 = vld [vmem:[%s2668 + $0x28] sm:$0xff]
    %v2675 = vld [vmem:[%s2668 + $0x30] sm:$0xff]
    %v2676 = vld [vmem:[%s2668 + $0x38] sm:$0xff]
    %v2677 = vld [vmem:[%s2668 + $0x40] sm:$0xff]
    %v2678 = vld [vmem:[%s2668 + $0x48] sm:$0xff]
    %v2679 = vld [vmem:[%s2668 + $0x50] sm:$0xff]
    %v2680 = vld [vmem:[%s2668 + $0x58] sm:$0xff]
    %v2681 = vld [vmem:[%s2668 + $0x60] sm:$0xff]
    %v2682 = vld [vmem:[%s2668 + $0x68] sm:$0xff]
    %v2683 = vld [vmem:[%s2668 + $0x70] sm:$0xff]
    %v2684 = vld [vmem:[%s2668 + $0x78] sm:$0xff]
    %2685 = vmatprep.subr.mxu0 0.0
    %2686 = vmatpush1.msra.mxu0 %v2669
    %2687 = vmatprep.subr.mxu0 0.0
    %2688 = vmatpush1.msra.mxu0 %v2670
    %2689 = vmatprep.subr.mxu0 0.0
    %2690 = vmatpush1.msra.mxu0 %v2671
    %2691 = vmatprep.subr.mxu0 0.0
    %2692 = vmatpush1.msra.mxu0 %v2672
    %2693 = vmatprep.subr.mxu0 0.0
    %2694 = vmatpush1.msra.mxu0 %v2673
    %2695 = vmatprep.subr.mxu0 0.0
    %2696 = vmatpush1.msra.mxu0 %v2674
    %2697 = vmatprep.subr.mxu0 0.0
    %2698 = vmatpush1.msra.mxu0 %v2675
    %2699 = vmatprep.subr.mxu0 0.0
    %2700 = vmatpush1.msra.mxu0 %v2676
    %2701 = vmatprep.subr.mxu0 0.0
    %2702 = vmatpush1.msra.mxu0 %v2677
    %2703 = vmatprep.subr.mxu0 0.0
    %2704 = vmatpush1.msra.mxu0 %v2678
    %2705 = vmatprep.subr.mxu0 0.0
    %2706 = vmatpush1.msra.mxu0 %v2679
    %2707 = vmatprep.subr.mxu0 0.0
    %2708 = vmatpush1.msra.mxu0 %v2680
    %2709 = vmatprep.subr.mxu0 0.0
    %2710 = vmatpush1.msra.mxu0 %v2681
    %2711 = vmatprep.subr.mxu0 0.0
    %2712 = vmatpush1.msra.mxu0 %v2682
    %2713 = vmatprep.subr.mxu0 0.0
    %2714 = vmatpush1.msra.mxu0 %v2683
    %2715 = vmatprep.subr.mxu0 0.0
    %2716 = vmatpush1.msra.mxu0 %v2684
    %2717 = vmatprep.subr.mxu0 0.0
    %2718 = vmatpush1.msra.mxu0 0.0
    %2719 = vmatprep.subr.mxu0 0.0
    %2720 = vmatpush1.msra.mxu0 0.0
    %2721 = vmatprep.subr.mxu0 0.0
    %2722 = vmatpush1.msra.mxu0 0.0
    %2723 = vmatprep.subr.mxu0 0.0
    %2724 = vmatpush1.msra.mxu0 0.0
    %2725 = vmatprep.subr.mxu0 0.0
    %2726 = vmatpush1.msra.mxu0 0.0
    %2727 = vmatprep.subr.mxu0 0.0
    %2728 = vmatpush1.msra.mxu0 0.0
    %2729 = vmatprep.subr.mxu0 0.0
    %2730 = vmatpush1.msra.mxu0 0.0
    %2731 = vmatprep.subr.mxu0 0.0
    %2732 = vmatpush1.msra.mxu0 0.0
    %2733 = vmatprep.subr.mxu0 0.0
    %2734 = vmatpush1.msra.mxu0 0.0
    %2735 = vmatprep.subr.mxu0 0.0
    %2736 = vmatpush1.msra.mxu0 0.0
    %2737 = vmatprep.subr.mxu0 0.0
    %2738 = vmatpush1.msra.mxu0 0.0
    %2739 = vmatprep.subr.mxu0 0.0
    %2740 = vmatpush1.msra.mxu0 0.0
    %2741 = vmatprep.subr.mxu0 0.0
    %2742 = vmatpush1.msra.mxu0 0.0
    %2743 = vmatprep.subr.mxu0 0.0
    %2744 = vmatpush1.msra.mxu0 0.0
    %2745 = vmatprep.subr.mxu0 0.0
    %2746 = vmatpush1.msra.mxu0 0.0
    %2747 = vmatprep.subr.mxu0 0.0
    %2748 = vmatpush1.msra.mxu0 0.0
    %2749 = vmatprep.mubr.f32.mxu0 0.0
    %2750 = vmatmul.mubr.f32.gmra.mrb[0].mxu0 %v2666
    %v2751 = vpop.f32.mrb[0].mxu0
    %v2752 = vadd.f32 0.0, %v2751
    %v2753 = vpop.f32.mrb[0].mxu0
    %2754 = vmatprep.mubr.f32.mxu0 0.0
    %2755 = vmatmul.mubr.f32.gmra.mrb[0].mxu0 %v2667
    %v2756 = vpop.f32.mrb[0].mxu0
    %v2757 = vadd.f32 0.0, %v2756
    %v2758 = vpop.f32.mrb[0].mxu0
    %2759 = vdwg.mxu0
    %v2760 = vadd.f32 %v2664, %v2752
    %v2761 = vadd.f32 %v2665, %v2757
    %v2762 = vmax.f32 %v2760, 0.0
    %v2763 = vmax.f32 %v2761, 0.0
    %v2764 = vld [vmem:[#allocation2 + $0xc0] sm:$0xff]
    %v2765 = vld [vmem:[#allocation2 + $0xc8] sm:$0xff]
    %v2766 = vadd.f32 %v2762, %v2764
    %v2767 = vadd.f32 %v2763, %v2765
    %2768 = vst [vmem:[#allocation10] sm:$0xff] %v2766
    %2769 = vst [vmem:[#allocation10 + $0x8] sm:$0xff] %v2767
    // Predicated region
    $region22: #{tpu_custom_call.1} parent=1 // pred_check
      _
    $region23: #{tpu_custom_call.1} parent=1 // pred_check_branch
      %2771 = sbr.rel (0) target = $region25
    $region24: #{tpu_custom_call.1} parent=1 // pred_region
      %s2773 = ssub.s32 256, 256
      %2774 = vsyncadd [#allocation7], %s2773
      %s2775 = sshll.u32 [#allocation10], 4
      %s2776 = int_to_ptr.vmem [resolvable:$true] %s2775
      %2781 = dma.vmem_to_hbm [thread:$0]  %s2776, 256, %s3, [#allocation7], 128, 128, 8
    $region25: #{tpu_custom_call.1} parent=1 // pred_fallthru
      _
    // Predicated region
    $region26: #{tpu_custom_call.1} parent=1 // pred_check
      _
    $region27: #{tpu_custom_call.1} parent=1 // pred_check_branch
      %2783 = sbr.rel (0) target = $region29
    $region28: #{tpu_custom_call.1} parent=1 // pred_region
      %2784 = dma.done [#allocation7], 256
    $region29: #{tpu_custom_call.1} parent=1 // pred_fallthru
      _
    %2785 = vsyncpa [#allocation6], 1
    %2786 = vsyncpa [#allocation9], 1
    %2787 = vsyncpa [#allocation7], 1

</llo_original>
